<compile_context>
chip_gen: v5e
topology: v5e:2x2
jax: 0.10.0
libtpu: 0.0.40
codegen_flags: <defaults>
</compile_context>

<pallas_src>
import numpy as np

import jax
import jax.numpy as jnp
from jax import lax
from jax.experimental import pallas as pl
from jax.experimental.pallas import tpu as pltpu

# Standard MNIST classifier config (load_specifications_classifier equivalent).
CFG = dict(color_channels=1, CNN_filters1=10, CNN_filters2=20,
           CNN_kernel_size=5, resulting_size_classifier=320,
           hidden_layer_classifier=50, nr_target_classes=10)

TB = 8          # batch tile per grid step (selection matrices are TB-block-diagonal)
NEG = -1e30     # bias padding for unused logit lanes (-> exp underflows to 0)


# ----------------------------------------------------------------------------
# Compile-time constant helper matrices (numpy -> baked into the executable)
# ----------------------------------------------------------------------------
def _placement(in_w, out_half):
    # T[w, j, p, a] = 1  iff  w == 2*a + p + j   (width-unfold Toeplitz pattern)
    T = np.zeros((in_w, 5, 2, out_half), np.float32)
    for a in range(out_half):
        for p in range(2):
            for j in range(5):
                T[2 * a + p + j, j, p, a] = 1.0
    return T


_T1 = _placement(28, 12)   # conv1: 28 -> 24 -> pooled 12
_T2 = _placement(12, 4)    # conv2: 12 ->  8 -> pooled 4


def _selection_matrices():
    # C[s]: (TB*12, TB*28) picks row (b, h=2m+s) from a (b,h)-row-indexed matrix
    C = np.zeros((6, TB * 12, TB * 28), np.float32)
    for s in range(6):
        for b in range(TB):
            for m in range(12):
                C[s, b * 12 + m, b * 28 + 2 * m + s] = 1.0
    # D[s]: (TB*4, TB*12)
    D = np.zeros((6, TB * 4, TB * 12), np.float32)
    for s in range(6):
        for b in range(TB):
            for m in range(4):
                D[s, b * 4 + m, b * 12 + 2 * m + s] = 1.0
    # G[h]: (TB, TB*4) picks row (b, h)
    G = np.zeros((4, TB, TB * 4), np.float32)
    for h in range(4):
        for b in range(TB):
            G[h, b, b * 4 + h] = 1.0
    return C, D, G


_C_NP, _D_NP, _G_NP = _selection_matrices()


# ----------------------------------------------------------------------------
# Weight packing (runs in the XLA wrapper, tiny tensors)
# ----------------------------------------------------------------------------
def _pack_params(params):
    f32 = jnp.float32
    w1 = params['w1'].astype(f32).reshape(CFG['CNN_filters1'], 5, 5)     # [f,i,j]
    w2 = params['w2'].astype(f32)                                        # [f,c,i,j]

    # conv1 width-unfold matrix: A1[w, i*256 + p*128 + (f*12+a)] = w1[f,i,w-(2a+p)]
    A1 = jnp.einsum('wjpa,fij->wipfa', _T1, w1)                          # [28,5,2,10,12]
    A1 = A1.reshape(28, 5, 2, 120)
    A1 = jnp.pad(A1, ((0, 0), (0, 0), (0, 0), (0, 8))).reshape(28, 5 * 256)

    # conv2: rows (c*12+w), padded to 128; cols i*256 + p*128 + (f*4+a)
    A2 = jnp.einsum('wjpa,fcij->cwipfa', _T2, w2)                        # [10,12,5,2,20,4]
    A2 = A2.reshape(10, 12, 5, 2, 80)
    A2 = jnp.pad(A2, ((0, 0), (0, 0), (0, 0), (0, 0), (0, 48)))
    A2 = A2.reshape(120, 5 * 256)
    A2 = jnp.pad(A2, ((0, 8), (0, 0)))                                   # [128, 1280]

    b1row = jnp.pad(jnp.repeat(params['b1'].astype(f32), 12), (0, 8)).reshape(1, 128)
    b2row = jnp.pad(jnp.repeat(params['b2'].astype(f32), 4), (0, 48)).reshape(1, 128)

    # fc1 with the PyTorch NCHW flatten order folded in, split per pooled row h
    wfc1 = params['wfc1'].astype(f32).reshape(50, 20, 4, 4)              # [u,f,h,a]
    W1h = jnp.transpose(wfc1, (2, 1, 3, 0)).reshape(4, 80, 50)           # [h, f*4+a, u]
    W1h = jnp.pad(W1h, ((0, 0), (0, 48), (0, 78)))                       # [4,128,128]
    bfc1p = jnp.pad(params['bfc1'].astype(f32), (0, 78)).reshape(1, 128)

    W2p = jnp.pad(params['wfc2'].astype(f32).T, ((0, 78), (0, 118)))     # [128,128]
    bfc2p = jnp.concatenate(
        [params['bfc2'].astype(f32), jnp.full((118,), NEG, f32)]).reshape(1, 128)

    Csel = jnp.asarray(_C_NP)
    Dsel = jnp.asarray(_D_NP)
    Gsel = jnp.asarray(_G_NP)
    return (A1, Csel, b1row, A2, Dsel, b2row, Gsel, W1h, bfc1p, W2p, bfc2p)


# ----------------------------------------------------------------------------
# The fused Pallas kernel (whole forward pass for a TB-image batch tile)
# ----------------------------------------------------------------------------
def _fused_kernel(x_ref, A1_ref, C_ref, b1_ref, A2_ref, D_ref, b2_ref,
                  G_ref, W1h_ref, bfc1_ref, W2p_ref, bfc2_ref, out_ref):
    f32 = jnp.float32

    def dot(a, b):
        return jnp.dot(a, b, preferred_element_type=f32)

    # ---- stage 1: conv1 (weight-folded Toeplitz GEMM) + 2x2 max-pool + ReLU
    y = dot(x_ref[...], A1_ref[...])                         # [TB*28, 5*256]
    r = []
    for p in range(2):                                       # pooled-row parity
        acc = jnp.zeros((TB * 12, 256), f32)
        for i in range(5):                                   # conv kernel row tap
            acc = acc + dot(C_ref[p + i], y[:, i * 256:(i + 1) * 256])
        r.append(acc)
    hmax = jnp.maximum(r[0], r[1])                           # pool over output rows
    pooled1 = jnp.maximum(hmax[:, 0:128], hmax[:, 128:256])  # pool over output cols
    act1 = jnp.maximum(pooled1 + b1_ref[...], 0.0)           # [TB*12, 128]

    # ---- stage 2: conv2 + 2x2 max-pool + ReLU ------------------------------
    y2 = dot(act1, A2_ref[...])                              # [TB*12, 5*256]
    r2 = []
    for p in range(2):
        acc = jnp.zeros((TB * 4, 256), f32)
        for i in range(5):
            acc = acc + dot(D_ref[p + i], y2[:, i * 256:(i + 1) * 256])
        r2.append(acc)
    h2max = jnp.maximum(r2[0], r2[1])
    pooled2 = jnp.maximum(h2max[:, 0:128], h2max[:, 128:256])
    act2 = jnp.maximum(pooled2 + b2_ref[...], 0.0)           # [TB*4, 128]

    # ---- stage 3: FC1 + ReLU + FC2 + log_softmax ---------------------------
    # PyTorch NCHW flatten order is folded into W1h; dropout is eval-mode identity.
    hp = jnp.zeros((TB, 128), f32)
    for hh in range(4):
        hp = hp + dot(dot(G_ref[hh], act2), W1h_ref[hh])
    h1 = jnp.maximum(hp + bfc1_ref[...], 0.0)                # [TB, 128]
    logits = dot(h1, W2p_ref[...]) + bfc2_ref[...]           # padded lanes ~ -1e30
    mx = jnp.max(logits, axis=1, keepdims=True)
    s = logits - mx
    lse = jnp.log(jnp.sum(jnp.exp(s), axis=1, keepdims=True))
    out_ref[...] = (s - lse).astype(out_ref.dtype)


def _run_fused(x2d, ops):
    B_pad = x2d.shape[0] // 28
    grid = (B_pad // TB,)

    def fullspec(a):
        nd = a.ndim
        return pl.BlockSpec(a.shape, lambda i, nd=nd: (0,) * nd)

    in_specs = ([pl.BlockSpec((TB * 28, 28), lambda i: (i, 0))]
                + [fullspec(o) for o in ops])
    return pl.pallas_call(
        _fused_kernel,
        out_shape=jax.ShapeDtypeStruct((B_pad, 128), jnp.float32),
        grid=grid,
        in_specs=in_specs,
        out_specs=pl.BlockSpec((TB, 128), lambda i: (i, 0)),
        compiler_params=pltpu.CompilerParams(
            dimension_semantics=("parallel",)),
    )(x2d, *ops)


# ----------------------------------------------------------------------------
# Model wrapper
# ----------------------------------------------------------------------------
def mnist_classifier_forward(params, x):
    # x: [B, 1, 28, 28] float32 (NCHW, like PyTorch)
    B = x.shape[0]
    B_pad = ((B + TB - 1) // TB) * TB
    x2d = x.astype(jnp.float32).reshape(B * 28, 28)
    x2d = jnp.pad(x2d, ((0, (B_pad - B) * 28), (0, 0)))
    ops = _pack_params(params)
    out = _run_fused(x2d, ops)                               # [B_pad, 128]
    # TODO(synk): nn.Dropout() is identity in eval mode; train-mode dropout not applied.
    return out[:B, :CFG['nr_target_classes']]


# ----------------------------------------------------------------------------
# Parameter init (PyTorch-style uniform) and a pure-JAX reference for checking
# ----------------------------------------------------------------------------
def init_params(key):
    def uniform(key, shape, fan_in):
        bound = 1.0 / jnp.sqrt(jnp.float32(fan_in))
        return jax.random.uniform(key, shape, jnp.float32, -bound, bound)

    k = jax.random.split(key, 8)
    c, f1, f2 = CFG['color_channels'], CFG['CNN_filters1'], CFG['CNN_filters2']
    ks = CFG['CNN_kernel_size']
    rs, hd, nc = (CFG['resulting_size_classifier'],
                  CFG['hidden_layer_classifier'], CFG['nr_target_classes'])
    return {
        'w1': uniform(k[0], (f1, c, ks, ks), c * ks * ks),
        'b1': uniform(k[1], (f1,), c * ks * ks),
        'w2': uniform(k[2], (f2, f1, ks, ks), f1 * ks * ks),
        'b2': uniform(k[3], (f2,), f1 * ks * ks),
        'wfc1': uniform(k[4], (hd, rs), rs),
        'bfc1': uniform(k[5], (hd,), rs),
        'wfc2': uniform(k[6], (nc, hd), hd),
        'bfc2': uniform(k[7], (nc,), hd),
    }


def _reference_forward(params, x):
    def conv(x, w, b):
        y = lax.conv_general_dilated(x, w, (1, 1), 'VALID',
                                     dimension_numbers=('NCHW', 'OIHW', 'NCHW'))
        return y + b[None, :, None, None]

    def pool_relu(y):
        B, C, H, W = y.shape
        p = y.reshape(B, C, H // 2, 2, W // 2, 2).max(axis=(3, 5))
        return jnp.maximum(p, 0.0)

    y = pool_relu(conv(x, params['w1'], params['b1']))
    y = pool_relu(conv(y, params['w2'], params['b2']))
    flat = y.reshape(y.shape[0], -1)
    h = jnp.maximum(flat @ params['wfc1'].T + params['bfc1'], 0.0)
    logits = h @ params['wfc2'].T + params['bfc2']
    return jax.nn.log_softmax(logits, axis=1)


if __name__ == "__main__":
    key = jax.random.PRNGKey(0)
    pkey, xkey = jax.random.split(key)
    params = init_params(pkey)
    x = jax.random.normal(xkey, (2, 1, 28, 28), dtype=jnp.float32)

    out = jax.jit(mnist_classifier_forward)(params, x)
    out = jax.block_until_ready(out)

    assert out.shape == (2, CFG['nr_target_classes'])
    assert bool(jnp.all(jnp.isfinite(out)))
    # log_softmax rows must sum to ~1 in probability space
    assert jnp.allclose(jnp.sum(jnp.exp(out), axis=1), 1.0, atol=1e-4)
    # parity with a pure-JAX reference of the PyTorch module
    ref = _reference_forward(params, x)
    assert jnp.allclose(out, ref, atol=5e-2), float(jnp.max(jnp.abs(out - ref)))
    print("KERNEL_OK")
</pallas_src>

<mosaic_0001>
module attributes {stable_mosaic.version = 11 : i64} {
  func.func @_fused_kernel(%arg0: i32, %arg1: memref<224x28xf32, #tpu.memory_space<vmem>>, %arg2: memref<28x1280xf32, #tpu.memory_space<vmem>>, %arg3: memref<6x96x224xf32, #tpu.memory_space<vmem>>, %arg4: memref<1x128xf32, #tpu.memory_space<vmem>>, %arg5: memref<128x1280xf32, #tpu.memory_space<vmem>>, %arg6: memref<6x32x96xf32, #tpu.memory_space<vmem>>, %arg7: memref<1x128xf32, #tpu.memory_space<vmem>>, %arg8: memref<4x8x32xf32, #tpu.memory_space<vmem>>, %arg9: memref<4x128x128xf32, #tpu.memory_space<vmem>>, %arg10: memref<1x128xf32, #tpu.memory_space<vmem>>, %arg11: memref<128x128xf32, #tpu.memory_space<vmem>>, %arg12: memref<1x128xf32, #tpu.memory_space<vmem>>, %arg13: memref<8x128xf32, #tpu.memory_space<vmem>>) attributes {dimension_semantics = [#tpu.dimension_semantics<parallel>], iteration_bounds = array<i64: 1>, scalar_prefetch = 0 : i64, scratch_operands = 0 : i64, tpu.core_type = #tpu.core_type<tc>, window_params = [{transform_indices = @transform_0, window_bounds = array<i64: 224, 28>}, {pipeline_mode = #tpu.pipeline_mode<synchronous>, transform_indices = @transform_1, window_bounds = array<i64: 28, 1280>}, {pipeline_mode = #tpu.pipeline_mode<synchronous>, transform_indices = @transform_2, window_bounds = array<i64: 6, 96, 224>}, {pipeline_mode = #tpu.pipeline_mode<synchronous>, transform_indices = @transform_3, window_bounds = array<i64: 1, 128>}, {pipeline_mode = #tpu.pipeline_mode<synchronous>, transform_indices = @transform_4, window_bounds = array<i64: 128, 1280>}, {pipeline_mode = #tpu.pipeline_mode<synchronous>, transform_indices = @transform_5, window_bounds = array<i64: 6, 32, 96>}, {pipeline_mode = #tpu.pipeline_mode<synchronous>, transform_indices = @transform_6, window_bounds = array<i64: 1, 128>}, {pipeline_mode = #tpu.pipeline_mode<synchronous>, transform_indices = @transform_7, window_bounds = array<i64: 4, 8, 32>}, {pipeline_mode = #tpu.pipeline_mode<synchronous>, transform_indices = @transform_8, window_bounds = array<i64: 4, 128, 128>}, {pipeline_mode = #tpu.pipeline_mode<synchronous>, transform_indices = @transform_9, window_bounds = array<i64: 1, 128>}, {pipeline_mode = #tpu.pipeline_mode<synchronous>, transform_indices = @transform_10, window_bounds = array<i64: 128, 128>}, {pipeline_mode = #tpu.pipeline_mode<synchronous>, transform_indices = @transform_11, window_bounds = array<i64: 1, 128>}, {transform_indices = @transform_12, window_bounds = array<i64: 8, 128>}]} {
    %c0 = arith.constant 0 : index
    %c0_0 = arith.constant 0 : index
    %0 = vector.load %arg1[%c0, %c0_0] : memref<224x28xf32, #tpu.memory_space<vmem>>, vector<224x28xf32>
    %c0_1 = arith.constant 0 : index
    %c0_2 = arith.constant 0 : index
    %1 = vector.load %arg2[%c0_1, %c0_2] : memref<28x1280xf32, #tpu.memory_space<vmem>>, vector<28x1280xf32>
    %cst = arith.constant dense<0.000000e+00> : vector<224x1280xf32>
    %2 = tpu.matmul %0, %1, %cst {dimension_numbers = #tpu.dot_dimension_numbers<[1], [0], [0], [1], [0, 0, 1, 1], [], []>} : vector<224x28xf32>, vector<28x1280xf32>, vector<224x1280xf32> -> vector<224x1280xf32>
    %cst_3 = arith.constant 0.000000e+00 : f32
    %3 = vector.broadcast %cst_3 : f32 to vector<96x256xf32>
    %c0_4 = arith.constant 0 : index
    %c0_5 = arith.constant 0 : index
    %c0_6 = arith.constant 0 : index
    %4 = vector.load %arg3[%c0_4, %c0_5, %c0_6] : memref<6x96x224xf32, #tpu.memory_space<vmem>>, vector<1x96x224xf32>
    %5 = vector.shape_cast %4 : vector<1x96x224xf32> to vector<96x224xf32>
    %6 = vector.extract_strided_slice %2 {offsets = [0, 0], sizes = [224, 256], strides = [1, 1]} : vector<224x1280xf32> to vector<224x256xf32>
    %cst_7 = arith.constant dense<0.000000e+00> : vector<96x256xf32>
    %7 = tpu.matmul %5, %6, %cst_7 {dimension_numbers = #tpu.dot_dimension_numbers<[1], [0], [0], [1], [0, 0, 1, 1], [], []>} : vector<96x224xf32>, vector<224x256xf32>, vector<96x256xf32> -> vector<96x256xf32>
    %8 = arith.addf %3, %7 : vector<96x256xf32>
    %c1 = arith.constant 1 : index
    %c0_8 = arith.constant 0 : index
    %c0_9 = arith.constant 0 : index
    %9 = vector.load %arg3[%c1, %c0_8, %c0_9] : memref<6x96x224xf32, #tpu.memory_space<vmem>>, vector<1x96x224xf32>
    %10 = vector.shape_cast %9 : vector<1x96x224xf32> to vector<96x224xf32>
    %11 = vector.extract_strided_slice %2 {offsets = [0, 256], sizes = [224, 256], strides = [1, 1]} : vector<224x1280xf32> to vector<224x256xf32>
    %cst_10 = arith.constant dense<0.000000e+00> : vector<96x256xf32>
    %12 = tpu.matmul %10, %11, %cst_10 {dimension_numbers = #tpu.dot_dimension_numbers<[1], [0], [0], [1], [0, 0, 1, 1], [], []>} : vector<96x224xf32>, vector<224x256xf32>, vector<96x256xf32> -> vector<96x256xf32>
    %13 = arith.addf %8, %12 : vector<96x256xf32>
    %c2 = arith.constant 2 : index
    %c0_11 = arith.constant 0 : index
    %c0_12 = arith.constant 0 : index
    %14 = vector.load %arg3[%c2, %c0_11, %c0_12] : memref<6x96x224xf32, #tpu.memory_space<vmem>>, vector<1x96x224xf32>
    %15 = vector.shape_cast %14 : vector<1x96x224xf32> to vector<96x224xf32>
    %16 = vector.extract_strided_slice %2 {offsets = [0, 512], sizes = [224, 256], strides = [1, 1]} : vector<224x1280xf32> to vector<224x256xf32>
    %cst_13 = arith.constant dense<0.000000e+00> : vector<96x256xf32>
    %17 = tpu.matmul %15, %16, %cst_13 {dimension_numbers = #tpu.dot_dimension_numbers<[1], [0], [0], [1], [0, 0, 1, 1], [], []>} : vector<96x224xf32>, vector<224x256xf32>, vector<96x256xf32> -> vector<96x256xf32>
    %18 = arith.addf %13, %17 : vector<96x256xf32>
    %c3 = arith.constant 3 : index
    %c0_14 = arith.constant 0 : index
    %c0_15 = arith.constant 0 : index
    %19 = vector.load %arg3[%c3, %c0_14, %c0_15] : memref<6x96x224xf32, #tpu.memory_space<vmem>>, vector<1x96x224xf32>
    %20 = vector.shape_cast %19 : vector<1x96x224xf32> to vector<96x224xf32>
    %21 = vector.extract_strided_slice %2 {offsets = [0, 768], sizes = [224, 256], strides = [1, 1]} : vector<224x1280xf32> to vector<224x256xf32>
    %cst_16 = arith.constant dense<0.000000e+00> : vector<96x256xf32>
    %22 = tpu.matmul %20, %21, %cst_16 {dimension_numbers = #tpu.dot_dimension_numbers<[1], [0], [0], [1], [0, 0, 1, 1], [], []>} : vector<96x224xf32>, vector<224x256xf32>, vector<96x256xf32> -> vector<96x256xf32>
    %23 = arith.addf %18, %22 : vector<96x256xf32>
    %c4 = arith.constant 4 : index
    %c0_17 = arith.constant 0 : index
    %c0_18 = arith.constant 0 : index
    %24 = vector.load %arg3[%c4, %c0_17, %c0_18] : memref<6x96x224xf32, #tpu.memory_space<vmem>>, vector<1x96x224xf32>
    %25 = vector.shape_cast %24 : vector<1x96x224xf32> to vector<96x224xf32>
    %26 = vector.extract_strided_slice %2 {offsets = [0, 1024], sizes = [224, 256], strides = [1, 1]} : vector<224x1280xf32> to vector<224x256xf32>
    %cst_19 = arith.constant dense<0.000000e+00> : vector<96x256xf32>
    %27 = tpu.matmul %25, %26, %cst_19 {dimension_numbers = #tpu.dot_dimension_numbers<[1], [0], [0], [1], [0, 0, 1, 1], [], []>} : vector<96x224xf32>, vector<224x256xf32>, vector<96x256xf32> -> vector<96x256xf32>
    %28 = arith.addf %23, %27 : vector<96x256xf32>
    %cst_20 = arith.constant 0.000000e+00 : f32
    %29 = vector.broadcast %cst_20 : f32 to vector<96x256xf32>
    %c1_21 = arith.constant 1 : index
    %c0_22 = arith.constant 0 : index
    %c0_23 = arith.constant 0 : index
    %30 = vector.load %arg3[%c1_21, %c0_22, %c0_23] : memref<6x96x224xf32, #tpu.memory_space<vmem>>, vector<1x96x224xf32>
    %31 = vector.shape_cast %30 : vector<1x96x224xf32> to vector<96x224xf32>
    %32 = vector.extract_strided_slice %2 {offsets = [0, 0], sizes = [224, 256], strides = [1, 1]} : vector<224x1280xf32> to vector<224x256xf32>
    %cst_24 = arith.constant dense<0.000000e+00> : vector<96x256xf32>
    %33 = tpu.matmul %31, %32, %cst_24 {dimension_numbers = #tpu.dot_dimension_numbers<[1], [0], [0], [1], [0, 0, 1, 1], [], []>} : vector<96x224xf32>, vector<224x256xf32>, vector<96x256xf32> -> vector<96x256xf32>
    %34 = arith.addf %29, %33 : vector<96x256xf32>
    %c2_25 = arith.constant 2 : index
    %c0_26 = arith.constant 0 : index
    %c0_27 = arith.constant 0 : index
    %35 = vector.load %arg3[%c2_25, %c0_26, %c0_27] : memref<6x96x224xf32, #tpu.memory_space<vmem>>, vector<1x96x224xf32>
    %36 = vector.shape_cast %35 : vector<1x96x224xf32> to vector<96x224xf32>
    %37 = vector.extract_strided_slice %2 {offsets = [0, 256], sizes = [224, 256], strides = [1, 1]} : vector<224x1280xf32> to vector<224x256xf32>
    %cst_28 = arith.constant dense<0.000000e+00> : vector<96x256xf32>
    %38 = tpu.matmul %36, %37, %cst_28 {dimension_numbers = #tpu.dot_dimension_numbers<[1], [0], [0], [1], [0, 0, 1, 1], [], []>} : vector<96x224xf32>, vector<224x256xf32>, vector<96x256xf32> -> vector<96x256xf32>
    %39 = arith.addf %34, %38 : vector<96x256xf32>
    %c3_29 = arith.constant 3 : index
    %c0_30 = arith.constant 0 : index
    %c0_31 = arith.constant 0 : index
    %40 = vector.load %arg3[%c3_29, %c0_30, %c0_31] : memref<6x96x224xf32, #tpu.memory_space<vmem>>, vector<1x96x224xf32>
    %41 = vector.shape_cast %40 : vector<1x96x224xf32> to vector<96x224xf32>
    %42 = vector.extract_strided_slice %2 {offsets = [0, 512], sizes = [224, 256], strides = [1, 1]} : vector<224x1280xf32> to vector<224x256xf32>
    %cst_32 = arith.constant dense<0.000000e+00> : vector<96x256xf32>
    %43 = tpu.matmul %41, %42, %cst_32 {dimension_numbers = #tpu.dot_dimension_numbers<[1], [0], [0], [1], [0, 0, 1, 1], [], []>} : vector<96x224xf32>, vector<224x256xf32>, vector<96x256xf32> -> vector<96x256xf32>
    %44 = arith.addf %39, %43 : vector<96x256xf32>
    %c4_33 = arith.constant 4 : index
    %c0_34 = arith.constant 0 : index
    %c0_35 = arith.constant 0 : index
    %45 = vector.load %arg3[%c4_33, %c0_34, %c0_35] : memref<6x96x224xf32, #tpu.memory_space<vmem>>, vector<1x96x224xf32>
    %46 = vector.shape_cast %45 : vector<1x96x224xf32> to vector<96x224xf32>
    %47 = vector.extract_strided_slice %2 {offsets = [0, 768], sizes = [224, 256], strides = [1, 1]} : vector<224x1280xf32> to vector<224x256xf32>
    %cst_36 = arith.constant dense<0.000000e+00> : vector<96x256xf32>
    %48 = tpu.matmul %46, %47, %cst_36 {dimension_numbers = #tpu.dot_dimension_numbers<[1], [0], [0], [1], [0, 0, 1, 1], [], []>} : vector<96x224xf32>, vector<224x256xf32>, vector<96x256xf32> -> vector<96x256xf32>
    %49 = arith.addf %44, %48 : vector<96x256xf32>
    %c5 = arith.constant 5 : index
    %c0_37 = arith.constant 0 : index
    %c0_38 = arith.constant 0 : index
    %50 = vector.load %arg3[%c5, %c0_37, %c0_38] : memref<6x96x224xf32, #tpu.memory_space<vmem>>, vector<1x96x224xf32>
    %51 = vector.shape_cast %50 : vector<1x96x224xf32> to vector<96x224xf32>
    %52 = vector.extract_strided_slice %2 {offsets = [0, 1024], sizes = [224, 256], strides = [1, 1]} : vector<224x1280xf32> to vector<224x256xf32>
    %cst_39 = arith.constant dense<0.000000e+00> : vector<96x256xf32>
    %53 = tpu.matmul %51, %52, %cst_39 {dimension_numbers = #tpu.dot_dimension_numbers<[1], [0], [0], [1], [0, 0, 1, 1], [], []>} : vector<96x224xf32>, vector<224x256xf32>, vector<96x256xf32> -> vector<96x256xf32>
    %54 = arith.addf %49, %53 : vector<96x256xf32>
    %55 = arith.maximumf %28, %54 : vector<96x256xf32>
    %56 = vector.extract_strided_slice %55 {offsets = [0, 0], sizes = [96, 128], strides = [1, 1]} : vector<96x256xf32> to vector<96x128xf32>
    %57 = vector.extract_strided_slice %55 {offsets = [0, 128], sizes = [96, 128], strides = [1, 1]} : vector<96x256xf32> to vector<96x128xf32>
    %58 = arith.maximumf %56, %57 : vector<96x128xf32>
    %c0_40 = arith.constant 0 : index
    %c0_41 = arith.constant 0 : index
    %59 = vector.load %arg4[%c0_40, %c0_41] : memref<1x128xf32, #tpu.memory_space<vmem>>, vector<1x128xf32>
    %60 = vector.broadcast %59 : vector<1x128xf32> to vector<96x128xf32>
    %61 = arith.addf %58, %60 : vector<96x128xf32>
    %cst_42 = arith.constant 0.000000e+00 : f32
    %62 = vector.broadcast %cst_42 : f32 to vector<96x128xf32>
    %63 = arith.maximumf %61, %62 : vector<96x128xf32>
    %c0_43 = arith.constant 0 : index
    %c0_44 = arith.constant 0 : index
    %64 = vector.load %arg5[%c0_43, %c0_44] : memref<128x1280xf32, #tpu.memory_space<vmem>>, vector<128x1280xf32>
    %cst_45 = arith.constant dense<0.000000e+00> : vector<96x1280xf32>
    %65 = tpu.matmul %63, %64, %cst_45 {dimension_numbers = #tpu.dot_dimension_numbers<[1], [0], [0], [1], [0, 0, 1, 1], [], []>} : vector<96x128xf32>, vector<128x1280xf32>, vector<96x1280xf32> -> vector<96x1280xf32>
    %cst_46 = arith.constant 0.000000e+00 : f32
    %66 = vector.broadcast %cst_46 : f32 to vector<32x256xf32>
    %c0_47 = arith.constant 0 : index
    %c0_48 = arith.constant 0 : index
    %c0_49 = arith.constant 0 : index
    %67 = vector.load %arg6[%c0_47, %c0_48, %c0_49] : memref<6x32x96xf32, #tpu.memory_space<vmem>>, vector<1x32x96xf32>
    %68 = vector.shape_cast %67 : vector<1x32x96xf32> to vector<32x96xf32>
    %69 = vector.extract_strided_slice %65 {offsets = [0, 0], sizes = [96, 256], strides = [1, 1]} : vector<96x1280xf32> to vector<96x256xf32>
    %cst_50 = arith.constant dense<0.000000e+00> : vector<32x256xf32>
    %70 = tpu.matmul %68, %69, %cst_50 {dimension_numbers = #tpu.dot_dimension_numbers<[1], [0], [0], [1], [0, 0, 1, 1], [], []>} : vector<32x96xf32>, vector<96x256xf32>, vector<32x256xf32> -> vector<32x256xf32>
    %71 = arith.addf %66, %70 : vector<32x256xf32>
    %c1_51 = arith.constant 1 : index
    %c0_52 = arith.constant 0 : index
    %c0_53 = arith.constant 0 : index
    %72 = vector.load %arg6[%c1_51, %c0_52, %c0_53] : memref<6x32x96xf32, #tpu.memory_space<vmem>>, vector<1x32x96xf32>
    %73 = vector.shape_cast %72 : vector<1x32x96xf32> to vector<32x96xf32>
    %74 = vector.extract_strided_slice %65 {offsets = [0, 256], sizes = [96, 256], strides = [1, 1]} : vector<96x1280xf32> to vector<96x256xf32>
    %cst_54 = arith.constant dense<0.000000e+00> : vector<32x256xf32>
    %75 = tpu.matmul %73, %74, %cst_54 {dimension_numbers = #tpu.dot_dimension_numbers<[1], [0], [0], [1], [0, 0, 1, 1], [], []>} : vector<32x96xf32>, vector<96x256xf32>, vector<32x256xf32> -> vector<32x256xf32>
    %76 = arith.addf %71, %75 : vector<32x256xf32>
    %c2_55 = arith.constant 2 : index
    %c0_56 = arith.constant 0 : index
    %c0_57 = arith.constant 0 : index
    %77 = vector.load %arg6[%c2_55, %c0_56, %c0_57] : memref<6x32x96xf32, #tpu.memory_space<vmem>>, vector<1x32x96xf32>
    %78 = vector.shape_cast %77 : vector<1x32x96xf32> to vector<32x96xf32>
    %79 = vector.extract_strided_slice %65 {offsets = [0, 512], sizes = [96, 256], strides = [1, 1]} : vector<96x1280xf32> to vector<96x256xf32>
    %cst_58 = arith.constant dense<0.000000e+00> : vector<32x256xf32>
    %80 = tpu.matmul %78, %79, %cst_58 {dimension_numbers = #tpu.dot_dimension_numbers<[1], [0], [0], [1], [0, 0, 1, 1], [], []>} : vector<32x96xf32>, vector<96x256xf32>, vector<32x256xf32> -> vector<32x256xf32>
    %81 = arith.addf %76, %80 : vector<32x256xf32>
    %c3_59 = arith.constant 3 : index
    %c0_60 = arith.constant 0 : index
    %c0_61 = arith.constant 0 : index
    %82 = vector.load %arg6[%c3_59, %c0_60, %c0_61] : memref<6x32x96xf32, #tpu.memory_space<vmem>>, vector<1x32x96xf32>
    %83 = vector.shape_cast %82 : vector<1x32x96xf32> to vector<32x96xf32>
    %84 = vector.extract_strided_slice %65 {offsets = [0, 768], sizes = [96, 256], strides = [1, 1]} : vector<96x1280xf32> to vector<96x256xf32>
    %cst_62 = arith.constant dense<0.000000e+00> : vector<32x256xf32>
    %85 = tpu.matmul %83, %84, %cst_62 {dimension_numbers = #tpu.dot_dimension_numbers<[1], [0], [0], [1], [0, 0, 1, 1], [], []>} : vector<32x96xf32>, vector<96x256xf32>, vector<32x256xf32> -> vector<32x256xf32>
    %86 = arith.addf %81, %85 : vector<32x256xf32>
    %c4_63 = arith.constant 4 : index
    %c0_64 = arith.constant 0 : index
    %c0_65 = arith.constant 0 : index
    %87 = vector.load %arg6[%c4_63, %c0_64, %c0_65] : memref<6x32x96xf32, #tpu.memory_space<vmem>>, vector<1x32x96xf32>
    %88 = vector.shape_cast %87 : vector<1x32x96xf32> to vector<32x96xf32>
    %89 = vector.extract_strided_slice %65 {offsets = [0, 1024], sizes = [96, 256], strides = [1, 1]} : vector<96x1280xf32> to vector<96x256xf32>
    %cst_66 = arith.constant dense<0.000000e+00> : vector<32x256xf32>
    %90 = tpu.matmul %88, %89, %cst_66 {dimension_numbers = #tpu.dot_dimension_numbers<[1], [0], [0], [1], [0, 0, 1, 1], [], []>} : vector<32x96xf32>, vector<96x256xf32>, vector<32x256xf32> -> vector<32x256xf32>
    %91 = arith.addf %86, %90 : vector<32x256xf32>
    %cst_67 = arith.constant 0.000000e+00 : f32
    %92 = vector.broadcast %cst_67 : f32 to vector<32x256xf32>
    %c1_68 = arith.constant 1 : index
    %c0_69 = arith.constant 0 : index
    %c0_70 = arith.constant 0 : index
    %93 = vector.load %arg6[%c1_68, %c0_69, %c0_70] : memref<6x32x96xf32, #tpu.memory_space<vmem>>, vector<1x32x96xf32>
    %94 = vector.shape_cast %93 : vector<1x32x96xf32> to vector<32x96xf32>
    %95 = vector.extract_strided_slice %65 {offsets = [0, 0], sizes = [96, 256], strides = [1, 1]} : vector<96x1280xf32> to vector<96x256xf32>
    %cst_71 = arith.constant dense<0.000000e+00> : vector<32x256xf32>
    %96 = tpu.matmul %94, %95, %cst_71 {dimension_numbers = #tpu.dot_dimension_numbers<[1], [0], [0], [1], [0, 0, 1, 1], [], []>} : vector<32x96xf32>, vector<96x256xf32>, vector<32x256xf32> -> vector<32x256xf32>
    %97 = arith.addf %92, %96 : vector<32x256xf32>
    %c2_72 = arith.constant 2 : index
    %c0_73 = arith.constant 0 : index
    %c0_74 = arith.constant 0 : index
    %98 = vector.load %arg6[%c2_72, %c0_73, %c0_74] : memref<6x32x96xf32, #tpu.memory_space<vmem>>, vector<1x32x96xf32>
    %99 = vector.shape_cast %98 : vector<1x32x96xf32> to vector<32x96xf32>
    %100 = vector.extract_strided_slice %65 {offsets = [0, 256], sizes = [96, 256], strides = [1, 1]} : vector<96x1280xf32> to vector<96x256xf32>
    %cst_75 = arith.constant dense<0.000000e+00> : vector<32x256xf32>
    %101 = tpu.matmul %99, %100, %cst_75 {dimension_numbers = #tpu.dot_dimension_numbers<[1], [0], [0], [1], [0, 0, 1, 1], [], []>} : vector<32x96xf32>, vector<96x256xf32>, vector<32x256xf32> -> vector<32x256xf32>
    %102 = arith.addf %97, %101 : vector<32x256xf32>
    %c3_76 = arith.constant 3 : index
    %c0_77 = arith.constant 0 : index
    %c0_78 = arith.constant 0 : index
    %103 = vector.load %arg6[%c3_76, %c0_77, %c0_78] : memref<6x32x96xf32, #tpu.memory_space<vmem>>, vector<1x32x96xf32>
    %104 = vector.shape_cast %103 : vector<1x32x96xf32> to vector<32x96xf32>
    %105 = vector.extract_strided_slice %65 {offsets = [0, 512], sizes = [96, 256], strides = [1, 1]} : vector<96x1280xf32> to vector<96x256xf32>
    %cst_79 = arith.constant dense<0.000000e+00> : vector<32x256xf32>
    %106 = tpu.matmul %104, %105, %cst_79 {dimension_numbers = #tpu.dot_dimension_numbers<[1], [0], [0], [1], [0, 0, 1, 1], [], []>} : vector<32x96xf32>, vector<96x256xf32>, vector<32x256xf32> -> vector<32x256xf32>
    %107 = arith.addf %102, %106 : vector<32x256xf32>
    %c4_80 = arith.constant 4 : index
    %c0_81 = arith.constant 0 : index
    %c0_82 = arith.constant 0 : index
    %108 = vector.load %arg6[%c4_80, %c0_81, %c0_82] : memref<6x32x96xf32, #tpu.memory_space<vmem>>, vector<1x32x96xf32>
    %109 = vector.shape_cast %108 : vector<1x32x96xf32> to vector<32x96xf32>
    %110 = vector.extract_strided_slice %65 {offsets = [0, 768], sizes = [96, 256], strides = [1, 1]} : vector<96x1280xf32> to vector<96x256xf32>
    %cst_83 = arith.constant dense<0.000000e+00> : vector<32x256xf32>
    %111 = tpu.matmul %109, %110, %cst_83 {dimension_numbers = #tpu.dot_dimension_numbers<[1], [0], [0], [1], [0, 0, 1, 1], [], []>} : vector<32x96xf32>, vector<96x256xf32>, vector<32x256xf32> -> vector<32x256xf32>
    %112 = arith.addf %107, %111 : vector<32x256xf32>
    %c5_84 = arith.constant 5 : index
    %c0_85 = arith.constant 0 : index
    %c0_86 = arith.constant 0 : index
    %113 = vector.load %arg6[%c5_84, %c0_85, %c0_86] : memref<6x32x96xf32, #tpu.memory_space<vmem>>, vector<1x32x96xf32>
    %114 = vector.shape_cast %113 : vector<1x32x96xf32> to vector<32x96xf32>
    %115 = vector.extract_strided_slice %65 {offsets = [0, 1024], sizes = [96, 256], strides = [1, 1]} : vector<96x1280xf32> to vector<96x256xf32>
    %cst_87 = arith.constant dense<0.000000e+00> : vector<32x256xf32>
    %116 = tpu.matmul %114, %115, %cst_87 {dimension_numbers = #tpu.dot_dimension_numbers<[1], [0], [0], [1], [0, 0, 1, 1], [], []>} : vector<32x96xf32>, vector<96x256xf32>, vector<32x256xf32> -> vector<32x256xf32>
    %117 = arith.addf %112, %116 : vector<32x256xf32>
    %118 = arith.maximumf %91, %117 : vector<32x256xf32>
    %119 = vector.extract_strided_slice %118 {offsets = [0, 0], sizes = [32, 128], strides = [1, 1]} : vector<32x256xf32> to vector<32x128xf32>
    %120 = vector.extract_strided_slice %118 {offsets = [0, 128], sizes = [32, 128], strides = [1, 1]} : vector<32x256xf32> to vector<32x128xf32>
    %121 = arith.maximumf %119, %120 : vector<32x128xf32>
    %c0_88 = arith.constant 0 : index
    %c0_89 = arith.constant 0 : index
    %122 = vector.load %arg7[%c0_88, %c0_89] : memref<1x128xf32, #tpu.memory_space<vmem>>, vector<1x128xf32>
    %123 = vector.broadcast %122 : vector<1x128xf32> to vector<32x128xf32>
    %124 = arith.addf %121, %123 : vector<32x128xf32>
    %cst_90 = arith.constant 0.000000e+00 : f32
    %125 = vector.broadcast %cst_90 : f32 to vector<32x128xf32>
    %126 = arith.maximumf %124, %125 : vector<32x128xf32>
    %cst_91 = arith.constant 0.000000e+00 : f32
    %127 = vector.broadcast %cst_91 : f32 to vector<8x128xf32>
    %c0_92 = arith.constant 0 : index
    %c0_93 = arith.constant 0 : index
    %c0_94 = arith.constant 0 : index
    %128 = vector.load %arg8[%c0_92, %c0_93, %c0_94] : memref<4x8x32xf32, #tpu.memory_space<vmem>>, vector<1x8x32xf32>
    %129 = vector.shape_cast %128 : vector<1x8x32xf32> to vector<8x32xf32>
    %cst_95 = arith.constant dense<0.000000e+00> : vector<8x128xf32>
    %130 = tpu.matmul %129, %126, %cst_95 {dimension_numbers = #tpu.dot_dimension_numbers<[1], [0], [0], [1], [0, 0, 1, 1], [], []>} : vector<8x32xf32>, vector<32x128xf32>, vector<8x128xf32> -> vector<8x128xf32>
    %c0_96 = arith.constant 0 : index
    %c0_97 = arith.constant 0 : index
    %c0_98 = arith.constant 0 : index
    %131 = vector.load %arg9[%c0_96, %c0_97, %c0_98] : memref<4x128x128xf32, #tpu.memory_space<vmem>>, vector<1x128x128xf32>
    %132 = vector.shape_cast %131 : vector<1x128x128xf32> to vector<128x128xf32>
    %cst_99 = arith.constant dense<0.000000e+00> : vector<8x128xf32>
    %133 = tpu.matmul %130, %132, %cst_99 {dimension_numbers = #tpu.dot_dimension_numbers<[1], [0], [0], [1], [0, 0, 1, 1], [], []>} : vector<8x128xf32>, vector<128x128xf32>, vector<8x128xf32> -> vector<8x128xf32>
    %134 = arith.addf %127, %133 : vector<8x128xf32>
    %c1_100 = arith.constant 1 : index
    %c0_101 = arith.constant 0 : index
    %c0_102 = arith.constant 0 : index
    %135 = vector.load %arg8[%c1_100, %c0_101, %c0_102] : memref<4x8x32xf32, #tpu.memory_space<vmem>>, vector<1x8x32xf32>
    %136 = vector.shape_cast %135 : vector<1x8x32xf32> to vector<8x32xf32>
    %cst_103 = arith.constant dense<0.000000e+00> : vector<8x128xf32>
    %137 = tpu.matmul %136, %126, %cst_103 {dimension_numbers = #tpu.dot_dimension_numbers<[1], [0], [0], [1], [0, 0, 1, 1], [], []>} : vector<8x32xf32>, vector<32x128xf32>, vector<8x128xf32> -> vector<8x128xf32>
    %c1_104 = arith.constant 1 : index
    %c0_105 = arith.constant 0 : index
    %c0_106 = arith.constant 0 : index
    %138 = vector.load %arg9[%c1_104, %c0_105, %c0_106] : memref<4x128x128xf32, #tpu.memory_space<vmem>>, vector<1x128x128xf32>
    %139 = vector.shape_cast %138 : vector<1x128x128xf32> to vector<128x128xf32>
    %cst_107 = arith.constant dense<0.000000e+00> : vector<8x128xf32>
    %140 = tpu.matmul %137, %139, %cst_107 {dimension_numbers = #tpu.dot_dimension_numbers<[1], [0], [0], [1], [0, 0, 1, 1], [], []>} : vector<8x128xf32>, vector<128x128xf32>, vector<8x128xf32> -> vector<8x128xf32>
    %141 = arith.addf %134, %140 : vector<8x128xf32>
    %c2_108 = arith.constant 2 : index
    %c0_109 = arith.constant 0 : index
    %c0_110 = arith.constant 0 : index
    %142 = vector.load %arg8[%c2_108, %c0_109, %c0_110] : memref<4x8x32xf32, #tpu.memory_space<vmem>>, vector<1x8x32xf32>
    %143 = vector.shape_cast %142 : vector<1x8x32xf32> to vector<8x32xf32>
    %cst_111 = arith.constant dense<0.000000e+00> : vector<8x128xf32>
    %144 = tpu.matmul %143, %126, %cst_111 {dimension_numbers = #tpu.dot_dimension_numbers<[1], [0], [0], [1], [0, 0, 1, 1], [], []>} : vector<8x32xf32>, vector<32x128xf32>, vector<8x128xf32> -> vector<8x128xf32>
    %c2_112 = arith.constant 2 : index
    %c0_113 = arith.constant 0 : index
    %c0_114 = arith.constant 0 : index
    %145 = vector.load %arg9[%c2_112, %c0_113, %c0_114] : memref<4x128x128xf32, #tpu.memory_space<vmem>>, vector<1x128x128xf32>
    %146 = vector.shape_cast %145 : vector<1x128x128xf32> to vector<128x128xf32>
    %cst_115 = arith.constant dense<0.000000e+00> : vector<8x128xf32>
    %147 = tpu.matmul %144, %146, %cst_115 {dimension_numbers = #tpu.dot_dimension_numbers<[1], [0], [0], [1], [0, 0, 1, 1], [], []>} : vector<8x128xf32>, vector<128x128xf32>, vector<8x128xf32> -> vector<8x128xf32>
    %148 = arith.addf %141, %147 : vector<8x128xf32>
    %c3_116 = arith.constant 3 : index
    %c0_117 = arith.constant 0 : index
    %c0_118 = arith.constant 0 : index
    %149 = vector.load %arg8[%c3_116, %c0_117, %c0_118] : memref<4x8x32xf32, #tpu.memory_space<vmem>>, vector<1x8x32xf32>
    %150 = vector.shape_cast %149 : vector<1x8x32xf32> to vector<8x32xf32>
    %cst_119 = arith.constant dense<0.000000e+00> : vector<8x128xf32>
    %151 = tpu.matmul %150, %126, %cst_119 {dimension_numbers = #tpu.dot_dimension_numbers<[1], [0], [0], [1], [0, 0, 1, 1], [], []>} : vector<8x32xf32>, vector<32x128xf32>, vector<8x128xf32> -> vector<8x128xf32>
    %c3_120 = arith.constant 3 : index
    %c0_121 = arith.constant 0 : index
    %c0_122 = arith.constant 0 : index
    %152 = vector.load %arg9[%c3_120, %c0_121, %c0_122] : memref<4x128x128xf32, #tpu.memory_space<vmem>>, vector<1x128x128xf32>
    %153 = vector.shape_cast %152 : vector<1x128x128xf32> to vector<128x128xf32>
    %cst_123 = arith.constant dense<0.000000e+00> : vector<8x128xf32>
    %154 = tpu.matmul %151, %153, %cst_123 {dimension_numbers = #tpu.dot_dimension_numbers<[1], [0], [0], [1], [0, 0, 1, 1], [], []>} : vector<8x128xf32>, vector<128x128xf32>, vector<8x128xf32> -> vector<8x128xf32>
    %155 = arith.addf %148, %154 : vector<8x128xf32>
    %c0_124 = arith.constant 0 : index
    %c0_125 = arith.constant 0 : index
    %156 = vector.load %arg10[%c0_124, %c0_125] : memref<1x128xf32, #tpu.memory_space<vmem>>, vector<1x128xf32>
    %157 = vector.broadcast %156 : vector<1x128xf32> to vector<8x128xf32>
    %158 = arith.addf %155, %157 : vector<8x128xf32>
    %cst_126 = arith.constant 0.000000e+00 : f32
    %159 = vector.broadcast %cst_126 : f32 to vector<8x128xf32>
    %160 = arith.maximumf %158, %159 : vector<8x128xf32>
    %c0_127 = arith.constant 0 : index
    %c0_128 = arith.constant 0 : index
    %161 = vector.load %arg11[%c0_127, %c0_128] : memref<128x128xf32, #tpu.memory_space<vmem>>, vector<128x128xf32>
    %cst_129 = arith.constant dense<0.000000e+00> : vector<8x128xf32>
    %162 = tpu.matmul %160, %161, %cst_129 {dimension_numbers = #tpu.dot_dimension_numbers<[1], [0], [0], [1], [0, 0, 1, 1], [], []>} : vector<8x128xf32>, vector<128x128xf32>, vector<8x128xf32> -> vector<8x128xf32>
    %c0_130 = arith.constant 0 : index
    %c0_131 = arith.constant 0 : index
    %163 = vector.load %arg12[%c0_130, %c0_131] : memref<1x128xf32, #tpu.memory_space<vmem>>, vector<1x128xf32>
    %164 = vector.broadcast %163 : vector<1x128xf32> to vector<8x128xf32>
    %165 = arith.addf %162, %164 : vector<8x128xf32>
    %cst_132 = arith.constant dense<0xFF800000> : vector<8xf32>
    %166 = vector.multi_reduction <maximumf>, %165, %cst_132 [1] : vector<8x128xf32> to vector<8xf32>
    %167 = vector.shape_cast %166 : vector<8xf32> to vector<8x1xf32>
    %168 = vector.broadcast %167 : vector<8x1xf32> to vector<8x128xf32>
    %169 = arith.subf %165, %168 : vector<8x128xf32>
    %170 = math.exp %169 : vector<8x128xf32>
    %cst_133 = arith.constant dense<0.000000e+00> : vector<8xf32>
    %171 = vector.multi_reduction <add>, %170, %cst_133 [1] : vector<8x128xf32> to vector<8xf32>
    %172 = vector.shape_cast %171 : vector<8xf32> to vector<8x1xf32>
    %173 = math.log %172 : vector<8x1xf32>
    %174 = vector.broadcast %173 : vector<8x1xf32> to vector<8x128xf32>
    %175 = arith.subf %169, %174 : vector<8x128xf32>
    %c0_134 = arith.constant 0 : index
    %c0_135 = arith.constant 0 : index
    %176 = vector.load %arg13[%c0_134, %c0_135] : memref<8x128xf32, #tpu.memory_space<vmem>>, vector<8x128xf32>
    tpu.vector_store %arg13[%c0_134, %c0_135], %175 {strides = array<i32>} : memref<8x128xf32, #tpu.memory_space<vmem>>, vector<8x128xf32>,
    return
  }
  func.func @transform_0(%arg0: i32) -> (i32, i32) {
    %c0_i32 = arith.constant 0 : i32
    %c0_i32_0 = arith.constant 0 : i32
    return %arg0, %c0_i32 : i32, i32
  }
  func.func @transform_1(%arg0: i32) -> (i32, i32) {
    %c0_i32 = arith.constant 0 : i32
    %c0_i32_0 = arith.constant 0 : i32
    %c0_i32_1 = arith.constant 0 : i32
    return %c0_i32, %c0_i32_0 : i32, i32
  }
  func.func @transform_2(%arg0: i32) -> (i32, i32, i32) {
    %c0_i32 = arith.constant 0 : i32
    %c0_i32_0 = arith.constant 0 : i32
    %c0_i32_1 = arith.constant 0 : i32
    %c0_i32_2 = arith.constant 0 : i32
    return %c0_i32, %c0_i32_0, %c0_i32_1 : i32, i32, i32
  }
  func.func @transform_3(%arg0: i32) -> (i32, i32) {
    %c0_i32 = arith.constant 0 : i32
    %c0_i32_0 = arith.constant 0 : i32
    %c0_i32_1 = arith.constant 0 : i32
    return %c0_i32, %c0_i32_0 : i32, i32
  }
  func.func @transform_4(%arg0: i32) -> (i32, i32) {
    %c0_i32 = arith.constant 0 : i32
    %c0_i32_0 = arith.constant 0 : i32
    %c0_i32_1 = arith.constant 0 : i32
    return %c0_i32, %c0_i32_0 : i32, i32
  }
  func.func @transform_5(%arg0: i32) -> (i32, i32, i32) {
    %c0_i32 = arith.constant 0 : i32
    %c0_i32_0 = arith.constant 0 : i32
    %c0_i32_1 = arith.constant 0 : i32
    %c0_i32_2 = arith.constant 0 : i32
    return %c0_i32, %c0_i32_0, %c0_i32_1 : i32, i32, i32
  }
  func.func @transform_6(%arg0: i32) -> (i32, i32) {
    %c0_i32 = arith.constant 0 : i32
    %c0_i32_0 = arith.constant 0 : i32
    %c0_i32_1 = arith.constant 0 : i32
    return %c0_i32, %c0_i32_0 : i32, i32
  }
  func.func @transform_7(%arg0: i32) -> (i32, i32, i32) {
    %c0_i32 = arith.constant 0 : i32
    %c0_i32_0 = arith.constant 0 : i32
    %c0_i32_1 = arith.constant 0 : i32
    %c0_i32_2 = arith.constant 0 : i32
    return %c0_i32, %c0_i32_0, %c0_i32_1 : i32, i32, i32
  }
  func.func @transform_8(%arg0: i32) -> (i32, i32, i32) {
    %c0_i32 = arith.constant 0 : i32
    %c0_i32_0 = arith.constant 0 : i32
    %c0_i32_1 = arith.constant 0 : i32
    %c0_i32_2 = arith.constant 0 : i32
    return %c0_i32, %c0_i32_0, %c0_i32_1 : i32, i32, i32
  }
  func.func @transform_9(%arg0: i32) -> (i32, i32) {
    %c0_i32 = arith.constant 0 : i32
    %c0_i32_0 = arith.constant 0 : i32
    %c0_i32_1 = arith.constant 0 : i32
    return %c0_i32, %c0_i32_0 : i32, i32
  }
  func.func @transform_10(%arg0: i32) -> (i32, i32) {
    %c0_i32 = arith.constant 0 : i32
    %c0_i32_0 = arith.constant 0 : i32
    %c0_i32_1 = arith.constant 0 : i32
    return %c0_i32, %c0_i32_0 : i32, i32
  }
  func.func @transform_11(%arg0: i32) -> (i32, i32) {
    %c0_i32 = arith.constant 0 : i32
    %c0_i32_0 = arith.constant 0 : i32
    %c0_i32_1 = arith.constant 0 : i32
    return %c0_i32, %c0_i32_0 : i32, i32
  }
  func.func @transform_12(%arg0: i32) -> (i32, i32) {
    %c0_i32 = arith.constant 0 : i32
    %c0_i32_0 = arith.constant 0 : i32
    return %arg0, %c0_i32 : i32, i32
  }
}

</mosaic_0001>

<llo_original>
// kernel: mnist_classifier_forward.1
$region0: #{mnist_classifier_forward.1}
  #allocation0 [shape = 'u32[]', space=smem, size = 0x4, offset = 0x4, fixed_abs, tag = 'smem constant byte address 0x4 - core index']
  #allocation1 [shape = 'u32[72,128]{1,0:T(1,128)}', space=vmem, size = 0x9000, scoped, tag = 'internal scratch']
  %s0 = inlined_call_operand.vmem [shape: f32[224,28], index: 0, kind: input, shape index: {}]
  %s1 = inlined_call_operand.vmem [shape: f32[28,1280], index: 1, kind: input, shape index: {}]
  %s2 = inlined_call_operand.vmem [shape: f32[6,96,224], index: 2, kind: input, shape index: {}]
  %s3 = inlined_call_operand.vmem [shape: f32[1,128], index: 3, kind: input, shape index: {}]
  %s4 = inlined_call_operand.vmem [shape: f32[128,1280], index: 4, kind: input, shape index: {}]
  %s5 = inlined_call_operand.vmem [shape: f32[6,32,96], index: 5, kind: input, shape index: {}]
  %s6 = inlined_call_operand.vmem [shape: f32[1,128], index: 6, kind: input, shape index: {}]
  %s7 = inlined_call_operand.vmem [shape: f32[4,8,32], index: 7, kind: input, shape index: {}]
  %s8 = inlined_call_operand.vmem [shape: f32[4,128,128], index: 8, kind: input, shape index: {}]
  %s9 = inlined_call_operand.vmem [shape: f32[1,128], index: 9, kind: input, shape index: {}]
  %s10 = inlined_call_operand.vmem [shape: f32[128,128], index: 10, kind: input, shape index: {}]
  %s11 = inlined_call_operand.vmem [shape: f32[1,128], index: 11, kind: input, shape index: {}]
  %s12 = inlined_call_operand.vmem [shape: f32[8,128], index: 12, kind: output, shape index: {}]
  %s13 = sld [smem:[#allocation0]]
  $region58: #{mnist_classifier_forward.1} parent=0
    _
  %s15 = ssub.s32 1, %s13
  %s16 = scalar_select 0, %s15, %s13
  // Predicated region
  $region2: #{mnist_classifier_forward.1} parent=0 // pred_check
    _
  $region3: #{mnist_classifier_forward.1} parent=0 // pred_check_branch
    %18 = sbr.rel (0) target = $region5
  $region4: #{mnist_classifier_forward.1} parent=0 // pred_region
    _
  $region5: #{mnist_classifier_forward.1} parent=0 // pred_fallthru
    _
  // Predicated region
  $region6: #{mnist_classifier_forward.1} parent=0 // pred_check
    _
  $region7: #{mnist_classifier_forward.1} parent=0 // pred_check_branch
    %20 = sbr.rel (0) target = $region9
  $region8: #{mnist_classifier_forward.1} parent=0 // pred_region
    _
  $region9: #{mnist_classifier_forward.1} parent=0 // pred_fallthru
    _
  // Predicated region
  $region10: #{mnist_classifier_forward.1} parent=0 // pred_check
    _
  $region11: #{mnist_classifier_forward.1} parent=0 // pred_check_branch
    %22 = sbr.rel (0) target = $region13
  $region12: #{mnist_classifier_forward.1} parent=0 // pred_region
    _
  $region13: #{mnist_classifier_forward.1} parent=0 // pred_fallthru
    _
  // Predicated region
  $region14: #{mnist_classifier_forward.1} parent=0 // pred_check
    _
  $region15: #{mnist_classifier_forward.1} parent=0 // pred_check_branch
    %24 = sbr.rel (0) target = $region17
  $region16: #{mnist_classifier_forward.1} parent=0 // pred_region
    _
  $region17: #{mnist_classifier_forward.1} parent=0 // pred_fallthru
    _
  // Predicated region
  $region18: #{mnist_classifier_forward.1} parent=0 // pred_check
    _
  $region19: #{mnist_classifier_forward.1} parent=0 // pred_check_branch
    %26 = sbr.rel (0) target = $region21
  $region20: #{mnist_classifier_forward.1} parent=0 // pred_region
    _
  $region21: #{mnist_classifier_forward.1} parent=0 // pred_fallthru
    _
  // Predicated region
  $region22: #{mnist_classifier_forward.1} parent=0 // pred_check
    _
  $region23: #{mnist_classifier_forward.1} parent=0 // pred_check_branch
    %28 = sbr.rel (0) target = $region25
  $region24: #{mnist_classifier_forward.1} parent=0 // pred_region
    _
  $region25: #{mnist_classifier_forward.1} parent=0 // pred_fallthru
    _
  // Predicated region
  $region26: #{mnist_classifier_forward.1} parent=0 // pred_check
    _
  $region27: #{mnist_classifier_forward.1} parent=0 // pred_check_branch
    %30 = sbr.rel (0) target = $region29
  $region28: #{mnist_classifier_forward.1} parent=0 // pred_region
    _
  $region29: #{mnist_classifier_forward.1} parent=0 // pred_fallthru
    _
  // Predicated region
  $region30: #{mnist_classifier_forward.1} parent=0 // pred_check
    _
  $region31: #{mnist_classifier_forward.1} parent=0 // pred_check_branch
    %32 = sbr.rel (0) target = $region33
  $region32: #{mnist_classifier_forward.1} parent=0 // pred_region
    _
  $region33: #{mnist_classifier_forward.1} parent=0 // pred_fallthru
    _
  // Predicated region
  $region34: #{mnist_classifier_forward.1} parent=0 // pred_check
    _
  $region35: #{mnist_classifier_forward.1} parent=0 // pred_check_branch
    %34 = sbr.rel (0) target = $region37
  $region36: #{mnist_classifier_forward.1} parent=0 // pred_region
    _
  $region37: #{mnist_classifier_forward.1} parent=0 // pred_fallthru
    _
  // Predicated region
  $region38: #{mnist_classifier_forward.1} parent=0 // pred_check
    _
  $region39: #{mnist_classifier_forward.1} parent=0 // pred_check_branch
    %36 = sbr.rel (0) target = $region41
  $region40: #{mnist_classifier_forward.1} parent=0 // pred_region
    _
  $region41: #{mnist_classifier_forward.1} parent=0 // pred_fallthru
    _
  // Predicated region
  $region42: #{mnist_classifier_forward.1} parent=0 // pred_check
    _
  $region43: #{mnist_classifier_forward.1} parent=0 // pred_check_branch
    %38 = sbr.rel (0) target = $region45
  $region44: #{mnist_classifier_forward.1} parent=0 // pred_region
    _
  $region45: #{mnist_classifier_forward.1} parent=0 // pred_fallthru
    _
  // Predicated region
  $region46: #{mnist_classifier_forward.1} parent=0 // pred_check
    _
  $region47: #{mnist_classifier_forward.1} parent=0 // pred_check_branch
    %40 = sbr.rel (0) target = $region49
  $region48: #{mnist_classifier_forward.1} parent=0 // pred_region
    _
  $region49: #{mnist_classifier_forward.1} parent=0 // pred_fallthru
    _
  %v41 = vld [vmem:[%s0] sm:$0xff]
  %v42 = vld [vmem:[%s0 + $0x8] sm:$0xff]
  %v43 = vld [vmem:[%s0 + $0x10] sm:$0xff]
  %v44 = vld [vmem:[%s0 + $0x18] sm:$0xff]
  %v45 = vld [vmem:[%s0 + $0x20] sm:$0xff]
  %v46 = vld [vmem:[%s0 + $0x28] sm:$0xff]
  %v47 = vld [vmem:[%s0 + $0x30] sm:$0xff]
  %v48 = vld [vmem:[%s0 + $0x38] sm:$0xff]
  %v49 = vld [vmem:[%s0 + $0x40] sm:$0xff]
  %v50 = vld [vmem:[%s0 + $0x48] sm:$0xff]
  %v51 = vld [vmem:[%s0 + $0x50] sm:$0xff]
  %v52 = vld [vmem:[%s0 + $0x58] sm:$0xff]
  %v53 = vld [vmem:[%s0 + $0x60] sm:$0xff]
  %v54 = vld [vmem:[%s0 + $0x68] sm:$0xff]
  %v55 = vld [vmem:[%s0 + $0x70] sm:$0xff]
  %v56 = vld [vmem:[%s0 + $0x78] sm:$0xff]
  %v57 = vld [vmem:[%s0 + $0x80] sm:$0xff]
  %v58 = vld [vmem:[%s0 + $0x88] sm:$0xff]
  %v59 = vld [vmem:[%s0 + $0x90] sm:$0xff]
  %v60 = vld [vmem:[%s0 + $0x98] sm:$0xff]
  %v61 = vld [vmem:[%s0 + $0xa0] sm:$0xff]
  %v62 = vld [vmem:[%s0 + $0xa8] sm:$0xff]
  %v63 = vld [vmem:[%s0 + $0xb0] sm:$0xff]
  %v64 = vld [vmem:[%s0 + $0xb8] sm:$0xff]
  %v65 = vld [vmem:[%s0 + $0xc0] sm:$0xff]
  %v66 = vld [vmem:[%s0 + $0xc8] sm:$0xff]
  %v67 = vld [vmem:[%s0 + $0xd0] sm:$0xff]
  %v68 = vld [vmem:[%s0 + $0xd8] sm:$0xff]
  %v69 = vld [vmem:[%s1] sm:$0xff]
  %v70 = vld [vmem:[%s1 + $0x8] sm:$0xff]
  %v71 = vld [vmem:[%s1 + $0x10] sm:$0xff]
  %v72 = vld [vmem:[%s1 + $0x18] sm:$0xff]
  %v73 = vld [vmem:[%s1 + $0x20] sm:$0xff]
  %v74 = vld [vmem:[%s1 + $0x28] sm:$0xff]
  %v75 = vld [vmem:[%s1 + $0x30] sm:$0xff]
  %v76 = vld [vmem:[%s1 + $0x38] sm:$0xff]
  %v77 = vld [vmem:[%s1 + $0x40] sm:$0xff]
  %v78 = vld [vmem:[%s1 + $0x48] sm:$0xff]
  %v79 = vld [vmem:[%s1 + $0x50] sm:$0xff]
  %v80 = vld [vmem:[%s1 + $0x58] sm:$0xff]
  %v81 = vld [vmem:[%s1 + $0x60] sm:$0xff]
  %v82 = vld [vmem:[%s1 + $0x68] sm:$0xff]
  %v83 = vld [vmem:[%s1 + $0x70] sm:$0xff]
  %v84 = vld [vmem:[%s1 + $0x78] sm:$0xff]
  %v85 = vld [vmem:[%s1 + $0x80] sm:$0xff]
  %v86 = vld [vmem:[%s1 + $0x88] sm:$0xff]
  %v87 = vld [vmem:[%s1 + $0x90] sm:$0xff]
  %v88 = vld [vmem:[%s1 + $0x98] sm:$0xff]
  %v89 = vld [vmem:[%s1 + $0xa0] sm:$0xff]
  %v90 = vld [vmem:[%s1 + $0xa8] sm:$0xff]
  %v91 = vld [vmem:[%s1 + $0xb0] sm:$0xff]
  %v92 = vld [vmem:[%s1 + $0xb8] sm:$0xff]
  %v93 = vld [vmem:[%s1 + $0xc0] sm:$0xff]
  %v94 = vld [vmem:[%s1 + $0xc8] sm:$0xff]
  %v95 = vld [vmem:[%s1 + $0xd0] sm:$0xff]
  %v96 = vld [vmem:[%s1 + $0xd8] sm:$0xff]
  %v97 = vld [vmem:[%s1 + $0xe0] sm:$0xff]
  %v98 = vld [vmem:[%s1 + $0xe8] sm:$0xff]
  %v99 = vld [vmem:[%s1 + $0xf0] sm:$0xf]
  %v100 = vld [vmem:[%s1 + $0xf8] sm:$0xf]
  %v101 = vld [vmem:[%s1 + $0x100] sm:$0xf]
  %v102 = vld [vmem:[%s1 + $0x108] sm:$0xf]
  %v103 = vld [vmem:[%s1 + $0x110] sm:$0xf]
  %v104 = vld [vmem:[%s1 + $0x118] sm:$0xf]
  %v105 = vld [vmem:[%s1 + $0x120] sm:$0xf]
  %v106 = vld [vmem:[%s1 + $0x128] sm:$0xf]
  %v107 = vld [vmem:[%s1 + $0x130] sm:$0xf]
  %v108 = vld [vmem:[%s1 + $0x138] sm:$0xf]
  %vm109 = vcmask 228352
  %v111 = vsel %vm109, %v41, 0
  %v114 = vsel %vm109, %v42, 0
  %v117 = vsel %vm109, %v43, 0
  %v120 = vsel %vm109, %v44, 0
  %v123 = vsel %vm109, %v45, 0
  %v126 = vsel %vm109, %v46, 0
  %v129 = vsel %vm109, %v47, 0
  %v132 = vsel %vm109, %v48, 0
  %v135 = vsel %vm109, %v49, 0
  %v138 = vsel %vm109, %v50, 0
  %v141 = vsel %vm109, %v51, 0
  %v144 = vsel %vm109, %v52, 0
  %v147 = vsel %vm109, %v53, 0
  %v150 = vsel %vm109, %v54, 0
  %v153 = vsel %vm109, %v55, 0
  %v156 = vsel %vm109, %v56, 0
  %v159 = vsel %vm109, %v57, 0
  %v162 = vsel %vm109, %v58, 0
  %v165 = vsel %vm109, %v59, 0
  %v168 = vsel %vm109, %v60, 0
  %v171 = vsel %vm109, %v61, 0
  %v174 = vsel %vm109, %v62, 0
  %v177 = vsel %vm109, %v63, 0
  %v180 = vsel %vm109, %v64, 0
  %v183 = vsel %vm109, %v65, 0
  %v186 = vsel %vm109, %v66, 0
  %v189 = vsel %vm109, %v67, 0
  %v192 = vsel %vm109, %v68, 0
  %vm194 = vcmask 1043456
  %v196 = vsel %vm194, %v99, 0
  %v199 = vsel %vm194, %v100, 0
  %v202 = vsel %vm194, %v101, 0
  %v205 = vsel %vm194, %v102, 0
  %v208 = vsel %vm194, %v103, 0
  %v211 = vsel %vm194, %v104, 0
  %v214 = vsel %vm194, %v105, 0
  %v217 = vsel %vm194, %v106, 0
  %v220 = vsel %vm194, %v107, 0
  %v223 = vsel %vm194, %v108, 0
  %225 = vmatpush.msra.mxu0 0.0
  %226 = vmatpush.msra.mxu0 0.0
  %227 = vmatpush.msra.mxu0 0.0
  %228 = vmatpush.msra.mxu0 0.0
  %229 = vmatpush.msra.mxu0 0.0
  %230 = vmatpush.msra.mxu0 0.0
  %231 = vmatpush.msra.mxu0 0.0
  %232 = vmatpush.msra.mxu0 0.0
  %233 = vmatpush.msra.mxu0 0.0
  %234 = vmatpush.msra.mxu0 0.0
  %235 = vmatpush.msra.mxu0 0.0
  %236 = vmatpush.msra.mxu0 0.0
  %237 = vmatpush.msra.mxu0 %v196
  %238 = vmatpush.msra.mxu0 %v89
  %239 = vmatpush.msra.mxu0 %v79
  %240 = vmatpush.msra.mxu0 %v69
  %241 = vmatmul.f32.gmra.mxu0 %v111
  %v242 = vpop.f32.mrf.mxu0
  %v243 = vadd.f32 0.0, %v242
  %244 = vmatmul.f32.gmra.mxu0 %v114
  %v245 = vpop.f32.mrf.mxu0
  %v246 = vadd.f32 0.0, %v245
  %247 = vmatmul.f32.gmra.mxu0 %v117
  %v248 = vpop.f32.mrf.mxu0
  %v249 = vadd.f32 0.0, %v248
  %250 = vmatmul.f32.gmra.mxu0 %v120
  %v251 = vpop.f32.mrf.mxu0
  %v252 = vadd.f32 0.0, %v251
  %253 = vmatmul.f32.gmra.mxu0 %v123
  %v254 = vpop.f32.mrf.mxu0
  %v255 = vadd.f32 0.0, %v254
  %256 = vmatmul.f32.gmra.mxu0 %v126
  %v257 = vpop.f32.mrf.mxu0
  %v258 = vadd.f32 0.0, %v257
  %259 = vmatmul.f32.gmra.mxu0 %v129
  %v260 = vpop.f32.mrf.mxu0
  %v261 = vadd.f32 0.0, %v260
  %262 = vmatmul.f32.gmra.mxu0 %v132
  %v263 = vpop.f32.mrf.mxu0
  %v264 = vadd.f32 0.0, %v263
  %265 = vmatmul.f32.gmra.mxu0 %v135
  %v266 = vpop.f32.mrf.mxu0
  %v267 = vadd.f32 0.0, %v266
  %268 = vmatmul.f32.gmra.mxu0 %v138
  %v269 = vpop.f32.mrf.mxu0
  %v270 = vadd.f32 0.0, %v269
  %271 = vmatmul.f32.gmra.mxu0 %v141
  %v272 = vpop.f32.mrf.mxu0
  %v273 = vadd.f32 0.0, %v272
  %274 = vmatmul.f32.gmra.mxu0 %v144
  %v275 = vpop.f32.mrf.mxu0
  %v276 = vadd.f32 0.0, %v275
  %277 = vmatmul.f32.gmra.mxu0 %v147
  %v278 = vpop.f32.mrf.mxu0
  %v279 = vadd.f32 0.0, %v278
  %280 = vmatmul.f32.gmra.mxu0 %v150
  %v281 = vpop.f32.mrf.mxu0
  %v282 = vadd.f32 0.0, %v281
  %283 = vmatmul.f32.gmra.mxu0 %v153
  %v284 = vpop.f32.mrf.mxu0
  %v285 = vadd.f32 0.0, %v284
  %286 = vmatmul.f32.gmra.mxu0 %v156
  %v287 = vpop.f32.mrf.mxu0
  %v288 = vadd.f32 0.0, %v287
  %289 = vmatmul.f32.gmra.mxu0 %v159
  %v290 = vpop.f32.mrf.mxu0
  %v291 = vadd.f32 0.0, %v290
  %292 = vmatmul.f32.gmra.mxu0 %v162
  %v293 = vpop.f32.mrf.mxu0
  %v294 = vadd.f32 0.0, %v293
  %295 = vmatmul.f32.gmra.mxu0 %v165
  %v296 = vpop.f32.mrf.mxu0
  %v297 = vadd.f32 0.0, %v296
  %298 = vmatmul.f32.gmra.mxu0 %v168
  %v299 = vpop.f32.mrf.mxu0
  %v300 = vadd.f32 0.0, %v299
  %301 = vmatmul.f32.gmra.mxu0 %v171
  %v302 = vpop.f32.mrf.mxu0
  %v303 = vadd.f32 0.0, %v302
  %304 = vmatmul.f32.gmra.mxu0 %v174
  %v305 = vpop.f32.mrf.mxu0
  %v306 = vadd.f32 0.0, %v305
  %307 = vmatmul.f32.gmra.mxu0 %v177
  %v308 = vpop.f32.mrf.mxu0
  %v309 = vadd.f32 0.0, %v308
  %310 = vmatmul.f32.gmra.mxu0 %v180
  %v311 = vpop.f32.mrf.mxu0
  %v312 = vadd.f32 0.0, %v311
  %313 = vmatmul.f32.gmra.mxu0 %v183
  %v314 = vpop.f32.mrf.mxu0
  %v315 = vadd.f32 0.0, %v314
  %316 = vmatmul.f32.gmra.mxu0 %v186
  %v317 = vpop.f32.mrf.mxu0
  %v318 = vadd.f32 0.0, %v317
  %319 = vmatmul.f32.gmra.mxu0 %v189
  %v320 = vpop.f32.mrf.mxu0
  %v321 = vadd.f32 0.0, %v320
  %322 = vmatmul.f32.gmra.mxu0 %v192
  %v323 = vpop.f32.mrf.mxu0
  %v324 = vadd.f32 0.0, %v323
  %325 = vdwg.mxu0
  %326 = vmatpush.msra.mxu0 0.0
  %327 = vmatpush.msra.mxu0 0.0
  %328 = vmatpush.msra.mxu0 0.0
  %329 = vmatpush.msra.mxu0 0.0
  %330 = vmatpush.msra.mxu0 0.0
  %331 = vmatpush.msra.mxu0 0.0
  %332 = vmatpush.msra.mxu0 0.0
  %333 = vmatpush.msra.mxu0 0.0
  %334 = vmatpush.msra.mxu0 0.0
  %335 = vmatpush.msra.mxu0 0.0
  %336 = vmatpush.msra.mxu0 0.0
  %337 = vmatpush.msra.mxu0 0.0
  %338 = vmatpush.msra.mxu0 %v199
  %339 = vmatpush.msra.mxu0 %v90
  %340 = vmatpush.msra.mxu0 %v80
  %341 = vmatpush.msra.mxu0 %v70
  %342 = vmatmul.f32.gmra.mxu0 %v111
  %v343 = vpop.f32.mrf.mxu0
  %v344 = vadd.f32 0.0, %v343
  %345 = vmatmul.f32.gmra.mxu0 %v114
  %v346 = vpop.f32.mrf.mxu0
  %v347 = vadd.f32 0.0, %v346
  %348 = vmatmul.f32.gmra.mxu0 %v117
  %v349 = vpop.f32.mrf.mxu0
  %v350 = vadd.f32 0.0, %v349
  %351 = vmatmul.f32.gmra.mxu0 %v120
  %v352 = vpop.f32.mrf.mxu0
  %v353 = vadd.f32 0.0, %v352
  %354 = vmatmul.f32.gmra.mxu0 %v123
  %v355 = vpop.f32.mrf.mxu0
  %v356 = vadd.f32 0.0, %v355
  %357 = vmatmul.f32.gmra.mxu0 %v126
  %v358 = vpop.f32.mrf.mxu0
  %v359 = vadd.f32 0.0, %v358
  %360 = vmatmul.f32.gmra.mxu0 %v129
  %v361 = vpop.f32.mrf.mxu0
  %v362 = vadd.f32 0.0, %v361
  %363 = vmatmul.f32.gmra.mxu0 %v132
  %v364 = vpop.f32.mrf.mxu0
  %v365 = vadd.f32 0.0, %v364
  %366 = vmatmul.f32.gmra.mxu0 %v135
  %v367 = vpop.f32.mrf.mxu0
  %v368 = vadd.f32 0.0, %v367
  %369 = vmatmul.f32.gmra.mxu0 %v138
  %v370 = vpop.f32.mrf.mxu0
  %v371 = vadd.f32 0.0, %v370
  %372 = vmatmul.f32.gmra.mxu0 %v141
  %v373 = vpop.f32.mrf.mxu0
  %v374 = vadd.f32 0.0, %v373
  %375 = vmatmul.f32.gmra.mxu0 %v144
  %v376 = vpop.f32.mrf.mxu0
  %v377 = vadd.f32 0.0, %v376
  %378 = vmatmul.f32.gmra.mxu0 %v147
  %v379 = vpop.f32.mrf.mxu0
  %v380 = vadd.f32 0.0, %v379
  %381 = vmatmul.f32.gmra.mxu0 %v150
  %v382 = vpop.f32.mrf.mxu0
  %v383 = vadd.f32 0.0, %v382
  %384 = vmatmul.f32.gmra.mxu0 %v153
  %v385 = vpop.f32.mrf.mxu0
  %v386 = vadd.f32 0.0, %v385
  %387 = vmatmul.f32.gmra.mxu0 %v156
  %v388 = vpop.f32.mrf.mxu0
  %v389 = vadd.f32 0.0, %v388
  %390 = vmatmul.f32.gmra.mxu0 %v159
  %v391 = vpop.f32.mrf.mxu0
  %v392 = vadd.f32 0.0, %v391
  %393 = vmatmul.f32.gmra.mxu0 %v162
  %v394 = vpop.f32.mrf.mxu0
  %v395 = vadd.f32 0.0, %v394
  %396 = vmatmul.f32.gmra.mxu0 %v165
  %v397 = vpop.f32.mrf.mxu0
  %v398 = vadd.f32 0.0, %v397
  %399 = vmatmul.f32.gmra.mxu0 %v168
  %v400 = vpop.f32.mrf.mxu0
  %v401 = vadd.f32 0.0, %v400
  %402 = vmatmul.f32.gmra.mxu0 %v171
  %v403 = vpop.f32.mrf.mxu0
  %v404 = vadd.f32 0.0, %v403
  %405 = vmatmul.f32.gmra.mxu0 %v174
  %v406 = vpop.f32.mrf.mxu0
  %v407 = vadd.f32 0.0, %v406
  %408 = vmatmul.f32.gmra.mxu0 %v177
  %v409 = vpop.f32.mrf.mxu0
  %v410 = vadd.f32 0.0, %v409
  %411 = vmatmul.f32.gmra.mxu0 %v180
  %v412 = vpop.f32.mrf.mxu0
  %v413 = vadd.f32 0.0, %v412
  %414 = vmatmul.f32.gmra.mxu0 %v183
  %v415 = vpop.f32.mrf.mxu0
  %v416 = vadd.f32 0.0, %v415
  %417 = vmatmul.f32.gmra.mxu0 %v186
  %v418 = vpop.f32.mrf.mxu0
  %v419 = vadd.f32 0.0, %v418
  %420 = vmatmul.f32.gmra.mxu0 %v189
  %v421 = vpop.f32.mrf.mxu0
  %v422 = vadd.f32 0.0, %v421
  %423 = vmatmul.f32.gmra.mxu0 %v192
  %v424 = vpop.f32.mrf.mxu0
  %v425 = vadd.f32 0.0, %v424
  %426 = vdwg.mxu0
  %427 = vmatpush.msra.mxu0 0.0
  %428 = vmatpush.msra.mxu0 0.0
  %429 = vmatpush.msra.mxu0 0.0
  %430 = vmatpush.msra.mxu0 0.0
  %431 = vmatpush.msra.mxu0 0.0
  %432 = vmatpush.msra.mxu0 0.0
  %433 = vmatpush.msra.mxu0 0.0
  %434 = vmatpush.msra.mxu0 0.0
  %435 = vmatpush.msra.mxu0 0.0
  %436 = vmatpush.msra.mxu0 0.0
  %437 = vmatpush.msra.mxu0 0.0
  %438 = vmatpush.msra.mxu0 0.0
  %439 = vmatpush.msra.mxu0 %v202
  %440 = vmatpush.msra.mxu0 %v91
  %441 = vmatpush.msra.mxu0 %v81
  %442 = vmatpush.msra.mxu0 %v71
  %443 = vmatmul.f32.gmra.mxu0 %v111
  %v444 = vpop.f32.mrf.mxu0
  %v445 = vadd.f32 0.0, %v444
  %446 = vmatmul.f32.gmra.mxu0 %v114
  %v447 = vpop.f32.mrf.mxu0
  %v448 = vadd.f32 0.0, %v447
  %449 = vmatmul.f32.gmra.mxu0 %v117
  %v450 = vpop.f32.mrf.mxu0
  %v451 = vadd.f32 0.0, %v450
  %452 = vmatmul.f32.gmra.mxu0 %v120
  %v453 = vpop.f32.mrf.mxu0
  %v454 = vadd.f32 0.0, %v453
  %455 = vmatmul.f32.gmra.mxu0 %v123
  %v456 = vpop.f32.mrf.mxu0
  %v457 = vadd.f32 0.0, %v456
  %458 = vmatmul.f32.gmra.mxu0 %v126
  %v459 = vpop.f32.mrf.mxu0
  %v460 = vadd.f32 0.0, %v459
  %461 = vmatmul.f32.gmra.mxu0 %v129
  %v462 = vpop.f32.mrf.mxu0
  %v463 = vadd.f32 0.0, %v462
  %464 = vmatmul.f32.gmra.mxu0 %v132
  %v465 = vpop.f32.mrf.mxu0
  %v466 = vadd.f32 0.0, %v465
  %467 = vmatmul.f32.gmra.mxu0 %v135
  %v468 = vpop.f32.mrf.mxu0
  %v469 = vadd.f32 0.0, %v468
  %470 = vmatmul.f32.gmra.mxu0 %v138
  %v471 = vpop.f32.mrf.mxu0
  %v472 = vadd.f32 0.0, %v471
  %473 = vmatmul.f32.gmra.mxu0 %v141
  %v474 = vpop.f32.mrf.mxu0
  %v475 = vadd.f32 0.0, %v474
  %476 = vmatmul.f32.gmra.mxu0 %v144
  %v477 = vpop.f32.mrf.mxu0
  %v478 = vadd.f32 0.0, %v477
  %479 = vmatmul.f32.gmra.mxu0 %v147
  %v480 = vpop.f32.mrf.mxu0
  %v481 = vadd.f32 0.0, %v480
  %482 = vmatmul.f32.gmra.mxu0 %v150
  %v483 = vpop.f32.mrf.mxu0
  %v484 = vadd.f32 0.0, %v483
  %485 = vmatmul.f32.gmra.mxu0 %v153
  %v486 = vpop.f32.mrf.mxu0
  %v487 = vadd.f32 0.0, %v486
  %488 = vmatmul.f32.gmra.mxu0 %v156
  %v489 = vpop.f32.mrf.mxu0
  %v490 = vadd.f32 0.0, %v489
  %491 = vmatmul.f32.gmra.mxu0 %v159
  %v492 = vpop.f32.mrf.mxu0
  %v493 = vadd.f32 0.0, %v492
  %494 = vmatmul.f32.gmra.mxu0 %v162
  %v495 = vpop.f32.mrf.mxu0
  %v496 = vadd.f32 0.0, %v495
  %497 = vmatmul.f32.gmra.mxu0 %v165
  %v498 = vpop.f32.mrf.mxu0
  %v499 = vadd.f32 0.0, %v498
  %500 = vmatmul.f32.gmra.mxu0 %v168
  %v501 = vpop.f32.mrf.mxu0
  %v502 = vadd.f32 0.0, %v501
  %503 = vmatmul.f32.gmra.mxu0 %v171
  %v504 = vpop.f32.mrf.mxu0
  %v505 = vadd.f32 0.0, %v504
  %506 = vmatmul.f32.gmra.mxu0 %v174
  %v507 = vpop.f32.mrf.mxu0
  %v508 = vadd.f32 0.0, %v507
  %509 = vmatmul.f32.gmra.mxu0 %v177
  %v510 = vpop.f32.mrf.mxu0
  %v511 = vadd.f32 0.0, %v510
  %512 = vmatmul.f32.gmra.mxu0 %v180
  %v513 = vpop.f32.mrf.mxu0
  %v514 = vadd.f32 0.0, %v513
  %515 = vmatmul.f32.gmra.mxu0 %v183
  %v516 = vpop.f32.mrf.mxu0
  %v517 = vadd.f32 0.0, %v516
  %518 = vmatmul.f32.gmra.mxu0 %v186
  %v519 = vpop.f32.mrf.mxu0
  %v520 = vadd.f32 0.0, %v519
  %521 = vmatmul.f32.gmra.mxu0 %v189
  %v522 = vpop.f32.mrf.mxu0
  %v523 = vadd.f32 0.0, %v522
  %524 = vmatmul.f32.gmra.mxu0 %v192
  %v525 = vpop.f32.mrf.mxu0
  %v526 = vadd.f32 0.0, %v525
  %527 = vdwg.mxu0
  %528 = vmatpush.msra.mxu0 0.0
  %529 = vmatpush.msra.mxu0 0.0
  %530 = vmatpush.msra.mxu0 0.0
  %531 = vmatpush.msra.mxu0 0.0
  %532 = vmatpush.msra.mxu0 0.0
  %533 = vmatpush.msra.mxu0 0.0
  %534 = vmatpush.msra.mxu0 0.0
  %535 = vmatpush.msra.mxu0 0.0
  %536 = vmatpush.msra.mxu0 0.0
  %537 = vmatpush.msra.mxu0 0.0
  %538 = vmatpush.msra.mxu0 0.0
  %539 = vmatpush.msra.mxu0 0.0
  %540 = vmatpush.msra.mxu0 %v205
  %541 = vmatpush.msra.mxu0 %v92
  %542 = vmatpush.msra.mxu0 %v82
  %543 = vmatpush.msra.mxu0 %v72
  %544 = vmatmul.f32.gmra.mxu0 %v111
  %v545 = vpop.f32.mrf.mxu0
  %v546 = vadd.f32 0.0, %v545
  %547 = vmatmul.f32.gmra.mxu0 %v114
  %v548 = vpop.f32.mrf.mxu0
  %v549 = vadd.f32 0.0, %v548
  %550 = vmatmul.f32.gmra.mxu0 %v117
  %v551 = vpop.f32.mrf.mxu0
  %v552 = vadd.f32 0.0, %v551
  %553 = vmatmul.f32.gmra.mxu0 %v120
  %v554 = vpop.f32.mrf.mxu0
  %v555 = vadd.f32 0.0, %v554
  %556 = vmatmul.f32.gmra.mxu0 %v123
  %v557 = vpop.f32.mrf.mxu0
  %v558 = vadd.f32 0.0, %v557
  %559 = vmatmul.f32.gmra.mxu0 %v126
  %v560 = vpop.f32.mrf.mxu0
  %v561 = vadd.f32 0.0, %v560
  %562 = vmatmul.f32.gmra.mxu0 %v129
  %v563 = vpop.f32.mrf.mxu0
  %v564 = vadd.f32 0.0, %v563
  %565 = vmatmul.f32.gmra.mxu0 %v132
  %v566 = vpop.f32.mrf.mxu0
  %v567 = vadd.f32 0.0, %v566
  %568 = vmatmul.f32.gmra.mxu0 %v135
  %v569 = vpop.f32.mrf.mxu0
  %v570 = vadd.f32 0.0, %v569
  %571 = vmatmul.f32.gmra.mxu0 %v138
  %v572 = vpop.f32.mrf.mxu0
  %v573 = vadd.f32 0.0, %v572
  %574 = vmatmul.f32.gmra.mxu0 %v141
  %v575 = vpop.f32.mrf.mxu0
  %v576 = vadd.f32 0.0, %v575
  %577 = vmatmul.f32.gmra.mxu0 %v144
  %v578 = vpop.f32.mrf.mxu0
  %v579 = vadd.f32 0.0, %v578
  %580 = vmatmul.f32.gmra.mxu0 %v147
  %v581 = vpop.f32.mrf.mxu0
  %v582 = vadd.f32 0.0, %v581
  %583 = vmatmul.f32.gmra.mxu0 %v150
  %v584 = vpop.f32.mrf.mxu0
  %v585 = vadd.f32 0.0, %v584
  %586 = vmatmul.f32.gmra.mxu0 %v153
  %v587 = vpop.f32.mrf.mxu0
  %v588 = vadd.f32 0.0, %v587
  %589 = vmatmul.f32.gmra.mxu0 %v156
  %v590 = vpop.f32.mrf.mxu0
  %v591 = vadd.f32 0.0, %v590
  %592 = vmatmul.f32.gmra.mxu0 %v159
  %v593 = vpop.f32.mrf.mxu0
  %v594 = vadd.f32 0.0, %v593
  %595 = vmatmul.f32.gmra.mxu0 %v162
  %v596 = vpop.f32.mrf.mxu0
  %v597 = vadd.f32 0.0, %v596
  %598 = vmatmul.f32.gmra.mxu0 %v165
  %v599 = vpop.f32.mrf.mxu0
  %v600 = vadd.f32 0.0, %v599
  %601 = vmatmul.f32.gmra.mxu0 %v168
  %v602 = vpop.f32.mrf.mxu0
  %v603 = vadd.f32 0.0, %v602
  %604 = vmatmul.f32.gmra.mxu0 %v171
  %v605 = vpop.f32.mrf.mxu0
  %v606 = vadd.f32 0.0, %v605
  %607 = vmatmul.f32.gmra.mxu0 %v174
  %v608 = vpop.f32.mrf.mxu0
  %v609 = vadd.f32 0.0, %v608
  %610 = vmatmul.f32.gmra.mxu0 %v177
  %v611 = vpop.f32.mrf.mxu0
  %v612 = vadd.f32 0.0, %v611
  %613 = vmatmul.f32.gmra.mxu0 %v180
  %v614 = vpop.f32.mrf.mxu0
  %v615 = vadd.f32 0.0, %v614
  %616 = vmatmul.f32.gmra.mxu0 %v183
  %v617 = vpop.f32.mrf.mxu0
  %v618 = vadd.f32 0.0, %v617
  %619 = vmatmul.f32.gmra.mxu0 %v186
  %v620 = vpop.f32.mrf.mxu0
  %v621 = vadd.f32 0.0, %v620
  %622 = vmatmul.f32.gmra.mxu0 %v189
  %v623 = vpop.f32.mrf.mxu0
  %v624 = vadd.f32 0.0, %v623
  %625 = vmatmul.f32.gmra.mxu0 %v192
  %v626 = vpop.f32.mrf.mxu0
  %v627 = vadd.f32 0.0, %v626
  %628 = vdwg.mxu0
  %629 = vmatpush.msra.mxu0 0.0
  %630 = vmatpush.msra.mxu0 0.0
  %631 = vmatpush.msra.mxu0 0.0
  %632 = vmatpush.msra.mxu0 0.0
  %633 = vmatpush.msra.mxu0 0.0
  %634 = vmatpush.msra.mxu0 0.0
  %635 = vmatpush.msra.mxu0 0.0
  %636 = vmatpush.msra.mxu0 0.0
  %637 = vmatpush.msra.mxu0 0.0
  %638 = vmatpush.msra.mxu0 0.0
  %639 = vmatpush.msra.mxu0 0.0
  %640 = vmatpush.msra.mxu0 0.0
  %641 = vmatpush.msra.mxu0 %v208
  %642 = vmatpush.msra.mxu0 %v93
  %643 = vmatpush.msra.mxu0 %v83
  %644 = vmatpush.msra.mxu0 %v73
  %645 = vmatmul.f32.gmra.mxu0 %v111
  %v646 = vpop.f32.mrf.mxu0
  %v647 = vadd.f32 0.0, %v646
  %648 = vmatmul.f32.gmra.mxu0 %v114
  %v649 = vpop.f32.mrf.mxu0
  %v650 = vadd.f32 0.0, %v649
  %651 = vmatmul.f32.gmra.mxu0 %v117
  %v652 = vpop.f32.mrf.mxu0
  %v653 = vadd.f32 0.0, %v652
  %654 = vmatmul.f32.gmra.mxu0 %v120
  %v655 = vpop.f32.mrf.mxu0
  %v656 = vadd.f32 0.0, %v655
  %657 = vmatmul.f32.gmra.mxu0 %v123
  %v658 = vpop.f32.mrf.mxu0
  %v659 = vadd.f32 0.0, %v658
  %660 = vmatmul.f32.gmra.mxu0 %v126
  %v661 = vpop.f32.mrf.mxu0
  %v662 = vadd.f32 0.0, %v661
  %663 = vmatmul.f32.gmra.mxu0 %v129
  %v664 = vpop.f32.mrf.mxu0
  %v665 = vadd.f32 0.0, %v664
  %666 = vmatmul.f32.gmra.mxu0 %v132
  %v667 = vpop.f32.mrf.mxu0
  %v668 = vadd.f32 0.0, %v667
  %669 = vmatmul.f32.gmra.mxu0 %v135
  %v670 = vpop.f32.mrf.mxu0
  %v671 = vadd.f32 0.0, %v670
  %672 = vmatmul.f32.gmra.mxu0 %v138
  %v673 = vpop.f32.mrf.mxu0
  %v674 = vadd.f32 0.0, %v673
  %675 = vmatmul.f32.gmra.mxu0 %v141
  %v676 = vpop.f32.mrf.mxu0
  %v677 = vadd.f32 0.0, %v676
  %678 = vmatmul.f32.gmra.mxu0 %v144
  %v679 = vpop.f32.mrf.mxu0
  %v680 = vadd.f32 0.0, %v679
  %681 = vmatmul.f32.gmra.mxu0 %v147
  %v682 = vpop.f32.mrf.mxu0
  %v683 = vadd.f32 0.0, %v682
  %684 = vmatmul.f32.gmra.mxu0 %v150
  %v685 = vpop.f32.mrf.mxu0
  %v686 = vadd.f32 0.0, %v685
  %687 = vmatmul.f32.gmra.mxu0 %v153
  %v688 = vpop.f32.mrf.mxu0
  %v689 = vadd.f32 0.0, %v688
  %690 = vmatmul.f32.gmra.mxu0 %v156
  %v691 = vpop.f32.mrf.mxu0
  %v692 = vadd.f32 0.0, %v691
  %693 = vmatmul.f32.gmra.mxu0 %v159
  %v694 = vpop.f32.mrf.mxu0
  %v695 = vadd.f32 0.0, %v694
  %696 = vmatmul.f32.gmra.mxu0 %v162
  %v697 = vpop.f32.mrf.mxu0
  %v698 = vadd.f32 0.0, %v697
  %699 = vmatmul.f32.gmra.mxu0 %v165
  %v700 = vpop.f32.mrf.mxu0
  %v701 = vadd.f32 0.0, %v700
  %702 = vmatmul.f32.gmra.mxu0 %v168
  %v703 = vpop.f32.mrf.mxu0
  %v704 = vadd.f32 0.0, %v703
  %705 = vmatmul.f32.gmra.mxu0 %v171
  %v706 = vpop.f32.mrf.mxu0
  %v707 = vadd.f32 0.0, %v706
  %708 = vmatmul.f32.gmra.mxu0 %v174
  %v709 = vpop.f32.mrf.mxu0
  %v710 = vadd.f32 0.0, %v709
  %711 = vmatmul.f32.gmra.mxu0 %v177
  %v712 = vpop.f32.mrf.mxu0
  %v713 = vadd.f32 0.0, %v712
  %714 = vmatmul.f32.gmra.mxu0 %v180
  %v715 = vpop.f32.mrf.mxu0
  %v716 = vadd.f32 0.0, %v715
  %717 = vmatmul.f32.gmra.mxu0 %v183
  %v718 = vpop.f32.mrf.mxu0
  %v719 = vadd.f32 0.0, %v718
  %720 = vmatmul.f32.gmra.mxu0 %v186
  %v721 = vpop.f32.mrf.mxu0
  %v722 = vadd.f32 0.0, %v721
  %723 = vmatmul.f32.gmra.mxu0 %v189
  %v724 = vpop.f32.mrf.mxu0
  %v725 = vadd.f32 0.0, %v724
  %726 = vmatmul.f32.gmra.mxu0 %v192
  %v727 = vpop.f32.mrf.mxu0
  %v728 = vadd.f32 0.0, %v727
  %729 = vdwg.mxu0
  %730 = vmatpush.msra.mxu0 0.0
  %731 = vmatpush.msra.mxu0 0.0
  %732 = vmatpush.msra.mxu0 0.0
  %733 = vmatpush.msra.mxu0 0.0
  %734 = vmatpush.msra.mxu0 0.0
  %735 = vmatpush.msra.mxu0 0.0
  %736 = vmatpush.msra.mxu0 0.0
  %737 = vmatpush.msra.mxu0 0.0
  %738 = vmatpush.msra.mxu0 0.0
  %739 = vmatpush.msra.mxu0 0.0
  %740 = vmatpush.msra.mxu0 0.0
  %741 = vmatpush.msra.mxu0 0.0
  %742 = vmatpush.msra.mxu0 %v211
  %743 = vmatpush.msra.mxu0 %v94
  %744 = vmatpush.msra.mxu0 %v84
  %745 = vmatpush.msra.mxu0 %v74
  %746 = vmatmul.f32.gmra.mxu0 %v111
  %v747 = vpop.f32.mrf.mxu0
  %v748 = vadd.f32 0.0, %v747
  %749 = vmatmul.f32.gmra.mxu0 %v114
  %v750 = vpop.f32.mrf.mxu0
  %v751 = vadd.f32 0.0, %v750
  %752 = vmatmul.f32.gmra.mxu0 %v117
  %v753 = vpop.f32.mrf.mxu0
  %v754 = vadd.f32 0.0, %v753
  %755 = vmatmul.f32.gmra.mxu0 %v120
  %v756 = vpop.f32.mrf.mxu0
  %v757 = vadd.f32 0.0, %v756
  %758 = vmatmul.f32.gmra.mxu0 %v123
  %v759 = vpop.f32.mrf.mxu0
  %v760 = vadd.f32 0.0, %v759
  %761 = vmatmul.f32.gmra.mxu0 %v126
  %v762 = vpop.f32.mrf.mxu0
  %v763 = vadd.f32 0.0, %v762
  %764 = vmatmul.f32.gmra.mxu0 %v129
  %v765 = vpop.f32.mrf.mxu0
  %v766 = vadd.f32 0.0, %v765
  %767 = vmatmul.f32.gmra.mxu0 %v132
  %v768 = vpop.f32.mrf.mxu0
  %v769 = vadd.f32 0.0, %v768
  %770 = vmatmul.f32.gmra.mxu0 %v135
  %v771 = vpop.f32.mrf.mxu0
  %v772 = vadd.f32 0.0, %v771
  %773 = vmatmul.f32.gmra.mxu0 %v138
  %v774 = vpop.f32.mrf.mxu0
  %v775 = vadd.f32 0.0, %v774
  %776 = vmatmul.f32.gmra.mxu0 %v141
  %v777 = vpop.f32.mrf.mxu0
  %v778 = vadd.f32 0.0, %v777
  %779 = vmatmul.f32.gmra.mxu0 %v144
  %v780 = vpop.f32.mrf.mxu0
  %v781 = vadd.f32 0.0, %v780
  %782 = vmatmul.f32.gmra.mxu0 %v147
  %v783 = vpop.f32.mrf.mxu0
  %v784 = vadd.f32 0.0, %v783
  %785 = vmatmul.f32.gmra.mxu0 %v150
  %v786 = vpop.f32.mrf.mxu0
  %v787 = vadd.f32 0.0, %v786
  %788 = vmatmul.f32.gmra.mxu0 %v153
  %v789 = vpop.f32.mrf.mxu0
  %v790 = vadd.f32 0.0, %v789
  %791 = vmatmul.f32.gmra.mxu0 %v156
  %v792 = vpop.f32.mrf.mxu0
  %v793 = vadd.f32 0.0, %v792
  %794 = vmatmul.f32.gmra.mxu0 %v159
  %v795 = vpop.f32.mrf.mxu0
  %v796 = vadd.f32 0.0, %v795
  %797 = vmatmul.f32.gmra.mxu0 %v162
  %v798 = vpop.f32.mrf.mxu0
  %v799 = vadd.f32 0.0, %v798
  %800 = vmatmul.f32.gmra.mxu0 %v165
  %v801 = vpop.f32.mrf.mxu0
  %v802 = vadd.f32 0.0, %v801
  %803 = vmatmul.f32.gmra.mxu0 %v168
  %v804 = vpop.f32.mrf.mxu0
  %v805 = vadd.f32 0.0, %v804
  %806 = vmatmul.f32.gmra.mxu0 %v171
  %v807 = vpop.f32.mrf.mxu0
  %v808 = vadd.f32 0.0, %v807
  %809 = vmatmul.f32.gmra.mxu0 %v174
  %v810 = vpop.f32.mrf.mxu0
  %v811 = vadd.f32 0.0, %v810
  %812 = vmatmul.f32.gmra.mxu0 %v177
  %v813 = vpop.f32.mrf.mxu0
  %v814 = vadd.f32 0.0, %v813
  %815 = vmatmul.f32.gmra.mxu0 %v180
  %v816 = vpop.f32.mrf.mxu0
  %v817 = vadd.f32 0.0, %v816
  %818 = vmatmul.f32.gmra.mxu0 %v183
  %v819 = vpop.f32.mrf.mxu0
  %v820 = vadd.f32 0.0, %v819
  %821 = vmatmul.f32.gmra.mxu0 %v186
  %v822 = vpop.f32.mrf.mxu0
  %v823 = vadd.f32 0.0, %v822
  %824 = vmatmul.f32.gmra.mxu0 %v189
  %v825 = vpop.f32.mrf.mxu0
  %v826 = vadd.f32 0.0, %v825
  %827 = vmatmul.f32.gmra.mxu0 %v192
  %v828 = vpop.f32.mrf.mxu0
  %v829 = vadd.f32 0.0, %v828
  %830 = vdwg.mxu0
  %831 = vmatpush.msra.mxu0 0.0
  %832 = vmatpush.msra.mxu0 0.0
  %833 = vmatpush.msra.mxu0 0.0
  %834 = vmatpush.msra.mxu0 0.0
  %835 = vmatpush.msra.mxu0 0.0
  %836 = vmatpush.msra.mxu0 0.0
  %837 = vmatpush.msra.mxu0 0.0
  %838 = vmatpush.msra.mxu0 0.0
  %839 = vmatpush.msra.mxu0 0.0
  %840 = vmatpush.msra.mxu0 0.0
  %841 = vmatpush.msra.mxu0 0.0
  %842 = vmatpush.msra.mxu0 0.0
  %843 = vmatpush.msra.mxu0 %v214
  %844 = vmatpush.msra.mxu0 %v95
  %845 = vmatpush.msra.mxu0 %v85
  %846 = vmatpush.msra.mxu0 %v75
  %847 = vmatmul.f32.gmra.mxu0 %v111
  %v848 = vpop.f32.mrf.mxu0
  %v849 = vadd.f32 0.0, %v848
  %850 = vmatmul.f32.gmra.mxu0 %v114
  %v851 = vpop.f32.mrf.mxu0
  %v852 = vadd.f32 0.0, %v851
  %853 = vmatmul.f32.gmra.mxu0 %v117
  %v854 = vpop.f32.mrf.mxu0
  %v855 = vadd.f32 0.0, %v854
  %856 = vmatmul.f32.gmra.mxu0 %v120
  %v857 = vpop.f32.mrf.mxu0
  %v858 = vadd.f32 0.0, %v857
  %859 = vmatmul.f32.gmra.mxu0 %v123
  %v860 = vpop.f32.mrf.mxu0
  %v861 = vadd.f32 0.0, %v860
  %862 = vmatmul.f32.gmra.mxu0 %v126
  %v863 = vpop.f32.mrf.mxu0
  %v864 = vadd.f32 0.0, %v863
  %865 = vmatmul.f32.gmra.mxu0 %v129
  %v866 = vpop.f32.mrf.mxu0
  %v867 = vadd.f32 0.0, %v866
  %868 = vmatmul.f32.gmra.mxu0 %v132
  %v869 = vpop.f32.mrf.mxu0
  %v870 = vadd.f32 0.0, %v869
  %871 = vmatmul.f32.gmra.mxu0 %v135
  %v872 = vpop.f32.mrf.mxu0
  %v873 = vadd.f32 0.0, %v872
  %874 = vmatmul.f32.gmra.mxu0 %v138
  %v875 = vpop.f32.mrf.mxu0
  %v876 = vadd.f32 0.0, %v875
  %877 = vmatmul.f32.gmra.mxu0 %v141
  %v878 = vpop.f32.mrf.mxu0
  %v879 = vadd.f32 0.0, %v878
  %880 = vmatmul.f32.gmra.mxu0 %v144
  %v881 = vpop.f32.mrf.mxu0
  %v882 = vadd.f32 0.0, %v881
  %883 = vmatmul.f32.gmra.mxu0 %v147
  %v884 = vpop.f32.mrf.mxu0
  %v885 = vadd.f32 0.0, %v884
  %886 = vmatmul.f32.gmra.mxu0 %v150
  %v887 = vpop.f32.mrf.mxu0
  %v888 = vadd.f32 0.0, %v887
  %889 = vmatmul.f32.gmra.mxu0 %v153
  %v890 = vpop.f32.mrf.mxu0
  %v891 = vadd.f32 0.0, %v890
  %892 = vmatmul.f32.gmra.mxu0 %v156
  %v893 = vpop.f32.mrf.mxu0
  %v894 = vadd.f32 0.0, %v893
  %895 = vmatmul.f32.gmra.mxu0 %v159
  %v896 = vpop.f32.mrf.mxu0
  %v897 = vadd.f32 0.0, %v896
  %898 = vmatmul.f32.gmra.mxu0 %v162
  %v899 = vpop.f32.mrf.mxu0
  %v900 = vadd.f32 0.0, %v899
  %901 = vmatmul.f32.gmra.mxu0 %v165
  %v902 = vpop.f32.mrf.mxu0
  %v903 = vadd.f32 0.0, %v902
  %904 = vmatmul.f32.gmra.mxu0 %v168
  %v905 = vpop.f32.mrf.mxu0
  %v906 = vadd.f32 0.0, %v905
  %907 = vmatmul.f32.gmra.mxu0 %v171
  %v908 = vpop.f32.mrf.mxu0
  %v909 = vadd.f32 0.0, %v908
  %910 = vmatmul.f32.gmra.mxu0 %v174
  %v911 = vpop.f32.mrf.mxu0
  %v912 = vadd.f32 0.0, %v911
  %913 = vmatmul.f32.gmra.mxu0 %v177
  %v914 = vpop.f32.mrf.mxu0
  %v915 = vadd.f32 0.0, %v914
  %916 = vmatmul.f32.gmra.mxu0 %v180
  %v917 = vpop.f32.mrf.mxu0
  %v918 = vadd.f32 0.0, %v917
  %919 = vmatmul.f32.gmra.mxu0 %v183
  %v920 = vpop.f32.mrf.mxu0
  %v921 = vadd.f32 0.0, %v920
  %922 = vmatmul.f32.gmra.mxu0 %v186
  %v923 = vpop.f32.mrf.mxu0
  %v924 = vadd.f32 0.0, %v923
  %925 = vmatmul.f32.gmra.mxu0 %v189
  %v926 = vpop.f32.mrf.mxu0
  %v927 = vadd.f32 0.0, %v926
  %928 = vmatmul.f32.gmra.mxu0 %v192
  %v929 = vpop.f32.mrf.mxu0
  %v930 = vadd.f32 0.0, %v929
  %931 = vdwg.mxu0
  %932 = vmatpush.msra.mxu0 0.0
  %933 = vmatpush.msra.mxu0 0.0
  %934 = vmatpush.msra.mxu0 0.0
  %935 = vmatpush.msra.mxu0 0.0
  %936 = vmatpush.msra.mxu0 0.0
  %937 = vmatpush.msra.mxu0 0.0
  %938 = vmatpush.msra.mxu0 0.0
  %939 = vmatpush.msra.mxu0 0.0
  %940 = vmatpush.msra.mxu0 0.0
  %941 = vmatpush.msra.mxu0 0.0
  %942 = vmatpush.msra.mxu0 0.0
  %943 = vmatpush.msra.mxu0 0.0
  %944 = vmatpush.msra.mxu0 %v217
  %945 = vmatpush.msra.mxu0 %v96
  %946 = vmatpush.msra.mxu0 %v86
  %947 = vmatpush.msra.mxu0 %v76
  %948 = vmatmul.f32.gmra.mxu0 %v111
  %v949 = vpop.f32.mrf.mxu0
  %v950 = vadd.f32 0.0, %v949
  %951 = vmatmul.f32.gmra.mxu0 %v114
  %v952 = vpop.f32.mrf.mxu0
  %v953 = vadd.f32 0.0, %v952
  %954 = vmatmul.f32.gmra.mxu0 %v117
  %v955 = vpop.f32.mrf.mxu0
  %v956 = vadd.f32 0.0, %v955
  %957 = vmatmul.f32.gmra.mxu0 %v120
  %v958 = vpop.f32.mrf.mxu0
  %v959 = vadd.f32 0.0, %v958
  %960 = vmatmul.f32.gmra.mxu0 %v123
  %v961 = vpop.f32.mrf.mxu0
  %v962 = vadd.f32 0.0, %v961
  %963 = vmatmul.f32.gmra.mxu0 %v126
  %v964 = vpop.f32.mrf.mxu0
  %v965 = vadd.f32 0.0, %v964
  %966 = vmatmul.f32.gmra.mxu0 %v129
  %v967 = vpop.f32.mrf.mxu0
  %v968 = vadd.f32 0.0, %v967
  %969 = vmatmul.f32.gmra.mxu0 %v132
  %v970 = vpop.f32.mrf.mxu0
  %v971 = vadd.f32 0.0, %v970
  %972 = vmatmul.f32.gmra.mxu0 %v135
  %v973 = vpop.f32.mrf.mxu0
  %v974 = vadd.f32 0.0, %v973
  %975 = vmatmul.f32.gmra.mxu0 %v138
  %v976 = vpop.f32.mrf.mxu0
  %v977 = vadd.f32 0.0, %v976
  %978 = vmatmul.f32.gmra.mxu0 %v141
  %v979 = vpop.f32.mrf.mxu0
  %v980 = vadd.f32 0.0, %v979
  %981 = vmatmul.f32.gmra.mxu0 %v144
  %v982 = vpop.f32.mrf.mxu0
  %v983 = vadd.f32 0.0, %v982
  %984 = vmatmul.f32.gmra.mxu0 %v147
  %v985 = vpop.f32.mrf.mxu0
  %v986 = vadd.f32 0.0, %v985
  %987 = vmatmul.f32.gmra.mxu0 %v150
  %v988 = vpop.f32.mrf.mxu0
  %v989 = vadd.f32 0.0, %v988
  %990 = vmatmul.f32.gmra.mxu0 %v153
  %v991 = vpop.f32.mrf.mxu0
  %v992 = vadd.f32 0.0, %v991
  %993 = vmatmul.f32.gmra.mxu0 %v156
  %v994 = vpop.f32.mrf.mxu0
  %v995 = vadd.f32 0.0, %v994
  %996 = vmatmul.f32.gmra.mxu0 %v159
  %v997 = vpop.f32.mrf.mxu0
  %v998 = vadd.f32 0.0, %v997
  %999 = vmatmul.f32.gmra.mxu0 %v162
  %v1000 = vpop.f32.mrf.mxu0
  %v1001 = vadd.f32 0.0, %v1000
  %1002 = vmatmul.f32.gmra.mxu0 %v165
  %v1003 = vpop.f32.mrf.mxu0
  %v1004 = vadd.f32 0.0, %v1003
  %1005 = vmatmul.f32.gmra.mxu0 %v168
  %v1006 = vpop.f32.mrf.mxu0
  %v1007 = vadd.f32 0.0, %v1006
  %1008 = vmatmul.f32.gmra.mxu0 %v171
  %v1009 = vpop.f32.mrf.mxu0
  %v1010 = vadd.f32 0.0, %v1009
  %1011 = vmatmul.f32.gmra.mxu0 %v174
  %v1012 = vpop.f32.mrf.mxu0
  %v1013 = vadd.f32 0.0, %v1012
  %1014 = vmatmul.f32.gmra.mxu0 %v177
  %v1015 = vpop.f32.mrf.mxu0
  %v1016 = vadd.f32 0.0, %v1015
  %1017 = vmatmul.f32.gmra.mxu0 %v180
  %v1018 = vpop.f32.mrf.mxu0
  %v1019 = vadd.f32 0.0, %v1018
  %1020 = vmatmul.f32.gmra.mxu0 %v183
  %v1021 = vpop.f32.mrf.mxu0
  %v1022 = vadd.f32 0.0, %v1021
  %1023 = vmatmul.f32.gmra.mxu0 %v186
  %v1024 = vpop.f32.mrf.mxu0
  %v1025 = vadd.f32 0.0, %v1024
  %1026 = vmatmul.f32.gmra.mxu0 %v189
  %v1027 = vpop.f32.mrf.mxu0
  %v1028 = vadd.f32 0.0, %v1027
  %1029 = vmatmul.f32.gmra.mxu0 %v192
  %v1030 = vpop.f32.mrf.mxu0
  %v1031 = vadd.f32 0.0, %v1030
  %1032 = vdwg.mxu0
  %1033 = vmatpush.msra.mxu0 0.0
  %1034 = vmatpush.msra.mxu0 0.0
  %1035 = vmatpush.msra.mxu0 0.0
  %1036 = vmatpush.msra.mxu0 0.0
  %1037 = vmatpush.msra.mxu0 0.0
  %1038 = vmatpush.msra.mxu0 0.0
  %1039 = vmatpush.msra.mxu0 0.0
  %1040 = vmatpush.msra.mxu0 0.0
  %1041 = vmatpush.msra.mxu0 0.0
  %1042 = vmatpush.msra.mxu0 0.0
  %1043 = vmatpush.msra.mxu0 0.0
  %1044 = vmatpush.msra.mxu0 0.0
  %1045 = vmatpush.msra.mxu0 %v220
  %1046 = vmatpush.msra.mxu0 %v97
  %1047 = vmatpush.msra.mxu0 %v87
  %1048 = vmatpush.msra.mxu0 %v77
  %1049 = vmatmul.f32.gmra.mxu0 %v111
  %v1050 = vpop.f32.mrf.mxu0
  %v1051 = vadd.f32 0.0, %v1050
  %1052 = vmatmul.f32.gmra.mxu0 %v114
  %v1053 = vpop.f32.mrf.mxu0
  %v1054 = vadd.f32 0.0, %v1053
  %1055 = vmatmul.f32.gmra.mxu0 %v117
  %v1056 = vpop.f32.mrf.mxu0
  %v1057 = vadd.f32 0.0, %v1056
  %1058 = vmatmul.f32.gmra.mxu0 %v120
  %v1059 = vpop.f32.mrf.mxu0
  %v1060 = vadd.f32 0.0, %v1059
  %1061 = vmatmul.f32.gmra.mxu0 %v123
  %v1062 = vpop.f32.mrf.mxu0
  %v1063 = vadd.f32 0.0, %v1062
  %1064 = vmatmul.f32.gmra.mxu0 %v126
  %v1065 = vpop.f32.mrf.mxu0
  %v1066 = vadd.f32 0.0, %v1065
  %1067 = vmatmul.f32.gmra.mxu0 %v129
  %v1068 = vpop.f32.mrf.mxu0
  %v1069 = vadd.f32 0.0, %v1068
  %1070 = vmatmul.f32.gmra.mxu0 %v132
  %v1071 = vpop.f32.mrf.mxu0
  %v1072 = vadd.f32 0.0, %v1071
  %1073 = vmatmul.f32.gmra.mxu0 %v135
  %v1074 = vpop.f32.mrf.mxu0
  %v1075 = vadd.f32 0.0, %v1074
  %1076 = vmatmul.f32.gmra.mxu0 %v138
  %v1077 = vpop.f32.mrf.mxu0
  %v1078 = vadd.f32 0.0, %v1077
  %1079 = vmatmul.f32.gmra.mxu0 %v141
  %v1080 = vpop.f32.mrf.mxu0
  %v1081 = vadd.f32 0.0, %v1080
  %1082 = vmatmul.f32.gmra.mxu0 %v144
  %v1083 = vpop.f32.mrf.mxu0
  %v1084 = vadd.f32 0.0, %v1083
  %1085 = vmatmul.f32.gmra.mxu0 %v147
  %v1086 = vpop.f32.mrf.mxu0
  %v1087 = vadd.f32 0.0, %v1086
  %1088 = vmatmul.f32.gmra.mxu0 %v150
  %v1089 = vpop.f32.mrf.mxu0
  %v1090 = vadd.f32 0.0, %v1089
  %1091 = vmatmul.f32.gmra.mxu0 %v153
  %v1092 = vpop.f32.mrf.mxu0
  %v1093 = vadd.f32 0.0, %v1092
  %1094 = vmatmul.f32.gmra.mxu0 %v156
  %v1095 = vpop.f32.mrf.mxu0
  %v1096 = vadd.f32 0.0, %v1095
  %1097 = vmatmul.f32.gmra.mxu0 %v159
  %v1098 = vpop.f32.mrf.mxu0
  %v1099 = vadd.f32 0.0, %v1098
  %1100 = vmatmul.f32.gmra.mxu0 %v162
  %v1101 = vpop.f32.mrf.mxu0
  %v1102 = vadd.f32 0.0, %v1101
  %1103 = vmatmul.f32.gmra.mxu0 %v165
  %v1104 = vpop.f32.mrf.mxu0
  %v1105 = vadd.f32 0.0, %v1104
  %1106 = vmatmul.f32.gmra.mxu0 %v168
  %v1107 = vpop.f32.mrf.mxu0
  %v1108 = vadd.f32 0.0, %v1107
  %1109 = vmatmul.f32.gmra.mxu0 %v171
  %v1110 = vpop.f32.mrf.mxu0
  %v1111 = vadd.f32 0.0, %v1110
  %1112 = vmatmul.f32.gmra.mxu0 %v174
  %v1113 = vpop.f32.mrf.mxu0
  %v1114 = vadd.f32 0.0, %v1113
  %1115 = vmatmul.f32.gmra.mxu0 %v177
  %v1116 = vpop.f32.mrf.mxu0
  %v1117 = vadd.f32 0.0, %v1116
  %1118 = vmatmul.f32.gmra.mxu0 %v180
  %v1119 = vpop.f32.mrf.mxu0
  %v1120 = vadd.f32 0.0, %v1119
  %1121 = vmatmul.f32.gmra.mxu0 %v183
  %v1122 = vpop.f32.mrf.mxu0
  %v1123 = vadd.f32 0.0, %v1122
  %1124 = vmatmul.f32.gmra.mxu0 %v186
  %v1125 = vpop.f32.mrf.mxu0
  %v1126 = vadd.f32 0.0, %v1125
  %1127 = vmatmul.f32.gmra.mxu0 %v189
  %v1128 = vpop.f32.mrf.mxu0
  %v1129 = vadd.f32 0.0, %v1128
  %1130 = vmatmul.f32.gmra.mxu0 %v192
  %v1131 = vpop.f32.mrf.mxu0
  %v1132 = vadd.f32 0.0, %v1131
  %1133 = vdwg.mxu0
  %1134 = vmatpush.msra.mxu0 0.0
  %1135 = vmatpush.msra.mxu0 0.0
  %1136 = vmatpush.msra.mxu0 0.0
  %1137 = vmatpush.msra.mxu0 0.0
  %1138 = vmatpush.msra.mxu0 0.0
  %1139 = vmatpush.msra.mxu0 0.0
  %1140 = vmatpush.msra.mxu0 0.0
  %1141 = vmatpush.msra.mxu0 0.0
  %1142 = vmatpush.msra.mxu0 0.0
  %1143 = vmatpush.msra.mxu0 0.0
  %1144 = vmatpush.msra.mxu0 0.0
  %1145 = vmatpush.msra.mxu0 0.0
  %1146 = vmatpush.msra.mxu0 %v223
  %1147 = vmatpush.msra.mxu0 %v98
  %1148 = vmatpush.msra.mxu0 %v88
  %1149 = vmatpush.msra.mxu0 %v78
  %1150 = vmatmul.f32.gmra.mxu0 %v111
  %v1151 = vpop.f32.mrf.mxu0
  %v1152 = vadd.f32 0.0, %v1151
  %1153 = vmatmul.f32.gmra.mxu0 %v114
  %v1154 = vpop.f32.mrf.mxu0
  %v1155 = vadd.f32 0.0, %v1154
  %1156 = vmatmul.f32.gmra.mxu0 %v117
  %v1157 = vpop.f32.mrf.mxu0
  %v1158 = vadd.f32 0.0, %v1157
  %1159 = vmatmul.f32.gmra.mxu0 %v120
  %v1160 = vpop.f32.mrf.mxu0
  %v1161 = vadd.f32 0.0, %v1160
  %1162 = vmatmul.f32.gmra.mxu0 %v123
  %v1163 = vpop.f32.mrf.mxu0
  %v1164 = vadd.f32 0.0, %v1163
  %1165 = vmatmul.f32.gmra.mxu0 %v126
  %v1166 = vpop.f32.mrf.mxu0
  %v1167 = vadd.f32 0.0, %v1166
  %1168 = vmatmul.f32.gmra.mxu0 %v129
  %v1169 = vpop.f32.mrf.mxu0
  %v1170 = vadd.f32 0.0, %v1169
  %1171 = vmatmul.f32.gmra.mxu0 %v132
  %v1172 = vpop.f32.mrf.mxu0
  %v1173 = vadd.f32 0.0, %v1172
  %1174 = vmatmul.f32.gmra.mxu0 %v135
  %v1175 = vpop.f32.mrf.mxu0
  %v1176 = vadd.f32 0.0, %v1175
  %1177 = vmatmul.f32.gmra.mxu0 %v138
  %v1178 = vpop.f32.mrf.mxu0
  %v1179 = vadd.f32 0.0, %v1178
  %1180 = vmatmul.f32.gmra.mxu0 %v141
  %v1181 = vpop.f32.mrf.mxu0
  %v1182 = vadd.f32 0.0, %v1181
  %1183 = vmatmul.f32.gmra.mxu0 %v144
  %v1184 = vpop.f32.mrf.mxu0
  %v1185 = vadd.f32 0.0, %v1184
  %1186 = vmatmul.f32.gmra.mxu0 %v147
  %v1187 = vpop.f32.mrf.mxu0
  %v1188 = vadd.f32 0.0, %v1187
  %1189 = vmatmul.f32.gmra.mxu0 %v150
  %v1190 = vpop.f32.mrf.mxu0
  %v1191 = vadd.f32 0.0, %v1190
  %1192 = vmatmul.f32.gmra.mxu0 %v153
  %v1193 = vpop.f32.mrf.mxu0
  %v1194 = vadd.f32 0.0, %v1193
  %1195 = vmatmul.f32.gmra.mxu0 %v156
  %v1196 = vpop.f32.mrf.mxu0
  %v1197 = vadd.f32 0.0, %v1196
  %1198 = vmatmul.f32.gmra.mxu0 %v159
  %v1199 = vpop.f32.mrf.mxu0
  %v1200 = vadd.f32 0.0, %v1199
  %1201 = vmatmul.f32.gmra.mxu0 %v162
  %v1202 = vpop.f32.mrf.mxu0
  %v1203 = vadd.f32 0.0, %v1202
  %1204 = vmatmul.f32.gmra.mxu0 %v165
  %v1205 = vpop.f32.mrf.mxu0
  %v1206 = vadd.f32 0.0, %v1205
  %1207 = vmatmul.f32.gmra.mxu0 %v168
  %v1208 = vpop.f32.mrf.mxu0
  %v1209 = vadd.f32 0.0, %v1208
  %1210 = vmatmul.f32.gmra.mxu0 %v171
  %v1211 = vpop.f32.mrf.mxu0
  %v1212 = vadd.f32 0.0, %v1211
  %1213 = vmatmul.f32.gmra.mxu0 %v174
  %v1214 = vpop.f32.mrf.mxu0
  %v1215 = vadd.f32 0.0, %v1214
  %1216 = vmatmul.f32.gmra.mxu0 %v177
  %v1217 = vpop.f32.mrf.mxu0
  %v1218 = vadd.f32 0.0, %v1217
  %1219 = vmatmul.f32.gmra.mxu0 %v180
  %v1220 = vpop.f32.mrf.mxu0
  %v1221 = vadd.f32 0.0, %v1220
  %1222 = vmatmul.f32.gmra.mxu0 %v183
  %v1223 = vpop.f32.mrf.mxu0
  %v1224 = vadd.f32 0.0, %v1223
  %1225 = vmatmul.f32.gmra.mxu0 %v186
  %v1226 = vpop.f32.mrf.mxu0
  %v1227 = vadd.f32 0.0, %v1226
  %1228 = vmatmul.f32.gmra.mxu0 %v189
  %v1229 = vpop.f32.mrf.mxu0
  %v1230 = vadd.f32 0.0, %v1229
  %1231 = vmatmul.f32.gmra.mxu0 %v192
  %v1232 = vpop.f32.mrf.mxu0
  %v1233 = vadd.f32 0.0, %v1232
  %1234 = vdwg.mxu0
  %v1235 = vld [vmem:[%s2] sm:$0xff]
  %v1236 = vld [vmem:[%s2 + $0x8] sm:$0xff]
  %v1237 = vld [vmem:[%s2 + $0x10] sm:$0xff]
  %v1238 = vld [vmem:[%s2 + $0x18] sm:$0xff]
  %v1239 = vld [vmem:[%s2 + $0x20] sm:$0xff]
  %v1240 = vld [vmem:[%s2 + $0x28] sm:$0xff]
  %v1241 = vld [vmem:[%s2 + $0x30] sm:$0xff]
  %v1242 = vld [vmem:[%s2 + $0x38] sm:$0xff]
  %v1243 = vld [vmem:[%s2 + $0x40] sm:$0xff]
  %v1244 = vld [vmem:[%s2 + $0x48] sm:$0xff]
  %v1245 = vld [vmem:[%s2 + $0x50] sm:$0xff]
  %v1246 = vld [vmem:[%s2 + $0x58] sm:$0xff]
  %v1247 = vld [vmem:[%s2 + $0x60] sm:$0xff]
  %v1248 = vld [vmem:[%s2 + $0x68] sm:$0xff]
  %v1249 = vld [vmem:[%s2 + $0x70] sm:$0xff]
  %v1250 = vld [vmem:[%s2 + $0x78] sm:$0xff]
  %v1251 = vld [vmem:[%s2 + $0x80] sm:$0xff]
  %v1252 = vld [vmem:[%s2 + $0x88] sm:$0xff]
  %v1253 = vld [vmem:[%s2 + $0x90] sm:$0xff]
  %v1254 = vld [vmem:[%s2 + $0x98] sm:$0xff]
  %v1255 = vld [vmem:[%s2 + $0xa0] sm:$0xff]
  %v1256 = vld [vmem:[%s2 + $0xa8] sm:$0xff]
  %v1257 = vld [vmem:[%s2 + $0xb0] sm:$0xff]
  %v1258 = vld [vmem:[%s2 + $0xb8] sm:$0xff]
  %s1259 = scalar_lea.vmem %s2, 192
  %v1260 = vld [vmem:[%s1259] sm:$0xff]
  %v1261 = vld [vmem:[%s1259 + $0x8] sm:$0xff]
  %v1262 = vld [vmem:[%s1259 + $0x10] sm:$0xff]
  %v1263 = vld [vmem:[%s1259 + $0x18] sm:$0xff]
  %v1264 = vld [vmem:[%s1259 + $0x20] sm:$0xff]
  %v1265 = vld [vmem:[%s1259 + $0x28] sm:$0xff]
  %v1266 = vld [vmem:[%s1259 + $0x30] sm:$0xff]
  %v1267 = vld [vmem:[%s1259 + $0x38] sm:$0xff]
  %v1268 = vld [vmem:[%s1259 + $0x40] sm:$0xff]
  %v1269 = vld [vmem:[%s1259 + $0x48] sm:$0xff]
  %v1270 = vld [vmem:[%s1259 + $0x50] sm:$0xff]
  %v1271 = vld [vmem:[%s1259 + $0x58] sm:$0xff]
  %v1272 = vld [vmem:[%s1259 + $0x60] sm:$0xff]
  %v1273 = vld [vmem:[%s1259 + $0x68] sm:$0xff]
  %v1274 = vld [vmem:[%s1259 + $0x70] sm:$0xff]
  %v1275 = vld [vmem:[%s1259 + $0x78] sm:$0xff]
  %v1276 = vld [vmem:[%s1259 + $0x80] sm:$0xff]
  %v1277 = vld [vmem:[%s1259 + $0x88] sm:$0xff]
  %v1278 = vld [vmem:[%s1259 + $0x90] sm:$0xff]
  %v1279 = vld [vmem:[%s1259 + $0x98] sm:$0xff]
  %v1280 = vld [vmem:[%s1259 + $0xa0] sm:$0xff]
  %v1281 = vld [vmem:[%s1259 + $0xa8] sm:$0xff]
  %v1282 = vld [vmem:[%s1259 + $0xb0] sm:$0xff]
  %v1283 = vld [vmem:[%s1259 + $0xb8] sm:$0xff]
  %vm1284 = vcmask 785408
  %v1286 = vsel %vm1284, %v1261, 0
  %v1289 = vsel %vm1284, %v1263, 0
  %v1292 = vsel %vm1284, %v1265, 0
  %v1295 = vsel %vm1284, %v1267, 0
  %v1298 = vsel %vm1284, %v1269, 0
  %v1301 = vsel %vm1284, %v1271, 0
  %v1304 = vsel %vm1284, %v1273, 0
  %v1307 = vsel %vm1284, %v1275, 0
  %v1310 = vsel %vm1284, %v1277, 0
  %v1313 = vsel %vm1284, %v1279, 0
  %v1316 = vsel %vm1284, %v1281, 0
  %v1319 = vsel %vm1284, %v1283, 0
  %1321 = vmatpush.msra.mxu0 %v490
  %1322 = vmatpush.msra.mxu0 %v487
  %1323 = vmatpush.msra.mxu0 %v484
  %1324 = vmatpush.msra.mxu0 %v481
  %1325 = vmatpush.msra.mxu0 %v478
  %1326 = vmatpush.msra.mxu0 %v475
  %1327 = vmatpush.msra.mxu0 %v472
  %1328 = vmatpush.msra.mxu0 %v469
  %1329 = vmatpush.msra.mxu0 %v466
  %1330 = vmatpush.msra.mxu0 %v463
  %1331 = vmatpush.msra.mxu0 %v460
  %1332 = vmatpush.msra.mxu0 %v457
  %1333 = vmatpush.msra.mxu0 %v454
  %1334 = vmatpush.msra.mxu0 %v451
  %1335 = vmatpush.msra.mxu0 %v448
  %1336 = vmatpush.msra.mxu0 %v445
  %1337 = vmatmul.f32.gmra.mxu0 %v1260
  %v1338 = vpop.f32.mrf.mxu0
  %v1339 = vadd.f32 0.0, %v1338
  %1340 = vmatmul.f32.gmra.mxu0 %v1262
  %v1341 = vpop.f32.mrf.mxu0
  %v1342 = vadd.f32 0.0, %v1341
  %1343 = vmatmul.f32.gmra.mxu0 %v1264
  %v1344 = vpop.f32.mrf.mxu0
  %v1345 = vadd.f32 0.0, %v1344
  %1346 = vmatmul.f32.gmra.mxu0 %v1266
  %v1347 = vpop.f32.mrf.mxu0
  %v1348 = vadd.f32 0.0, %v1347
  %1349 = vmatmul.f32.gmra.mxu0 %v1268
  %v1350 = vpop.f32.mrf.mxu0
  %v1351 = vadd.f32 0.0, %v1350
  %1352 = vmatmul.f32.gmra.mxu0 %v1270
  %v1353 = vpop.f32.mrf.mxu0
  %v1354 = vadd.f32 0.0, %v1353
  %1355 = vmatmul.f32.gmra.mxu0 %v1272
  %v1356 = vpop.f32.mrf.mxu0
  %v1357 = vadd.f32 0.0, %v1356
  %1358 = vmatmul.f32.gmra.mxu0 %v1274
  %v1359 = vpop.f32.mrf.mxu0
  %v1360 = vadd.f32 0.0, %v1359
  %1361 = vmatmul.f32.gmra.mxu0 %v1276
  %v1362 = vpop.f32.mrf.mxu0
  %v1363 = vadd.f32 0.0, %v1362
  %1364 = vmatmul.f32.gmra.mxu0 %v1278
  %v1365 = vpop.f32.mrf.mxu0
  %v1366 = vadd.f32 0.0, %v1365
  %1367 = vmatmul.f32.gmra.mxu0 %v1280
  %v1368 = vpop.f32.mrf.mxu0
  %v1369 = vadd.f32 0.0, %v1368
  %1370 = vmatmul.f32.gmra.mxu0 %v1282
  %v1371 = vpop.f32.mrf.mxu0
  %v1372 = vadd.f32 0.0, %v1371
  %1373 = vdwg.mxu0
  %1374 = vmatpush.msra.mxu0 0.0
  %1375 = vmatpush.msra.mxu0 0.0
  %1376 = vmatpush.msra.mxu0 0.0
  %1377 = vmatpush.msra.mxu0 0.0
  %1378 = vmatpush.msra.mxu0 %v526
  %1379 = vmatpush.msra.mxu0 %v523
  %1380 = vmatpush.msra.mxu0 %v520
  %1381 = vmatpush.msra.mxu0 %v517
  %1382 = vmatpush.msra.mxu0 %v514
  %1383 = vmatpush.msra.mxu0 %v511
  %1384 = vmatpush.msra.mxu0 %v508
  %1385 = vmatpush.msra.mxu0 %v505
  %1386 = vmatpush.msra.mxu0 %v502
  %1387 = vmatpush.msra.mxu0 %v499
  %1388 = vmatpush.msra.mxu0 %v496
  %1389 = vmatpush.msra.mxu0 %v493
  %1390 = vmatmul.f32.gmra.mxu0 %v1286
  %v1391 = vpop.f32.mrf.mxu0
  %v1392 = vadd.f32 %v1339, %v1391
  %1393 = vmatmul.f32.gmra.mxu0 %v1289
  %v1394 = vpop.f32.mrf.mxu0
  %v1395 = vadd.f32 %v1342, %v1394
  %1396 = vmatmul.f32.gmra.mxu0 %v1292
  %v1397 = vpop.f32.mrf.mxu0
  %v1398 = vadd.f32 %v1345, %v1397
  %1399 = vmatmul.f32.gmra.mxu0 %v1295
  %v1400 = vpop.f32.mrf.mxu0
  %v1401 = vadd.f32 %v1348, %v1400
  %1402 = vmatmul.f32.gmra.mxu0 %v1298
  %v1403 = vpop.f32.mrf.mxu0
  %v1404 = vadd.f32 %v1351, %v1403
  %1405 = vmatmul.f32.gmra.mxu0 %v1301
  %v1406 = vpop.f32.mrf.mxu0
  %v1407 = vadd.f32 %v1354, %v1406
  %1408 = vmatmul.f32.gmra.mxu0 %v1304
  %v1409 = vpop.f32.mrf.mxu0
  %v1410 = vadd.f32 %v1357, %v1409
  %1411 = vmatmul.f32.gmra.mxu0 %v1307
  %v1412 = vpop.f32.mrf.mxu0
  %v1413 = vadd.f32 %v1360, %v1412
  %1414 = vmatmul.f32.gmra.mxu0 %v1310
  %v1415 = vpop.f32.mrf.mxu0
  %v1416 = vadd.f32 %v1363, %v1415
  %1417 = vmatmul.f32.gmra.mxu0 %v1313
  %v1418 = vpop.f32.mrf.mxu0
  %v1419 = vadd.f32 %v1366, %v1418
  %1420 = vmatmul.f32.gmra.mxu0 %v1316
  %v1421 = vpop.f32.mrf.mxu0
  %v1422 = vadd.f32 %v1369, %v1421
  %1423 = vmatmul.f32.gmra.mxu0 %v1319
  %v1424 = vpop.f32.mrf.mxu0
  %v1425 = vadd.f32 %v1372, %v1424
  %1426 = vdwg.mxu0
  %1427 = vmatpush.msra.mxu0 %v591
  %1428 = vmatpush.msra.mxu0 %v588
  %1429 = vmatpush.msra.mxu0 %v585
  %1430 = vmatpush.msra.mxu0 %v582
  %1431 = vmatpush.msra.mxu0 %v579
  %1432 = vmatpush.msra.mxu0 %v576
  %1433 = vmatpush.msra.mxu0 %v573
  %1434 = vmatpush.msra.mxu0 %v570
  %1435 = vmatpush.msra.mxu0 %v567
  %1436 = vmatpush.msra.mxu0 %v564
  %1437 = vmatpush.msra.mxu0 %v561
  %1438 = vmatpush.msra.mxu0 %v558
  %1439 = vmatpush.msra.mxu0 %v555
  %1440 = vmatpush.msra.mxu0 %v552
  %1441 = vmatpush.msra.mxu0 %v549
  %1442 = vmatpush.msra.mxu0 %v546
  %1443 = vmatmul.f32.gmra.mxu0 %v1260
  %v1444 = vpop.f32.mrf.mxu0
  %v1445 = vadd.f32 0.0, %v1444
  %1446 = vmatmul.f32.gmra.mxu0 %v1262
  %v1447 = vpop.f32.mrf.mxu0
  %v1448 = vadd.f32 0.0, %v1447
  %1449 = vmatmul.f32.gmra.mxu0 %v1264
  %v1450 = vpop.f32.mrf.mxu0
  %v1451 = vadd.f32 0.0, %v1450
  %1452 = vmatmul.f32.gmra.mxu0 %v1266
  %v1453 = vpop.f32.mrf.mxu0
  %v1454 = vadd.f32 0.0, %v1453
  %1455 = vmatmul.f32.gmra.mxu0 %v1268
  %v1456 = vpop.f32.mrf.mxu0
  %v1457 = vadd.f32 0.0, %v1456
  %1458 = vmatmul.f32.gmra.mxu0 %v1270
  %v1459 = vpop.f32.mrf.mxu0
  %v1460 = vadd.f32 0.0, %v1459
  %1461 = vmatmul.f32.gmra.mxu0 %v1272
  %v1462 = vpop.f32.mrf.mxu0
  %v1463 = vadd.f32 0.0, %v1462
  %1464 = vmatmul.f32.gmra.mxu0 %v1274
  %v1465 = vpop.f32.mrf.mxu0
  %v1466 = vadd.f32 0.0, %v1465
  %1467 = vmatmul.f32.gmra.mxu0 %v1276
  %v1468 = vpop.f32.mrf.mxu0
  %v1469 = vadd.f32 0.0, %v1468
  %1470 = vmatmul.f32.gmra.mxu0 %v1278
  %v1471 = vpop.f32.mrf.mxu0
  %v1472 = vadd.f32 0.0, %v1471
  %1473 = vmatmul.f32.gmra.mxu0 %v1280
  %v1474 = vpop.f32.mrf.mxu0
  %v1475 = vadd.f32 0.0, %v1474
  %1476 = vmatmul.f32.gmra.mxu0 %v1282
  %v1477 = vpop.f32.mrf.mxu0
  %v1478 = vadd.f32 0.0, %v1477
  %1479 = vdwg.mxu0
  %1480 = vmatpush.msra.mxu0 0.0
  %1481 = vmatpush.msra.mxu0 0.0
  %1482 = vmatpush.msra.mxu0 0.0
  %1483 = vmatpush.msra.mxu0 0.0
  %1484 = vmatpush.msra.mxu0 %v627
  %1485 = vmatpush.msra.mxu0 %v624
  %1486 = vmatpush.msra.mxu0 %v621
  %1487 = vmatpush.msra.mxu0 %v618
  %1488 = vmatpush.msra.mxu0 %v615
  %1489 = vmatpush.msra.mxu0 %v612
  %1490 = vmatpush.msra.mxu0 %v609
  %1491 = vmatpush.msra.mxu0 %v606
  %1492 = vmatpush.msra.mxu0 %v603
  %1493 = vmatpush.msra.mxu0 %v600
  %1494 = vmatpush.msra.mxu0 %v597
  %1495 = vmatpush.msra.mxu0 %v594
  %1496 = vmatmul.f32.gmra.mxu0 %v1286
  %v1497 = vpop.f32.mrf.mxu0
  %v1498 = vadd.f32 %v1445, %v1497
  %1499 = vmatmul.f32.gmra.mxu0 %v1289
  %v1500 = vpop.f32.mrf.mxu0
  %v1501 = vadd.f32 %v1448, %v1500
  %1502 = vmatmul.f32.gmra.mxu0 %v1292
  %v1503 = vpop.f32.mrf.mxu0
  %v1504 = vadd.f32 %v1451, %v1503
  %1505 = vmatmul.f32.gmra.mxu0 %v1295
  %v1506 = vpop.f32.mrf.mxu0
  %v1507 = vadd.f32 %v1454, %v1506
  %1508 = vmatmul.f32.gmra.mxu0 %v1298
  %v1509 = vpop.f32.mrf.mxu0
  %v1510 = vadd.f32 %v1457, %v1509
  %1511 = vmatmul.f32.gmra.mxu0 %v1301
  %v1512 = vpop.f32.mrf.mxu0
  %v1513 = vadd.f32 %v1460, %v1512
  %1514 = vmatmul.f32.gmra.mxu0 %v1304
  %v1515 = vpop.f32.mrf.mxu0
  %v1516 = vadd.f32 %v1463, %v1515
  %1517 = vmatmul.f32.gmra.mxu0 %v1307
  %v1518 = vpop.f32.mrf.mxu0
  %v1519 = vadd.f32 %v1466, %v1518
  %1520 = vmatmul.f32.gmra.mxu0 %v1310
  %v1521 = vpop.f32.mrf.mxu0
  %v1522 = vadd.f32 %v1469, %v1521
  %1523 = vmatmul.f32.gmra.mxu0 %v1313
  %v1524 = vpop.f32.mrf.mxu0
  %v1525 = vadd.f32 %v1472, %v1524
  %1526 = vmatmul.f32.gmra.mxu0 %v1316
  %v1527 = vpop.f32.mrf.mxu0
  %v1528 = vadd.f32 %v1475, %v1527
  %1529 = vmatmul.f32.gmra.mxu0 %v1319
  %v1530 = vpop.f32.mrf.mxu0
  %v1531 = vadd.f32 %v1478, %v1530
  %1532 = vdwg.mxu0
  %v1534 = vsel %vm1284, %v1236, 0
  %v1537 = vsel %vm1284, %v1238, 0
  %v1540 = vsel %vm1284, %v1240, 0
  %v1543 = vsel %vm1284, %v1242, 0
  %v1546 = vsel %vm1284, %v1244, 0
  %v1549 = vsel %vm1284, %v1246, 0
  %v1552 = vsel %vm1284, %v1248, 0
  %v1555 = vsel %vm1284, %v1250, 0
  %v1558 = vsel %vm1284, %v1252, 0
  %v1561 = vsel %vm1284, %v1254, 0
  %v1564 = vsel %vm1284, %v1256, 0
  %v1567 = vsel %vm1284, %v1258, 0
  %1569 = vmatpush.msra.mxu0 %v288
  %1570 = vmatpush.msra.mxu0 %v285
  %1571 = vmatpush.msra.mxu0 %v282
  %1572 = vmatpush.msra.mxu0 %v279
  %1573 = vmatpush.msra.mxu0 %v276
  %1574 = vmatpush.msra.mxu0 %v273
  %1575 = vmatpush.msra.mxu0 %v270
  %1576 = vmatpush.msra.mxu0 %v267
  %1577 = vmatpush.msra.mxu0 %v264
  %1578 = vmatpush.msra.mxu0 %v261
  %1579 = vmatpush.msra.mxu0 %v258
  %1580 = vmatpush.msra.mxu0 %v255
  %1581 = vmatpush.msra.mxu0 %v252
  %1582 = vmatpush.msra.mxu0 %v249
  %1583 = vmatpush.msra.mxu0 %v246
  %1584 = vmatpush.msra.mxu0 %v243
  %1585 = vmatmul.f32.gmra.mxu0 %v1235
  %v1586 = vpop.f32.mrf.mxu0
  %v1587 = vadd.f32 %v1392, %v1586
  %1588 = vmatmul.f32.gmra.mxu0 %v1237
  %v1589 = vpop.f32.mrf.mxu0
  %v1590 = vadd.f32 %v1395, %v1589
  %1591 = vmatmul.f32.gmra.mxu0 %v1239
  %v1592 = vpop.f32.mrf.mxu0
  %v1593 = vadd.f32 %v1398, %v1592
  %1594 = vmatmul.f32.gmra.mxu0 %v1241
  %v1595 = vpop.f32.mrf.mxu0
  %v1596 = vadd.f32 %v1401, %v1595
  %1597 = vmatmul.f32.gmra.mxu0 %v1243
  %v1598 = vpop.f32.mrf.mxu0
  %v1599 = vadd.f32 %v1404, %v1598
  %1600 = vmatmul.f32.gmra.mxu0 %v1245
  %v1601 = vpop.f32.mrf.mxu0
  %v1602 = vadd.f32 %v1407, %v1601
  %1603 = vmatmul.f32.gmra.mxu0 %v1247
  %v1604 = vpop.f32.mrf.mxu0
  %v1605 = vadd.f32 %v1410, %v1604
  %1606 = vmatmul.f32.gmra.mxu0 %v1249
  %v1607 = vpop.f32.mrf.mxu0
  %v1608 = vadd.f32 %v1413, %v1607
  %1609 = vmatmul.f32.gmra.mxu0 %v1251
  %v1610 = vpop.f32.mrf.mxu0
  %v1611 = vadd.f32 %v1416, %v1610
  %1612 = vmatmul.f32.gmra.mxu0 %v1253
  %v1613 = vpop.f32.mrf.mxu0
  %v1614 = vadd.f32 %v1419, %v1613
  %1615 = vmatmul.f32.gmra.mxu0 %v1255
  %v1616 = vpop.f32.mrf.mxu0
  %v1617 = vadd.f32 %v1422, %v1616
  %1618 = vmatmul.f32.gmra.mxu0 %v1257
  %v1619 = vpop.f32.mrf.mxu0
  %v1620 = vadd.f32 %v1425, %v1619
  %1621 = vdwg.mxu0
  %1622 = vmatpush.msra.mxu0 0.0
  %1623 = vmatpush.msra.mxu0 0.0
  %1624 = vmatpush.msra.mxu0 0.0
  %1625 = vmatpush.msra.mxu0 0.0
  %1626 = vmatpush.msra.mxu0 %v324
  %1627 = vmatpush.msra.mxu0 %v321
  %1628 = vmatpush.msra.mxu0 %v318
  %1629 = vmatpush.msra.mxu0 %v315
  %1630 = vmatpush.msra.mxu0 %v312
  %1631 = vmatpush.msra.mxu0 %v309
  %1632 = vmatpush.msra.mxu0 %v306
  %1633 = vmatpush.msra.mxu0 %v303
  %1634 = vmatpush.msra.mxu0 %v300
  %1635 = vmatpush.msra.mxu0 %v297
  %1636 = vmatpush.msra.mxu0 %v294
  %1637 = vmatpush.msra.mxu0 %v291
  %1638 = vmatmul.f32.gmra.mxu0 %v1534
  %v1639 = vpop.f32.mrf.mxu0
  %v1640 = vadd.f32 %v1587, %v1639
  %1641 = vmatmul.f32.gmra.mxu0 %v1537
  %v1642 = vpop.f32.mrf.mxu0
  %v1643 = vadd.f32 %v1590, %v1642
  %1644 = vmatmul.f32.gmra.mxu0 %v1540
  %v1645 = vpop.f32.mrf.mxu0
  %v1646 = vadd.f32 %v1593, %v1645
  %1647 = vmatmul.f32.gmra.mxu0 %v1543
  %v1648 = vpop.f32.mrf.mxu0
  %v1649 = vadd.f32 %v1596, %v1648
  %1650 = vmatmul.f32.gmra.mxu0 %v1546
  %v1651 = vpop.f32.mrf.mxu0
  %v1652 = vadd.f32 %v1599, %v1651
  %1653 = vmatmul.f32.gmra.mxu0 %v1549
  %v1654 = vpop.f32.mrf.mxu0
  %v1655 = vadd.f32 %v1602, %v1654
  %1656 = vmatmul.f32.gmra.mxu0 %v1552
  %v1657 = vpop.f32.mrf.mxu0
  %v1658 = vadd.f32 %v1605, %v1657
  %1659 = vmatmul.f32.gmra.mxu0 %v1555
  %v1660 = vpop.f32.mrf.mxu0
  %v1661 = vadd.f32 %v1608, %v1660
  %1662 = vmatmul.f32.gmra.mxu0 %v1558
  %v1663 = vpop.f32.mrf.mxu0
  %v1664 = vadd.f32 %v1611, %v1663
  %1665 = vmatmul.f32.gmra.mxu0 %v1561
  %v1666 = vpop.f32.mrf.mxu0
  %v1667 = vadd.f32 %v1614, %v1666
  %1668 = vmatmul.f32.gmra.mxu0 %v1564
  %v1669 = vpop.f32.mrf.mxu0
  %v1670 = vadd.f32 %v1617, %v1669
  %1671 = vmatmul.f32.gmra.mxu0 %v1567
  %v1672 = vpop.f32.mrf.mxu0
  %v1673 = vadd.f32 %v1620, %v1672
  %1674 = vdwg.mxu0
  %1675 = vmatpush.msra.mxu0 %v389
  %1676 = vmatpush.msra.mxu0 %v386
  %1677 = vmatpush.msra.mxu0 %v383
  %1678 = vmatpush.msra.mxu0 %v380
  %1679 = vmatpush.msra.mxu0 %v377
  %1680 = vmatpush.msra.mxu0 %v374
  %1681 = vmatpush.msra.mxu0 %v371
  %1682 = vmatpush.msra.mxu0 %v368
  %1683 = vmatpush.msra.mxu0 %v365
  %1684 = vmatpush.msra.mxu0 %v362
  %1685 = vmatpush.msra.mxu0 %v359
  %1686 = vmatpush.msra.mxu0 %v356
  %1687 = vmatpush.msra.mxu0 %v353
  %1688 = vmatpush.msra.mxu0 %v350
  %1689 = vmatpush.msra.mxu0 %v347
  %1690 = vmatpush.msra.mxu0 %v344
  %1691 = vmatmul.f32.gmra.mxu0 %v1235
  %v1692 = vpop.f32.mrf.mxu0
  %v1693 = vadd.f32 %v1498, %v1692
  %1694 = vmatmul.f32.gmra.mxu0 %v1237
  %v1695 = vpop.f32.mrf.mxu0
  %v1696 = vadd.f32 %v1501, %v1695
  %1697 = vmatmul.f32.gmra.mxu0 %v1239
  %v1698 = vpop.f32.mrf.mxu0
  %v1699 = vadd.f32 %v1504, %v1698
  %1700 = vmatmul.f32.gmra.mxu0 %v1241
  %v1701 = vpop.f32.mrf.mxu0
  %v1702 = vadd.f32 %v1507, %v1701
  %1703 = vmatmul.f32.gmra.mxu0 %v1243
  %v1704 = vpop.f32.mrf.mxu0
  %v1705 = vadd.f32 %v1510, %v1704
  %1706 = vmatmul.f32.gmra.mxu0 %v1245
  %v1707 = vpop.f32.mrf.mxu0
  %v1708 = vadd.f32 %v1513, %v1707
  %1709 = vmatmul.f32.gmra.mxu0 %v1247
  %v1710 = vpop.f32.mrf.mxu0
  %v1711 = vadd.f32 %v1516, %v1710
  %1712 = vmatmul.f32.gmra.mxu0 %v1249
  %v1713 = vpop.f32.mrf.mxu0
  %v1714 = vadd.f32 %v1519, %v1713
  %1715 = vmatmul.f32.gmra.mxu0 %v1251
  %v1716 = vpop.f32.mrf.mxu0
  %v1717 = vadd.f32 %v1522, %v1716
  %1718 = vmatmul.f32.gmra.mxu0 %v1253
  %v1719 = vpop.f32.mrf.mxu0
  %v1720 = vadd.f32 %v1525, %v1719
  %1721 = vmatmul.f32.gmra.mxu0 %v1255
  %v1722 = vpop.f32.mrf.mxu0
  %v1723 = vadd.f32 %v1528, %v1722
  %1724 = vmatmul.f32.gmra.mxu0 %v1257
  %v1725 = vpop.f32.mrf.mxu0
  %v1726 = vadd.f32 %v1531, %v1725
  %1727 = vdwg.mxu0
  %1728 = vmatpush.msra.mxu0 0.0
  %1729 = vmatpush.msra.mxu0 0.0
  %1730 = vmatpush.msra.mxu0 0.0
  %1731 = vmatpush.msra.mxu0 0.0
  %1732 = vmatpush.msra.mxu0 %v425
  %1733 = vmatpush.msra.mxu0 %v422
  %1734 = vmatpush.msra.mxu0 %v419
  %1735 = vmatpush.msra.mxu0 %v416
  %1736 = vmatpush.msra.mxu0 %v413
  %1737 = vmatpush.msra.mxu0 %v410
  %1738 = vmatpush.msra.mxu0 %v407
  %1739 = vmatpush.msra.mxu0 %v404
  %1740 = vmatpush.msra.mxu0 %v401
  %1741 = vmatpush.msra.mxu0 %v398
  %1742 = vmatpush.msra.mxu0 %v395
  %1743 = vmatpush.msra.mxu0 %v392
  %1744 = vmatmul.f32.gmra.mxu0 %v1534
  %v1745 = vpop.f32.mrf.mxu0
  %v1746 = vadd.f32 %v1693, %v1745
  %1747 = vmatmul.f32.gmra.mxu0 %v1537
  %v1748 = vpop.f32.mrf.mxu0
  %v1749 = vadd.f32 %v1696, %v1748
  %1750 = vmatmul.f32.gmra.mxu0 %v1540
  %v1751 = vpop.f32.mrf.mxu0
  %v1752 = vadd.f32 %v1699, %v1751
  %1753 = vmatmul.f32.gmra.mxu0 %v1543
  %v1754 = vpop.f32.mrf.mxu0
  %v1755 = vadd.f32 %v1702, %v1754
  %1756 = vmatmul.f32.gmra.mxu0 %v1546
  %v1757 = vpop.f32.mrf.mxu0
  %v1758 = vadd.f32 %v1705, %v1757
  %1759 = vmatmul.f32.gmra.mxu0 %v1549
  %v1760 = vpop.f32.mrf.mxu0
  %v1761 = vadd.f32 %v1708, %v1760
  %1762 = vmatmul.f32.gmra.mxu0 %v1552
  %v1763 = vpop.f32.mrf.mxu0
  %v1764 = vadd.f32 %v1711, %v1763
  %1765 = vmatmul.f32.gmra.mxu0 %v1555
  %v1766 = vpop.f32.mrf.mxu0
  %v1767 = vadd.f32 %v1714, %v1766
  %1768 = vmatmul.f32.gmra.mxu0 %v1558
  %v1769 = vpop.f32.mrf.mxu0
  %v1770 = vadd.f32 %v1717, %v1769
  %1771 = vmatmul.f32.gmra.mxu0 %v1561
  %v1772 = vpop.f32.mrf.mxu0
  %v1773 = vadd.f32 %v1720, %v1772
  %1774 = vmatmul.f32.gmra.mxu0 %v1564
  %v1775 = vpop.f32.mrf.mxu0
  %v1776 = vadd.f32 %v1723, %v1775
  %1777 = vmatmul.f32.gmra.mxu0 %v1567
  %v1778 = vpop.f32.mrf.mxu0
  %v1779 = vadd.f32 %v1726, %v1778
  %1780 = vdwg.mxu0
  %s1781 = scalar_lea.vmem %s2, 384
  %v1782 = vld [vmem:[%s1781] sm:$0xff]
  %v1783 = vld [vmem:[%s1781 + $0x8] sm:$0xff]
  %v1784 = vld [vmem:[%s1781 + $0x10] sm:$0xff]
  %v1785 = vld [vmem:[%s1781 + $0x18] sm:$0xff]
  %v1786 = vld [vmem:[%s1781 + $0x20] sm:$0xff]
  %v1787 = vld [vmem:[%s1781 + $0x28] sm:$0xff]
  %v1788 = vld [vmem:[%s1781 + $0x30] sm:$0xff]
  %v1789 = vld [vmem:[%s1781 + $0x38] sm:$0xff]
  %v1790 = vld [vmem:[%s1781 + $0x40] sm:$0xff]
  %v1791 = vld [vmem:[%s1781 + $0x48] sm:$0xff]
  %v1792 = vld [vmem:[%s1781 + $0x50] sm:$0xff]
  %v1793 = vld [vmem:[%s1781 + $0x58] sm:$0xff]
  %v1794 = vld [vmem:[%s1781 + $0x60] sm:$0xff]
  %v1795 = vld [vmem:[%s1781 + $0x68] sm:$0xff]
  %v1796 = vld [vmem:[%s1781 + $0x70] sm:$0xff]
  %v1797 = vld [vmem:[%s1781 + $0x78] sm:$0xff]
  %v1798 = vld [vmem:[%s1781 + $0x80] sm:$0xff]
  %v1799 = vld [vmem:[%s1781 + $0x88] sm:$0xff]
  %v1800 = vld [vmem:[%s1781 + $0x90] sm:$0xff]
  %v1801 = vld [vmem:[%s1781 + $0x98] sm:$0xff]
  %v1802 = vld [vmem:[%s1781 + $0xa0] sm:$0xff]
  %v1803 = vld [vmem:[%s1781 + $0xa8] sm:$0xff]
  %v1804 = vld [vmem:[%s1781 + $0xb0] sm:$0xff]
  %v1805 = vld [vmem:[%s1781 + $0xb8] sm:$0xff]
  %v1807 = vsel %vm1284, %v1783, 0
  %v1810 = vsel %vm1284, %v1785, 0
  %v1813 = vsel %vm1284, %v1787, 0
  %v1816 = vsel %vm1284, %v1789, 0
  %v1819 = vsel %vm1284, %v1791, 0
  %v1822 = vsel %vm1284, %v1793, 0
  %v1825 = vsel %vm1284, %v1795, 0
  %v1828 = vsel %vm1284, %v1797, 0
  %v1831 = vsel %vm1284, %v1799, 0
  %v1834 = vsel %vm1284, %v1801, 0
  %v1837 = vsel %vm1284, %v1803, 0
  %v1840 = vsel %vm1284, %v1805, 0
  %1842 = vmatpush.msra.mxu0 %v692
  %1843 = vmatpush.msra.mxu0 %v689
  %1844 = vmatpush.msra.mxu0 %v686
  %1845 = vmatpush.msra.mxu0 %v683
  %1846 = vmatpush.msra.mxu0 %v680
  %1847 = vmatpush.msra.mxu0 %v677
  %1848 = vmatpush.msra.mxu0 %v674
  %1849 = vmatpush.msra.mxu0 %v671
  %1850 = vmatpush.msra.mxu0 %v668
  %1851 = vmatpush.msra.mxu0 %v665
  %1852 = vmatpush.msra.mxu0 %v662
  %1853 = vmatpush.msra.mxu0 %v659
  %1854 = vmatpush.msra.mxu0 %v656
  %1855 = vmatpush.msra.mxu0 %v653
  %1856 = vmatpush.msra.mxu0 %v650
  %1857 = vmatpush.msra.mxu0 %v647
  %1858 = vmatmul.f32.gmra.mxu0 %v1782
  %v1859 = vpop.f32.mrf.mxu0
  %v1860 = vadd.f32 0.0, %v1859
  %1861 = vmatmul.f32.gmra.mxu0 %v1784
  %v1862 = vpop.f32.mrf.mxu0
  %v1863 = vadd.f32 0.0, %v1862
  %1864 = vmatmul.f32.gmra.mxu0 %v1786
  %v1865 = vpop.f32.mrf.mxu0
  %v1866 = vadd.f32 0.0, %v1865
  %1867 = vmatmul.f32.gmra.mxu0 %v1788
  %v1868 = vpop.f32.mrf.mxu0
  %v1869 = vadd.f32 0.0, %v1868
  %1870 = vmatmul.f32.gmra.mxu0 %v1790
  %v1871 = vpop.f32.mrf.mxu0
  %v1872 = vadd.f32 0.0, %v1871
  %1873 = vmatmul.f32.gmra.mxu0 %v1792
  %v1874 = vpop.f32.mrf.mxu0
  %v1875 = vadd.f32 0.0, %v1874
  %1876 = vmatmul.f32.gmra.mxu0 %v1794
  %v1877 = vpop.f32.mrf.mxu0
  %v1878 = vadd.f32 0.0, %v1877
  %1879 = vmatmul.f32.gmra.mxu0 %v1796
  %v1880 = vpop.f32.mrf.mxu0
  %v1881 = vadd.f32 0.0, %v1880
  %1882 = vmatmul.f32.gmra.mxu0 %v1798
  %v1883 = vpop.f32.mrf.mxu0
  %v1884 = vadd.f32 0.0, %v1883
  %1885 = vmatmul.f32.gmra.mxu0 %v1800
  %v1886 = vpop.f32.mrf.mxu0
  %v1887 = vadd.f32 0.0, %v1886
  %1888 = vmatmul.f32.gmra.mxu0 %v1802
  %v1889 = vpop.f32.mrf.mxu0
  %v1890 = vadd.f32 0.0, %v1889
  %1891 = vmatmul.f32.gmra.mxu0 %v1804
  %v1892 = vpop.f32.mrf.mxu0
  %v1893 = vadd.f32 0.0, %v1892
  %1894 = vdwg.mxu0
  %1895 = vmatpush.msra.mxu0 0.0
  %1896 = vmatpush.msra.mxu0 0.0
  %1897 = vmatpush.msra.mxu0 0.0
  %1898 = vmatpush.msra.mxu0 0.0
  %1899 = vmatpush.msra.mxu0 %v728
  %1900 = vmatpush.msra.mxu0 %v725
  %1901 = vmatpush.msra.mxu0 %v722
  %1902 = vmatpush.msra.mxu0 %v719
  %1903 = vmatpush.msra.mxu0 %v716
  %1904 = vmatpush.msra.mxu0 %v713
  %1905 = vmatpush.msra.mxu0 %v710
  %1906 = vmatpush.msra.mxu0 %v707
  %1907 = vmatpush.msra.mxu0 %v704
  %1908 = vmatpush.msra.mxu0 %v701
  %1909 = vmatpush.msra.mxu0 %v698
  %1910 = vmatpush.msra.mxu0 %v695
  %1911 = vmatmul.f32.gmra.mxu0 %v1807
  %v1912 = vpop.f32.mrf.mxu0
  %v1913 = vadd.f32 %v1860, %v1912
  %1914 = vmatmul.f32.gmra.mxu0 %v1810
  %v1915 = vpop.f32.mrf.mxu0
  %v1916 = vadd.f32 %v1863, %v1915
  %1917 = vmatmul.f32.gmra.mxu0 %v1813
  %v1918 = vpop.f32.mrf.mxu0
  %v1919 = vadd.f32 %v1866, %v1918
  %1920 = vmatmul.f32.gmra.mxu0 %v1816
  %v1921 = vpop.f32.mrf.mxu0
  %v1922 = vadd.f32 %v1869, %v1921
  %1923 = vmatmul.f32.gmra.mxu0 %v1819
  %v1924 = vpop.f32.mrf.mxu0
  %v1925 = vadd.f32 %v1872, %v1924
  %1926 = vmatmul.f32.gmra.mxu0 %v1822
  %v1927 = vpop.f32.mrf.mxu0
  %v1928 = vadd.f32 %v1875, %v1927
  %1929 = vmatmul.f32.gmra.mxu0 %v1825
  %v1930 = vpop.f32.mrf.mxu0
  %v1931 = vadd.f32 %v1878, %v1930
  %1932 = vmatmul.f32.gmra.mxu0 %v1828
  %v1933 = vpop.f32.mrf.mxu0
  %v1934 = vadd.f32 %v1881, %v1933
  %1935 = vmatmul.f32.gmra.mxu0 %v1831
  %v1936 = vpop.f32.mrf.mxu0
  %v1937 = vadd.f32 %v1884, %v1936
  %1938 = vmatmul.f32.gmra.mxu0 %v1834
  %v1939 = vpop.f32.mrf.mxu0
  %v1940 = vadd.f32 %v1887, %v1939
  %1941 = vmatmul.f32.gmra.mxu0 %v1837
  %v1942 = vpop.f32.mrf.mxu0
  %v1943 = vadd.f32 %v1890, %v1942
  %1944 = vmatmul.f32.gmra.mxu0 %v1840
  %v1945 = vpop.f32.mrf.mxu0
  %v1946 = vadd.f32 %v1893, %v1945
  %1947 = vdwg.mxu0
  %1948 = vmatpush.msra.mxu0 %v793
  %1949 = vmatpush.msra.mxu0 %v790
  %1950 = vmatpush.msra.mxu0 %v787
  %1951 = vmatpush.msra.mxu0 %v784
  %1952 = vmatpush.msra.mxu0 %v781
  %1953 = vmatpush.msra.mxu0 %v778
  %1954 = vmatpush.msra.mxu0 %v775
  %1955 = vmatpush.msra.mxu0 %v772
  %1956 = vmatpush.msra.mxu0 %v769
  %1957 = vmatpush.msra.mxu0 %v766
  %1958 = vmatpush.msra.mxu0 %v763
  %1959 = vmatpush.msra.mxu0 %v760
  %1960 = vmatpush.msra.mxu0 %v757
  %1961 = vmatpush.msra.mxu0 %v754
  %1962 = vmatpush.msra.mxu0 %v751
  %1963 = vmatpush.msra.mxu0 %v748
  %1964 = vmatmul.f32.gmra.mxu0 %v1782
  %v1965 = vpop.f32.mrf.mxu0
  %v1966 = vadd.f32 0.0, %v1965
  %1967 = vmatmul.f32.gmra.mxu0 %v1784
  %v1968 = vpop.f32.mrf.mxu0
  %v1969 = vadd.f32 0.0, %v1968
  %1970 = vmatmul.f32.gmra.mxu0 %v1786
  %v1971 = vpop.f32.mrf.mxu0
  %v1972 = vadd.f32 0.0, %v1971
  %1973 = vmatmul.f32.gmra.mxu0 %v1788
  %v1974 = vpop.f32.mrf.mxu0
  %v1975 = vadd.f32 0.0, %v1974
  %1976 = vmatmul.f32.gmra.mxu0 %v1790
  %v1977 = vpop.f32.mrf.mxu0
  %v1978 = vadd.f32 0.0, %v1977
  %1979 = vmatmul.f32.gmra.mxu0 %v1792
  %v1980 = vpop.f32.mrf.mxu0
  %v1981 = vadd.f32 0.0, %v1980
  %1982 = vmatmul.f32.gmra.mxu0 %v1794
  %v1983 = vpop.f32.mrf.mxu0
  %v1984 = vadd.f32 0.0, %v1983
  %1985 = vmatmul.f32.gmra.mxu0 %v1796
  %v1986 = vpop.f32.mrf.mxu0
  %v1987 = vadd.f32 0.0, %v1986
  %1988 = vmatmul.f32.gmra.mxu0 %v1798
  %v1989 = vpop.f32.mrf.mxu0
  %v1990 = vadd.f32 0.0, %v1989
  %1991 = vmatmul.f32.gmra.mxu0 %v1800
  %v1992 = vpop.f32.mrf.mxu0
  %v1993 = vadd.f32 0.0, %v1992
  %1994 = vmatmul.f32.gmra.mxu0 %v1802
  %v1995 = vpop.f32.mrf.mxu0
  %v1996 = vadd.f32 0.0, %v1995
  %1997 = vmatmul.f32.gmra.mxu0 %v1804
  %v1998 = vpop.f32.mrf.mxu0
  %v1999 = vadd.f32 0.0, %v1998
  %2000 = vdwg.mxu0
  %2001 = vmatpush.msra.mxu0 0.0
  %2002 = vmatpush.msra.mxu0 0.0
  %2003 = vmatpush.msra.mxu0 0.0
  %2004 = vmatpush.msra.mxu0 0.0
  %2005 = vmatpush.msra.mxu0 %v829
  %2006 = vmatpush.msra.mxu0 %v826
  %2007 = vmatpush.msra.mxu0 %v823
  %2008 = vmatpush.msra.mxu0 %v820
  %2009 = vmatpush.msra.mxu0 %v817
  %2010 = vmatpush.msra.mxu0 %v814
  %2011 = vmatpush.msra.mxu0 %v811
  %2012 = vmatpush.msra.mxu0 %v808
  %2013 = vmatpush.msra.mxu0 %v805
  %2014 = vmatpush.msra.mxu0 %v802
  %2015 = vmatpush.msra.mxu0 %v799
  %2016 = vmatpush.msra.mxu0 %v796
  %2017 = vmatmul.f32.gmra.mxu0 %v1807
  %v2018 = vpop.f32.mrf.mxu0
  %v2019 = vadd.f32 %v1966, %v2018
  %2020 = vmatmul.f32.gmra.mxu0 %v1810
  %v2021 = vpop.f32.mrf.mxu0
  %v2022 = vadd.f32 %v1969, %v2021
  %2023 = vmatmul.f32.gmra.mxu0 %v1813
  %v2024 = vpop.f32.mrf.mxu0
  %v2025 = vadd.f32 %v1972, %v2024
  %2026 = vmatmul.f32.gmra.mxu0 %v1816
  %v2027 = vpop.f32.mrf.mxu0
  %v2028 = vadd.f32 %v1975, %v2027
  %2029 = vmatmul.f32.gmra.mxu0 %v1819
  %v2030 = vpop.f32.mrf.mxu0
  %v2031 = vadd.f32 %v1978, %v2030
  %2032 = vmatmul.f32.gmra.mxu0 %v1822
  %v2033 = vpop.f32.mrf.mxu0
  %v2034 = vadd.f32 %v1981, %v2033
  %2035 = vmatmul.f32.gmra.mxu0 %v1825
  %v2036 = vpop.f32.mrf.mxu0
  %v2037 = vadd.f32 %v1984, %v2036
  %2038 = vmatmul.f32.gmra.mxu0 %v1828
  %v2039 = vpop.f32.mrf.mxu0
  %v2040 = vadd.f32 %v1987, %v2039
  %2041 = vmatmul.f32.gmra.mxu0 %v1831
  %v2042 = vpop.f32.mrf.mxu0
  %v2043 = vadd.f32 %v1990, %v2042
  %2044 = vmatmul.f32.gmra.mxu0 %v1834
  %v2045 = vpop.f32.mrf.mxu0
  %v2046 = vadd.f32 %v1993, %v2045
  %2047 = vmatmul.f32.gmra.mxu0 %v1837
  %v2048 = vpop.f32.mrf.mxu0
  %v2049 = vadd.f32 %v1996, %v2048
  %2050 = vmatmul.f32.gmra.mxu0 %v1840
  %v2051 = vpop.f32.mrf.mxu0
  %v2052 = vadd.f32 %v1999, %v2051
  %2053 = vdwg.mxu0
  %v2054 = vadd.f32 %v1640, %v1913
  %v2055 = vadd.f32 %v1746, %v2019
  %v2056 = vadd.f32 %v1643, %v1916
  %v2057 = vadd.f32 %v1749, %v2022
  %v2058 = vadd.f32 %v1646, %v1919
  %v2059 = vadd.f32 %v1752, %v2025
  %v2060 = vadd.f32 %v1649, %v1922
  %v2061 = vadd.f32 %v1755, %v2028
  %v2062 = vadd.f32 %v1652, %v1925
  %v2063 = vadd.f32 %v1758, %v2031
  %v2064 = vadd.f32 %v1655, %v1928
  %v2065 = vadd.f32 %v1761, %v2034
  %v2066 = vadd.f32 %v1658, %v1931
  %v2067 = vadd.f32 %v1764, %v2037
  %v2068 = vadd.f32 %v1661, %v1934
  %v2069 = vadd.f32 %v1767, %v2040
  %v2070 = vadd.f32 %v1664, %v1937
  %v2071 = vadd.f32 %v1770, %v2043
  %v2072 = vadd.f32 %v1667, %v1940
  %v2073 = vadd.f32 %v1773, %v2046
  %v2074 = vadd.f32 %v1670, %v1943
  %v2075 = vadd.f32 %v1776, %v2049
  %v2076 = vadd.f32 %v1673, %v1946
  %v2077 = vadd.f32 %v1779, %v2052
  %s2078 = scalar_lea.vmem %s2, 576
  %v2079 = vld [vmem:[%s2078] sm:$0xff]
  %v2080 = vld [vmem:[%s2078 + $0x8] sm:$0xff]
  %v2081 = vld [vmem:[%s2078 + $0x10] sm:$0xff]
  %v2082 = vld [vmem:[%s2078 + $0x18] sm:$0xff]
  %v2083 = vld [vmem:[%s2078 + $0x20] sm:$0xff]
  %v2084 = vld [vmem:[%s2078 + $0x28] sm:$0xff]
  %v2085 = vld [vmem:[%s2078 + $0x30] sm:$0xff]
  %v2086 = vld [vmem:[%s2078 + $0x38] sm:$0xff]
  %v2087 = vld [vmem:[%s2078 + $0x40] sm:$0xff]
  %v2088 = vld [vmem:[%s2078 + $0x48] sm:$0xff]
  %v2089 = vld [vmem:[%s2078 + $0x50] sm:$0xff]
  %v2090 = vld [vmem:[%s2078 + $0x58] sm:$0xff]
  %v2091 = vld [vmem:[%s2078 + $0x60] sm:$0xff]
  %v2092 = vld [vmem:[%s2078 + $0x68] sm:$0xff]
  %v2093 = vld [vmem:[%s2078 + $0x70] sm:$0xff]
  %v2094 = vld [vmem:[%s2078 + $0x78] sm:$0xff]
  %v2095 = vld [vmem:[%s2078 + $0x80] sm:$0xff]
  %v2096 = vld [vmem:[%s2078 + $0x88] sm:$0xff]
  %v2097 = vld [vmem:[%s2078 + $0x90] sm:$0xff]
  %v2098 = vld [vmem:[%s2078 + $0x98] sm:$0xff]
  %v2099 = vld [vmem:[%s2078 + $0xa0] sm:$0xff]
  %v2100 = vld [vmem:[%s2078 + $0xa8] sm:$0xff]
  %v2101 = vld [vmem:[%s2078 + $0xb0] sm:$0xff]
  %v2102 = vld [vmem:[%s2078 + $0xb8] sm:$0xff]
  %v2104 = vsel %vm1284, %v2080, 0
  %v2107 = vsel %vm1284, %v2082, 0
  %v2110 = vsel %vm1284, %v2084, 0
  %v2113 = vsel %vm1284, %v2086, 0
  %v2116 = vsel %vm1284, %v2088, 0
  %v2119 = vsel %vm1284, %v2090, 0
  %v2122 = vsel %vm1284, %v2092, 0
  %v2125 = vsel %vm1284, %v2094, 0
  %v2128 = vsel %vm1284, %v2096, 0
  %v2131 = vsel %vm1284, %v2098, 0
  %v2134 = vsel %vm1284, %v2100, 0
  %v2137 = vsel %vm1284, %v2102, 0
  %2139 = vmatpush.msra.mxu0 %v894
  %2140 = vmatpush.msra.mxu0 %v891
  %2141 = vmatpush.msra.mxu0 %v888
  %2142 = vmatpush.msra.mxu0 %v885
  %2143 = vmatpush.msra.mxu0 %v882
  %2144 = vmatpush.msra.mxu0 %v879
  %2145 = vmatpush.msra.mxu0 %v876
  %2146 = vmatpush.msra.mxu0 %v873
  %2147 = vmatpush.msra.mxu0 %v870
  %2148 = vmatpush.msra.mxu0 %v867
  %2149 = vmatpush.msra.mxu0 %v864
  %2150 = vmatpush.msra.mxu0 %v861
  %2151 = vmatpush.msra.mxu0 %v858
  %2152 = vmatpush.msra.mxu0 %v855
  %2153 = vmatpush.msra.mxu0 %v852
  %2154 = vmatpush.msra.mxu0 %v849
  %2155 = vmatmul.f32.gmra.mxu0 %v2079
  %v2156 = vpop.f32.mrf.mxu0
  %v2157 = vadd.f32 0.0, %v2156
  %2158 = vmatmul.f32.gmra.mxu0 %v2081
  %v2159 = vpop.f32.mrf.mxu0
  %v2160 = vadd.f32 0.0, %v2159
  %2161 = vmatmul.f32.gmra.mxu0 %v2083
  %v2162 = vpop.f32.mrf.mxu0
  %v2163 = vadd.f32 0.0, %v2162
  %2164 = vmatmul.f32.gmra.mxu0 %v2085
  %v2165 = vpop.f32.mrf.mxu0
  %v2166 = vadd.f32 0.0, %v2165
  %2167 = vmatmul.f32.gmra.mxu0 %v2087
  %v2168 = vpop.f32.mrf.mxu0
  %v2169 = vadd.f32 0.0, %v2168
  %2170 = vmatmul.f32.gmra.mxu0 %v2089
  %v2171 = vpop.f32.mrf.mxu0
  %v2172 = vadd.f32 0.0, %v2171
  %2173 = vmatmul.f32.gmra.mxu0 %v2091
  %v2174 = vpop.f32.mrf.mxu0
  %v2175 = vadd.f32 0.0, %v2174
  %2176 = vmatmul.f32.gmra.mxu0 %v2093
  %v2177 = vpop.f32.mrf.mxu0
  %v2178 = vadd.f32 0.0, %v2177
  %2179 = vmatmul.f32.gmra.mxu0 %v2095
  %v2180 = vpop.f32.mrf.mxu0
  %v2181 = vadd.f32 0.0, %v2180
  %2182 = vmatmul.f32.gmra.mxu0 %v2097
  %v2183 = vpop.f32.mrf.mxu0
  %v2184 = vadd.f32 0.0, %v2183
  %2185 = vmatmul.f32.gmra.mxu0 %v2099
  %v2186 = vpop.f32.mrf.mxu0
  %v2187 = vadd.f32 0.0, %v2186
  %2188 = vmatmul.f32.gmra.mxu0 %v2101
  %v2189 = vpop.f32.mrf.mxu0
  %v2190 = vadd.f32 0.0, %v2189
  %2191 = vdwg.mxu0
  %2192 = vmatpush.msra.mxu0 0.0
  %2193 = vmatpush.msra.mxu0 0.0
  %2194 = vmatpush.msra.mxu0 0.0
  %2195 = vmatpush.msra.mxu0 0.0
  %2196 = vmatpush.msra.mxu0 %v930
  %2197 = vmatpush.msra.mxu0 %v927
  %2198 = vmatpush.msra.mxu0 %v924
  %2199 = vmatpush.msra.mxu0 %v921
  %2200 = vmatpush.msra.mxu0 %v918
  %2201 = vmatpush.msra.mxu0 %v915
  %2202 = vmatpush.msra.mxu0 %v912
  %2203 = vmatpush.msra.mxu0 %v909
  %2204 = vmatpush.msra.mxu0 %v906
  %2205 = vmatpush.msra.mxu0 %v903
  %2206 = vmatpush.msra.mxu0 %v900
  %2207 = vmatpush.msra.mxu0 %v897
  %2208 = vmatmul.f32.gmra.mxu0 %v2104
  %v2209 = vpop.f32.mrf.mxu0
  %v2210 = vadd.f32 %v2157, %v2209
  %2211 = vmatmul.f32.gmra.mxu0 %v2107
  %v2212 = vpop.f32.mrf.mxu0
  %v2213 = vadd.f32 %v2160, %v2212
  %2214 = vmatmul.f32.gmra.mxu0 %v2110
  %v2215 = vpop.f32.mrf.mxu0
  %v2216 = vadd.f32 %v2163, %v2215
  %2217 = vmatmul.f32.gmra.mxu0 %v2113
  %v2218 = vpop.f32.mrf.mxu0
  %v2219 = vadd.f32 %v2166, %v2218
  %2220 = vmatmul.f32.gmra.mxu0 %v2116
  %v2221 = vpop.f32.mrf.mxu0
  %v2222 = vadd.f32 %v2169, %v2221
  %2223 = vmatmul.f32.gmra.mxu0 %v2119
  %v2224 = vpop.f32.mrf.mxu0
  %v2225 = vadd.f32 %v2172, %v2224
  %2226 = vmatmul.f32.gmra.mxu0 %v2122
  %v2227 = vpop.f32.mrf.mxu0
  %v2228 = vadd.f32 %v2175, %v2227
  %2229 = vmatmul.f32.gmra.mxu0 %v2125
  %v2230 = vpop.f32.mrf.mxu0
  %v2231 = vadd.f32 %v2178, %v2230
  %2232 = vmatmul.f32.gmra.mxu0 %v2128
  %v2233 = vpop.f32.mrf.mxu0
  %v2234 = vadd.f32 %v2181, %v2233
  %2235 = vmatmul.f32.gmra.mxu0 %v2131
  %v2236 = vpop.f32.mrf.mxu0
  %v2237 = vadd.f32 %v2184, %v2236
  %2238 = vmatmul.f32.gmra.mxu0 %v2134
  %v2239 = vpop.f32.mrf.mxu0
  %v2240 = vadd.f32 %v2187, %v2239
  %2241 = vmatmul.f32.gmra.mxu0 %v2137
  %v2242 = vpop.f32.mrf.mxu0
  %v2243 = vadd.f32 %v2190, %v2242
  %2244 = vdwg.mxu0
  %2245 = vmatpush.msra.mxu0 %v995
  %2246 = vmatpush.msra.mxu0 %v992
  %2247 = vmatpush.msra.mxu0 %v989
  %2248 = vmatpush.msra.mxu0 %v986
  %2249 = vmatpush.msra.mxu0 %v983
  %2250 = vmatpush.msra.mxu0 %v980
  %2251 = vmatpush.msra.mxu0 %v977
  %2252 = vmatpush.msra.mxu0 %v974
  %2253 = vmatpush.msra.mxu0 %v971
  %2254 = vmatpush.msra.mxu0 %v968
  %2255 = vmatpush.msra.mxu0 %v965
  %2256 = vmatpush.msra.mxu0 %v962
  %2257 = vmatpush.msra.mxu0 %v959
  %2258 = vmatpush.msra.mxu0 %v956
  %2259 = vmatpush.msra.mxu0 %v953
  %2260 = vmatpush.msra.mxu0 %v950
  %2261 = vmatmul.f32.gmra.mxu0 %v2079
  %v2262 = vpop.f32.mrf.mxu0
  %v2263 = vadd.f32 0.0, %v2262
  %2264 = vmatmul.f32.gmra.mxu0 %v2081
  %v2265 = vpop.f32.mrf.mxu0
  %v2266 = vadd.f32 0.0, %v2265
  %2267 = vmatmul.f32.gmra.mxu0 %v2083
  %v2268 = vpop.f32.mrf.mxu0
  %v2269 = vadd.f32 0.0, %v2268
  %2270 = vmatmul.f32.gmra.mxu0 %v2085
  %v2271 = vpop.f32.mrf.mxu0
  %v2272 = vadd.f32 0.0, %v2271
  %2273 = vmatmul.f32.gmra.mxu0 %v2087
  %v2274 = vpop.f32.mrf.mxu0
  %v2275 = vadd.f32 0.0, %v2274
  %2276 = vmatmul.f32.gmra.mxu0 %v2089
  %v2277 = vpop.f32.mrf.mxu0
  %v2278 = vadd.f32 0.0, %v2277
  %2279 = vmatmul.f32.gmra.mxu0 %v2091
  %v2280 = vpop.f32.mrf.mxu0
  %v2281 = vadd.f32 0.0, %v2280
  %2282 = vmatmul.f32.gmra.mxu0 %v2093
  %v2283 = vpop.f32.mrf.mxu0
  %v2284 = vadd.f32 0.0, %v2283
  %2285 = vmatmul.f32.gmra.mxu0 %v2095
  %v2286 = vpop.f32.mrf.mxu0
  %v2287 = vadd.f32 0.0, %v2286
  %2288 = vmatmul.f32.gmra.mxu0 %v2097
  %v2289 = vpop.f32.mrf.mxu0
  %v2290 = vadd.f32 0.0, %v2289
  %2291 = vmatmul.f32.gmra.mxu0 %v2099
  %v2292 = vpop.f32.mrf.mxu0
  %v2293 = vadd.f32 0.0, %v2292
  %2294 = vmatmul.f32.gmra.mxu0 %v2101
  %v2295 = vpop.f32.mrf.mxu0
  %v2296 = vadd.f32 0.0, %v2295
  %2297 = vdwg.mxu0
  %2298 = vmatpush.msra.mxu0 0.0
  %2299 = vmatpush.msra.mxu0 0.0
  %2300 = vmatpush.msra.mxu0 0.0
  %2301 = vmatpush.msra.mxu0 0.0
  %2302 = vmatpush.msra.mxu0 %v1031
  %2303 = vmatpush.msra.mxu0 %v1028
  %2304 = vmatpush.msra.mxu0 %v1025
  %2305 = vmatpush.msra.mxu0 %v1022
  %2306 = vmatpush.msra.mxu0 %v1019
  %2307 = vmatpush.msra.mxu0 %v1016
  %2308 = vmatpush.msra.mxu0 %v1013
  %2309 = vmatpush.msra.mxu0 %v1010
  %2310 = vmatpush.msra.mxu0 %v1007
  %2311 = vmatpush.msra.mxu0 %v1004
  %2312 = vmatpush.msra.mxu0 %v1001
  %2313 = vmatpush.msra.mxu0 %v998
  %2314 = vmatmul.f32.gmra.mxu0 %v2104
  %v2315 = vpop.f32.mrf.mxu0
  %v2316 = vadd.f32 %v2263, %v2315
  %2317 = vmatmul.f32.gmra.mxu0 %v2107
  %v2318 = vpop.f32.mrf.mxu0
  %v2319 = vadd.f32 %v2266, %v2318
  %2320 = vmatmul.f32.gmra.mxu0 %v2110
  %v2321 = vpop.f32.mrf.mxu0
  %v2322 = vadd.f32 %v2269, %v2321
  %2323 = vmatmul.f32.gmra.mxu0 %v2113
  %v2324 = vpop.f32.mrf.mxu0
  %v2325 = vadd.f32 %v2272, %v2324
  %2326 = vmatmul.f32.gmra.mxu0 %v2116
  %v2327 = vpop.f32.mrf.mxu0
  %v2328 = vadd.f32 %v2275, %v2327
  %2329 = vmatmul.f32.gmra.mxu0 %v2119
  %v2330 = vpop.f32.mrf.mxu0
  %v2331 = vadd.f32 %v2278, %v2330
  %2332 = vmatmul.f32.gmra.mxu0 %v2122
  %v2333 = vpop.f32.mrf.mxu0
  %v2334 = vadd.f32 %v2281, %v2333
  %2335 = vmatmul.f32.gmra.mxu0 %v2125
  %v2336 = vpop.f32.mrf.mxu0
  %v2337 = vadd.f32 %v2284, %v2336
  %2338 = vmatmul.f32.gmra.mxu0 %v2128
  %v2339 = vpop.f32.mrf.mxu0
  %v2340 = vadd.f32 %v2287, %v2339
  %2341 = vmatmul.f32.gmra.mxu0 %v2131
  %v2342 = vpop.f32.mrf.mxu0
  %v2343 = vadd.f32 %v2290, %v2342
  %2344 = vmatmul.f32.gmra.mxu0 %v2134
  %v2345 = vpop.f32.mrf.mxu0
  %v2346 = vadd.f32 %v2293, %v2345
  %2347 = vmatmul.f32.gmra.mxu0 %v2137
  %v2348 = vpop.f32.mrf.mxu0
  %v2349 = vadd.f32 %v2296, %v2348
  %2350 = vdwg.mxu0
  %v2351 = vadd.f32 %v2054, %v2210
  %v2352 = vadd.f32 %v2055, %v2316
  %v2353 = vadd.f32 %v2056, %v2213
  %v2354 = vadd.f32 %v2057, %v2319
  %v2355 = vadd.f32 %v2058, %v2216
  %v2356 = vadd.f32 %v2059, %v2322
  %v2357 = vadd.f32 %v2060, %v2219
  %v2358 = vadd.f32 %v2061, %v2325
  %v2359 = vadd.f32 %v2062, %v2222
  %v2360 = vadd.f32 %v2063, %v2328
  %v2361 = vadd.f32 %v2064, %v2225
  %v2362 = vadd.f32 %v2065, %v2331
  %v2363 = vadd.f32 %v2066, %v2228
  %v2364 = vadd.f32 %v2067, %v2334
  %v2365 = vadd.f32 %v2068, %v2231
  %v2366 = vadd.f32 %v2069, %v2337
  %v2367 = vadd.f32 %v2070, %v2234
  %v2368 = vadd.f32 %v2071, %v2340
  %v2369 = vadd.f32 %v2072, %v2237
  %v2370 = vadd.f32 %v2073, %v2343
  %v2371 = vadd.f32 %v2074, %v2240
  %v2372 = vadd.f32 %v2075, %v2346
  %v2373 = vadd.f32 %v2076, %v2243
  %v2374 = vadd.f32 %v2077, %v2349
  %s2375 = scalar_lea.vmem %s2, 768
  %v2376 = vld [vmem:[%s2375] sm:$0xff]
  %v2377 = vld [vmem:[%s2375 + $0x8] sm:$0xff]
  %v2378 = vld [vmem:[%s2375 + $0x10] sm:$0xff]
  %v2379 = vld [vmem:[%s2375 + $0x18] sm:$0xff]
  %v2380 = vld [vmem:[%s2375 + $0x20] sm:$0xff]
  %v2381 = vld [vmem:[%s2375 + $0x28] sm:$0xff]
  %v2382 = vld [vmem:[%s2375 + $0x30] sm:$0xff]
  %v2383 = vld [vmem:[%s2375 + $0x38] sm:$0xff]
  %v2384 = vld [vmem:[%s2375 + $0x40] sm:$0xff]
  %v2385 = vld [vmem:[%s2375 + $0x48] sm:$0xff]
  %v2386 = vld [vmem:[%s2375 + $0x50] sm:$0xff]
  %v2387 = vld [vmem:[%s2375 + $0x58] sm:$0xff]
  %v2388 = vld [vmem:[%s2375 + $0x60] sm:$0xff]
  %v2389 = vld [vmem:[%s2375 + $0x68] sm:$0xff]
  %v2390 = vld [vmem:[%s2375 + $0x70] sm:$0xff]
  %v2391 = vld [vmem:[%s2375 + $0x78] sm:$0xff]
  %v2392 = vld [vmem:[%s2375 + $0x80] sm:$0xff]
  %v2393 = vld [vmem:[%s2375 + $0x88] sm:$0xff]
  %v2394 = vld [vmem:[%s2375 + $0x90] sm:$0xff]
  %v2395 = vld [vmem:[%s2375 + $0x98] sm:$0xff]
  %v2396 = vld [vmem:[%s2375 + $0xa0] sm:$0xff]
  %v2397 = vld [vmem:[%s2375 + $0xa8] sm:$0xff]
  %v2398 = vld [vmem:[%s2375 + $0xb0] sm:$0xff]
  %v2399 = vld [vmem:[%s2375 + $0xb8] sm:$0xff]
  %v2401 = vsel %vm1284, %v2377, 0
  %v2404 = vsel %vm1284, %v2379, 0
  %v2407 = vsel %vm1284, %v2381, 0
  %v2410 = vsel %vm1284, %v2383, 0
  %v2413 = vsel %vm1284, %v2385, 0
  %v2416 = vsel %vm1284, %v2387, 0
  %v2419 = vsel %vm1284, %v2389, 0
  %v2422 = vsel %vm1284, %v2391, 0
  %v2425 = vsel %vm1284, %v2393, 0
  %v2428 = vsel %vm1284, %v2395, 0
  %v2431 = vsel %vm1284, %v2397, 0
  %v2434 = vsel %vm1284, %v2399, 0
  %2436 = vmatpush.msra.mxu0 %v1096
  %2437 = vmatpush.msra.mxu0 %v1093
  %2438 = vmatpush.msra.mxu0 %v1090
  %2439 = vmatpush.msra.mxu0 %v1087
  %2440 = vmatpush.msra.mxu0 %v1084
  %2441 = vmatpush.msra.mxu0 %v1081
  %2442 = vmatpush.msra.mxu0 %v1078
  %2443 = vmatpush.msra.mxu0 %v1075
  %2444 = vmatpush.msra.mxu0 %v1072
  %2445 = vmatpush.msra.mxu0 %v1069
  %2446 = vmatpush.msra.mxu0 %v1066
  %2447 = vmatpush.msra.mxu0 %v1063
  %2448 = vmatpush.msra.mxu0 %v1060
  %2449 = vmatpush.msra.mxu0 %v1057
  %2450 = vmatpush.msra.mxu0 %v1054
  %2451 = vmatpush.msra.mxu0 %v1051
  %2452 = vmatmul.f32.gmra.mxu0 %v2376
  %v2453 = vpop.f32.mrf.mxu0
  %v2454 = vadd.f32 0.0, %v2453
  %2455 = vmatmul.f32.gmra.mxu0 %v2378
  %v2456 = vpop.f32.mrf.mxu0
  %v2457 = vadd.f32 0.0, %v2456
  %2458 = vmatmul.f32.gmra.mxu0 %v2380
  %v2459 = vpop.f32.mrf.mxu0
  %v2460 = vadd.f32 0.0, %v2459
  %2461 = vmatmul.f32.gmra.mxu0 %v2382
  %v2462 = vpop.f32.mrf.mxu0
  %v2463 = vadd.f32 0.0, %v2462
  %2464 = vmatmul.f32.gmra.mxu0 %v2384
  %v2465 = vpop.f32.mrf.mxu0
  %v2466 = vadd.f32 0.0, %v2465
  %2467 = vmatmul.f32.gmra.mxu0 %v2386
  %v2468 = vpop.f32.mrf.mxu0
  %v2469 = vadd.f32 0.0, %v2468
  %2470 = vmatmul.f32.gmra.mxu0 %v2388
  %v2471 = vpop.f32.mrf.mxu0
  %v2472 = vadd.f32 0.0, %v2471
  %2473 = vmatmul.f32.gmra.mxu0 %v2390
  %v2474 = vpop.f32.mrf.mxu0
  %v2475 = vadd.f32 0.0, %v2474
  %2476 = vmatmul.f32.gmra.mxu0 %v2392
  %v2477 = vpop.f32.mrf.mxu0
  %v2478 = vadd.f32 0.0, %v2477
  %2479 = vmatmul.f32.gmra.mxu0 %v2394
  %v2480 = vpop.f32.mrf.mxu0
  %v2481 = vadd.f32 0.0, %v2480
  %2482 = vmatmul.f32.gmra.mxu0 %v2396
  %v2483 = vpop.f32.mrf.mxu0
  %v2484 = vadd.f32 0.0, %v2483
  %2485 = vmatmul.f32.gmra.mxu0 %v2398
  %v2486 = vpop.f32.mrf.mxu0
  %v2487 = vadd.f32 0.0, %v2486
  %2488 = vdwg.mxu0
  %2489 = vmatpush.msra.mxu0 0.0
  %2490 = vmatpush.msra.mxu0 0.0
  %2491 = vmatpush.msra.mxu0 0.0
  %2492 = vmatpush.msra.mxu0 0.0
  %2493 = vmatpush.msra.mxu0 %v1132
  %2494 = vmatpush.msra.mxu0 %v1129
  %2495 = vmatpush.msra.mxu0 %v1126
  %2496 = vmatpush.msra.mxu0 %v1123
  %2497 = vmatpush.msra.mxu0 %v1120
  %2498 = vmatpush.msra.mxu0 %v1117
  %2499 = vmatpush.msra.mxu0 %v1114
  %2500 = vmatpush.msra.mxu0 %v1111
  %2501 = vmatpush.msra.mxu0 %v1108
  %2502 = vmatpush.msra.mxu0 %v1105
  %2503 = vmatpush.msra.mxu0 %v1102
  %2504 = vmatpush.msra.mxu0 %v1099
  %2505 = vmatmul.f32.gmra.mxu0 %v2401
  %v2506 = vpop.f32.mrf.mxu0
  %v2507 = vadd.f32 %v2454, %v2506
  %2508 = vmatmul.f32.gmra.mxu0 %v2404
  %v2509 = vpop.f32.mrf.mxu0
  %v2510 = vadd.f32 %v2457, %v2509
  %2511 = vmatmul.f32.gmra.mxu0 %v2407
  %v2512 = vpop.f32.mrf.mxu0
  %v2513 = vadd.f32 %v2460, %v2512
  %2514 = vmatmul.f32.gmra.mxu0 %v2410
  %v2515 = vpop.f32.mrf.mxu0
  %v2516 = vadd.f32 %v2463, %v2515
  %2517 = vmatmul.f32.gmra.mxu0 %v2413
  %v2518 = vpop.f32.mrf.mxu0
  %v2519 = vadd.f32 %v2466, %v2518
  %2520 = vmatmul.f32.gmra.mxu0 %v2416
  %v2521 = vpop.f32.mrf.mxu0
  %v2522 = vadd.f32 %v2469, %v2521
  %2523 = vmatmul.f32.gmra.mxu0 %v2419
  %v2524 = vpop.f32.mrf.mxu0
  %v2525 = vadd.f32 %v2472, %v2524
  %2526 = vmatmul.f32.gmra.mxu0 %v2422
  %v2527 = vpop.f32.mrf.mxu0
  %v2528 = vadd.f32 %v2475, %v2527
  %2529 = vmatmul.f32.gmra.mxu0 %v2425
  %v2530 = vpop.f32.mrf.mxu0
  %v2531 = vadd.f32 %v2478, %v2530
  %2532 = vmatmul.f32.gmra.mxu0 %v2428
  %v2533 = vpop.f32.mrf.mxu0
  %v2534 = vadd.f32 %v2481, %v2533
  %2535 = vmatmul.f32.gmra.mxu0 %v2431
  %v2536 = vpop.f32.mrf.mxu0
  %v2537 = vadd.f32 %v2484, %v2536
  %2538 = vmatmul.f32.gmra.mxu0 %v2434
  %v2539 = vpop.f32.mrf.mxu0
  %v2540 = vadd.f32 %v2487, %v2539
  %2541 = vdwg.mxu0
  %2542 = vmatpush.msra.mxu0 %v1197
  %2543 = vmatpush.msra.mxu0 %v1194
  %2544 = vmatpush.msra.mxu0 %v1191
  %2545 = vmatpush.msra.mxu0 %v1188
  %2546 = vmatpush.msra.mxu0 %v1185
  %2547 = vmatpush.msra.mxu0 %v1182
  %2548 = vmatpush.msra.mxu0 %v1179
  %2549 = vmatpush.msra.mxu0 %v1176
  %2550 = vmatpush.msra.mxu0 %v1173
  %2551 = vmatpush.msra.mxu0 %v1170
  %2552 = vmatpush.msra.mxu0 %v1167
  %2553 = vmatpush.msra.mxu0 %v1164
  %2554 = vmatpush.msra.mxu0 %v1161
  %2555 = vmatpush.msra.mxu0 %v1158
  %2556 = vmatpush.msra.mxu0 %v1155
  %2557 = vmatpush.msra.mxu0 %v1152
  %2558 = vmatmul.f32.gmra.mxu0 %v2376
  %v2559 = vpop.f32.mrf.mxu0
  %v2560 = vadd.f32 0.0, %v2559
  %2561 = vmatmul.f32.gmra.mxu0 %v2378
  %v2562 = vpop.f32.mrf.mxu0
  %v2563 = vadd.f32 0.0, %v2562
  %2564 = vmatmul.f32.gmra.mxu0 %v2380
  %v2565 = vpop.f32.mrf.mxu0
  %v2566 = vadd.f32 0.0, %v2565
  %2567 = vmatmul.f32.gmra.mxu0 %v2382
  %v2568 = vpop.f32.mrf.mxu0
  %v2569 = vadd.f32 0.0, %v2568
  %2570 = vmatmul.f32.gmra.mxu0 %v2384
  %v2571 = vpop.f32.mrf.mxu0
  %v2572 = vadd.f32 0.0, %v2571
  %2573 = vmatmul.f32.gmra.mxu0 %v2386
  %v2574 = vpop.f32.mrf.mxu0
  %v2575 = vadd.f32 0.0, %v2574
  %2576 = vmatmul.f32.gmra.mxu0 %v2388
  %v2577 = vpop.f32.mrf.mxu0
  %v2578 = vadd.f32 0.0, %v2577
  %2579 = vmatmul.f32.gmra.mxu0 %v2390
  %v2580 = vpop.f32.mrf.mxu0
  %v2581 = vadd.f32 0.0, %v2580
  %2582 = vmatmul.f32.gmra.mxu0 %v2392
  %v2583 = vpop.f32.mrf.mxu0
  %v2584 = vadd.f32 0.0, %v2583
  %2585 = vmatmul.f32.gmra.mxu0 %v2394
  %v2586 = vpop.f32.mrf.mxu0
  %v2587 = vadd.f32 0.0, %v2586
  %2588 = vmatmul.f32.gmra.mxu0 %v2396
  %v2589 = vpop.f32.mrf.mxu0
  %v2590 = vadd.f32 0.0, %v2589
  %2591 = vmatmul.f32.gmra.mxu0 %v2398
  %v2592 = vpop.f32.mrf.mxu0
  %v2593 = vadd.f32 0.0, %v2592
  %2594 = vdwg.mxu0
  %2595 = vmatpush.msra.mxu0 0.0
  %2596 = vmatpush.msra.mxu0 0.0
  %2597 = vmatpush.msra.mxu0 0.0
  %2598 = vmatpush.msra.mxu0 0.0
  %2599 = vmatpush.msra.mxu0 %v1233
  %2600 = vmatpush.msra.mxu0 %v1230
  %2601 = vmatpush.msra.mxu0 %v1227
  %2602 = vmatpush.msra.mxu0 %v1224
  %2603 = vmatpush.msra.mxu0 %v1221
  %2604 = vmatpush.msra.mxu0 %v1218
  %2605 = vmatpush.msra.mxu0 %v1215
  %2606 = vmatpush.msra.mxu0 %v1212
  %2607 = vmatpush.msra.mxu0 %v1209
  %2608 = vmatpush.msra.mxu0 %v1206
  %2609 = vmatpush.msra.mxu0 %v1203
  %2610 = vmatpush.msra.mxu0 %v1200
  %2611 = vmatmul.f32.gmra.mxu0 %v2401
  %v2612 = vpop.f32.mrf.mxu0
  %v2613 = vadd.f32 %v2560, %v2612
  %2614 = vmatmul.f32.gmra.mxu0 %v2404
  %v2615 = vpop.f32.mrf.mxu0
  %v2616 = vadd.f32 %v2563, %v2615
  %2617 = vmatmul.f32.gmra.mxu0 %v2407
  %v2618 = vpop.f32.mrf.mxu0
  %v2619 = vadd.f32 %v2566, %v2618
  %2620 = vmatmul.f32.gmra.mxu0 %v2410
  %v2621 = vpop.f32.mrf.mxu0
  %v2622 = vadd.f32 %v2569, %v2621
  %2623 = vmatmul.f32.gmra.mxu0 %v2413
  %v2624 = vpop.f32.mrf.mxu0
  %v2625 = vadd.f32 %v2572, %v2624
  %2626 = vmatmul.f32.gmra.mxu0 %v2416
  %v2627 = vpop.f32.mrf.mxu0
  %v2628 = vadd.f32 %v2575, %v2627
  %2629 = vmatmul.f32.gmra.mxu0 %v2419
  %v2630 = vpop.f32.mrf.mxu0
  %v2631 = vadd.f32 %v2578, %v2630
  %2632 = vmatmul.f32.gmra.mxu0 %v2422
  %v2633 = vpop.f32.mrf.mxu0
  %v2634 = vadd.f32 %v2581, %v2633
  %2635 = vmatmul.f32.gmra.mxu0 %v2425
  %v2636 = vpop.f32.mrf.mxu0
  %v2637 = vadd.f32 %v2584, %v2636
  %2638 = vmatmul.f32.gmra.mxu0 %v2428
  %v2639 = vpop.f32.mrf.mxu0
  %v2640 = vadd.f32 %v2587, %v2639
  %2641 = vmatmul.f32.gmra.mxu0 %v2431
  %v2642 = vpop.f32.mrf.mxu0
  %v2643 = vadd.f32 %v2590, %v2642
  %2644 = vmatmul.f32.gmra.mxu0 %v2434
  %v2645 = vpop.f32.mrf.mxu0
  %v2646 = vadd.f32 %v2593, %v2645
  %2647 = vdwg.mxu0
  %v2648 = vadd.f32 %v2351, %v2507
  %v2649 = vadd.f32 %v2352, %v2613
  %v2650 = vadd.f32 %v2353, %v2510
  %v2651 = vadd.f32 %v2354, %v2616
  %v2652 = vadd.f32 %v2355, %v2513
  %v2653 = vadd.f32 %v2356, %v2619
  %v2654 = vadd.f32 %v2357, %v2516
  %v2655 = vadd.f32 %v2358, %v2622
  %v2656 = vadd.f32 %v2359, %v2519
  %v2657 = vadd.f32 %v2360, %v2625
  %v2658 = vadd.f32 %v2361, %v2522
  %v2659 = vadd.f32 %v2362, %v2628
  %v2660 = vadd.f32 %v2363, %v2525
  %v2661 = vadd.f32 %v2364, %v2631
  %v2662 = vadd.f32 %v2365, %v2528
  %v2663 = vadd.f32 %v2366, %v2634
  %v2664 = vadd.f32 %v2367, %v2531
  %v2665 = vadd.f32 %v2368, %v2637
  %v2666 = vadd.f32 %v2369, %v2534
  %v2667 = vadd.f32 %v2370, %v2640
  %v2668 = vadd.f32 %v2371, %v2537
  %v2669 = vadd.f32 %v2372, %v2643
  %v2670 = vadd.f32 %v2373, %v2540
  %v2671 = vadd.f32 %v2374, %v2646
  %2672 = vmatpush.msra.mxu0 %v490
  %2673 = vmatpush.msra.mxu0 %v487
  %2674 = vmatpush.msra.mxu0 %v484
  %2675 = vmatpush.msra.mxu0 %v481
  %2676 = vmatpush.msra.mxu0 %v478
  %2677 = vmatpush.msra.mxu0 %v475
  %2678 = vmatpush.msra.mxu0 %v472
  %2679 = vmatpush.msra.mxu0 %v469
  %2680 = vmatpush.msra.mxu0 %v466
  %2681 = vmatpush.msra.mxu0 %v463
  %2682 = vmatpush.msra.mxu0 %v460
  %2683 = vmatpush.msra.mxu0 %v457
  %2684 = vmatpush.msra.mxu0 %v454
  %2685 = vmatpush.msra.mxu0 %v451
  %2686 = vmatpush.msra.mxu0 %v448
  %2687 = vmatpush.msra.mxu0 %v445
  %2688 = vmatmul.f32.gmra.mxu0 %v1782
  %v2689 = vpop.f32.mrf.mxu0
  %v2690 = vadd.f32 0.0, %v2689
  %2691 = vmatmul.f32.gmra.mxu0 %v1784
  %v2692 = vpop.f32.mrf.mxu0
  %v2693 = vadd.f32 0.0, %v2692
  %2694 = vmatmul.f32.gmra.mxu0 %v1786
  %v2695 = vpop.f32.mrf.mxu0
  %v2696 = vadd.f32 0.0, %v2695
  %2697 = vmatmul.f32.gmra.mxu0 %v1788
  %v2698 = vpop.f32.mrf.mxu0
  %v2699 = vadd.f32 0.0, %v2698
  %2700 = vmatmul.f32.gmra.mxu0 %v1790
  %v2701 = vpop.f32.mrf.mxu0
  %v2702 = vadd.f32 0.0, %v2701
  %2703 = vmatmul.f32.gmra.mxu0 %v1792
  %v2704 = vpop.f32.mrf.mxu0
  %v2705 = vadd.f32 0.0, %v2704
  %2706 = vmatmul.f32.gmra.mxu0 %v1794
  %v2707 = vpop.f32.mrf.mxu0
  %v2708 = vadd.f32 0.0, %v2707
  %2709 = vmatmul.f32.gmra.mxu0 %v1796
  %v2710 = vpop.f32.mrf.mxu0
  %v2711 = vadd.f32 0.0, %v2710
  %2712 = vmatmul.f32.gmra.mxu0 %v1798
  %v2713 = vpop.f32.mrf.mxu0
  %v2714 = vadd.f32 0.0, %v2713
  %2715 = vmatmul.f32.gmra.mxu0 %v1800
  %v2716 = vpop.f32.mrf.mxu0
  %v2717 = vadd.f32 0.0, %v2716
  %2718 = vmatmul.f32.gmra.mxu0 %v1802
  %v2719 = vpop.f32.mrf.mxu0
  %v2720 = vadd.f32 0.0, %v2719
  %2721 = vmatmul.f32.gmra.mxu0 %v1804
  %v2722 = vpop.f32.mrf.mxu0
  %v2723 = vadd.f32 0.0, %v2722
  %2724 = vdwg.mxu0
  %2725 = vmatpush.msra.mxu0 0.0
  %2726 = vmatpush.msra.mxu0 0.0
  %2727 = vmatpush.msra.mxu0 0.0
  %2728 = vmatpush.msra.mxu0 0.0
  %2729 = vmatpush.msra.mxu0 %v526
  %2730 = vmatpush.msra.mxu0 %v523
  %2731 = vmatpush.msra.mxu0 %v520
  %2732 = vmatpush.msra.mxu0 %v517
  %2733 = vmatpush.msra.mxu0 %v514
  %2734 = vmatpush.msra.mxu0 %v511
  %2735 = vmatpush.msra.mxu0 %v508
  %2736 = vmatpush.msra.mxu0 %v505
  %2737 = vmatpush.msra.mxu0 %v502
  %2738 = vmatpush.msra.mxu0 %v499
  %2739 = vmatpush.msra.mxu0 %v496
  %2740 = vmatpush.msra.mxu0 %v493
  %2741 = vmatmul.f32.gmra.mxu0 %v1807
  %v2742 = vpop.f32.mrf.mxu0
  %v2743 = vadd.f32 %v2690, %v2742
  %2744 = vmatmul.f32.gmra.mxu0 %v1810
  %v2745 = vpop.f32.mrf.mxu0
  %v2746 = vadd.f32 %v2693, %v2745
  %2747 = vmatmul.f32.gmra.mxu0 %v1813
  %v2748 = vpop.f32.mrf.mxu0
  %v2749 = vadd.f32 %v2696, %v2748
  %2750 = vmatmul.f32.gmra.mxu0 %v1816
  %v2751 = vpop.f32.mrf.mxu0
  %v2752 = vadd.f32 %v2699, %v2751
  %2753 = vmatmul.f32.gmra.mxu0 %v1819
  %v2754 = vpop.f32.mrf.mxu0
  %v2755 = vadd.f32 %v2702, %v2754
  %2756 = vmatmul.f32.gmra.mxu0 %v1822
  %v2757 = vpop.f32.mrf.mxu0
  %v2758 = vadd.f32 %v2705, %v2757
  %2759 = vmatmul.f32.gmra.mxu0 %v1825
  %v2760 = vpop.f32.mrf.mxu0
  %v2761 = vadd.f32 %v2708, %v2760
  %2762 = vmatmul.f32.gmra.mxu0 %v1828
  %v2763 = vpop.f32.mrf.mxu0
  %v2764 = vadd.f32 %v2711, %v2763
  %2765 = vmatmul.f32.gmra.mxu0 %v1831
  %v2766 = vpop.f32.mrf.mxu0
  %v2767 = vadd.f32 %v2714, %v2766
  %2768 = vmatmul.f32.gmra.mxu0 %v1834
  %v2769 = vpop.f32.mrf.mxu0
  %v2770 = vadd.f32 %v2717, %v2769
  %2771 = vmatmul.f32.gmra.mxu0 %v1837
  %v2772 = vpop.f32.mrf.mxu0
  %v2773 = vadd.f32 %v2720, %v2772
  %2774 = vmatmul.f32.gmra.mxu0 %v1840
  %v2775 = vpop.f32.mrf.mxu0
  %v2776 = vadd.f32 %v2723, %v2775
  %2777 = vdwg.mxu0
  %2778 = vmatpush.msra.mxu0 %v591
  %2779 = vmatpush.msra.mxu0 %v588
  %2780 = vmatpush.msra.mxu0 %v585
  %2781 = vmatpush.msra.mxu0 %v582
  %2782 = vmatpush.msra.mxu0 %v579
  %2783 = vmatpush.msra.mxu0 %v576
  %2784 = vmatpush.msra.mxu0 %v573
  %2785 = vmatpush.msra.mxu0 %v570
  %2786 = vmatpush.msra.mxu0 %v567
  %2787 = vmatpush.msra.mxu0 %v564
  %2788 = vmatpush.msra.mxu0 %v561
  %2789 = vmatpush.msra.mxu0 %v558
  %2790 = vmatpush.msra.mxu0 %v555
  %2791 = vmatpush.msra.mxu0 %v552
  %2792 = vmatpush.msra.mxu0 %v549
  %2793 = vmatpush.msra.mxu0 %v546
  %2794 = vmatmul.f32.gmra.mxu0 %v1782
  %v2795 = vpop.f32.mrf.mxu0
  %v2796 = vadd.f32 0.0, %v2795
  %2797 = vmatmul.f32.gmra.mxu0 %v1784
  %v2798 = vpop.f32.mrf.mxu0
  %v2799 = vadd.f32 0.0, %v2798
  %2800 = vmatmul.f32.gmra.mxu0 %v1786
  %v2801 = vpop.f32.mrf.mxu0
  %v2802 = vadd.f32 0.0, %v2801
  %2803 = vmatmul.f32.gmra.mxu0 %v1788
  %v2804 = vpop.f32.mrf.mxu0
  %v2805 = vadd.f32 0.0, %v2804
  %2806 = vmatmul.f32.gmra.mxu0 %v1790
  %v2807 = vpop.f32.mrf.mxu0
  %v2808 = vadd.f32 0.0, %v2807
  %2809 = vmatmul.f32.gmra.mxu0 %v1792
  %v2810 = vpop.f32.mrf.mxu0
  %v2811 = vadd.f32 0.0, %v2810
  %2812 = vmatmul.f32.gmra.mxu0 %v1794
  %v2813 = vpop.f32.mrf.mxu0
  %v2814 = vadd.f32 0.0, %v2813
  %2815 = vmatmul.f32.gmra.mxu0 %v1796
  %v2816 = vpop.f32.mrf.mxu0
  %v2817 = vadd.f32 0.0, %v2816
  %2818 = vmatmul.f32.gmra.mxu0 %v1798
  %v2819 = vpop.f32.mrf.mxu0
  %v2820 = vadd.f32 0.0, %v2819
  %2821 = vmatmul.f32.gmra.mxu0 %v1800
  %v2822 = vpop.f32.mrf.mxu0
  %v2823 = vadd.f32 0.0, %v2822
  %2824 = vmatmul.f32.gmra.mxu0 %v1802
  %v2825 = vpop.f32.mrf.mxu0
  %v2826 = vadd.f32 0.0, %v2825
  %2827 = vmatmul.f32.gmra.mxu0 %v1804
  %v2828 = vpop.f32.mrf.mxu0
  %v2829 = vadd.f32 0.0, %v2828
  %2830 = vdwg.mxu0
  %2831 = vmatpush.msra.mxu0 0.0
  %2832 = vmatpush.msra.mxu0 0.0
  %2833 = vmatpush.msra.mxu0 0.0
  %2834 = vmatpush.msra.mxu0 0.0
  %2835 = vmatpush.msra.mxu0 %v627
  %2836 = vmatpush.msra.mxu0 %v624
  %2837 = vmatpush.msra.mxu0 %v621
  %2838 = vmatpush.msra.mxu0 %v618
  %2839 = vmatpush.msra.mxu0 %v615
  %2840 = vmatpush.msra.mxu0 %v612
  %2841 = vmatpush.msra.mxu0 %v609
  %2842 = vmatpush.msra.mxu0 %v606
  %2843 = vmatpush.msra.mxu0 %v603
  %2844 = vmatpush.msra.mxu0 %v600
  %2845 = vmatpush.msra.mxu0 %v597
  %2846 = vmatpush.msra.mxu0 %v594
  %2847 = vmatmul.f32.gmra.mxu0 %v1807
  %v2848 = vpop.f32.mrf.mxu0
  %v2849 = vadd.f32 %v2796, %v2848
  %2850 = vmatmul.f32.gmra.mxu0 %v1810
  %v2851 = vpop.f32.mrf.mxu0
  %v2852 = vadd.f32 %v2799, %v2851
  %2853 = vmatmul.f32.gmra.mxu0 %v1813
  %v2854 = vpop.f32.mrf.mxu0
  %v2855 = vadd.f32 %v2802, %v2854
  %2856 = vmatmul.f32.gmra.mxu0 %v1816
  %v2857 = vpop.f32.mrf.mxu0
  %v2858 = vadd.f32 %v2805, %v2857
  %2859 = vmatmul.f32.gmra.mxu0 %v1819
  %v2860 = vpop.f32.mrf.mxu0
  %v2861 = vadd.f32 %v2808, %v2860
  %2862 = vmatmul.f32.gmra.mxu0 %v1822
  %v2863 = vpop.f32.mrf.mxu0
  %v2864 = vadd.f32 %v2811, %v2863
  %2865 = vmatmul.f32.gmra.mxu0 %v1825
  %v2866 = vpop.f32.mrf.mxu0
  %v2867 = vadd.f32 %v2814, %v2866
  %2868 = vmatmul.f32.gmra.mxu0 %v1828
  %v2869 = vpop.f32.mrf.mxu0
  %v2870 = vadd.f32 %v2817, %v2869
  %2871 = vmatmul.f32.gmra.mxu0 %v1831
  %v2872 = vpop.f32.mrf.mxu0
  %v2873 = vadd.f32 %v2820, %v2872
  %2874 = vmatmul.f32.gmra.mxu0 %v1834
  %v2875 = vpop.f32.mrf.mxu0
  %v2876 = vadd.f32 %v2823, %v2875
  %2877 = vmatmul.f32.gmra.mxu0 %v1837
  %v2878 = vpop.f32.mrf.mxu0
  %v2879 = vadd.f32 %v2826, %v2878
  %2880 = vmatmul.f32.gmra.mxu0 %v1840
  %v2881 = vpop.f32.mrf.mxu0
  %v2882 = vadd.f32 %v2829, %v2881
  %2883 = vdwg.mxu0
  %2884 = vmatpush.msra.mxu0 %v288
  %2885 = vmatpush.msra.mxu0 %v285
  %2886 = vmatpush.msra.mxu0 %v282
  %2887 = vmatpush.msra.mxu0 %v279
  %2888 = vmatpush.msra.mxu0 %v276
  %2889 = vmatpush.msra.mxu0 %v273
  %2890 = vmatpush.msra.mxu0 %v270
  %2891 = vmatpush.msra.mxu0 %v267
  %2892 = vmatpush.msra.mxu0 %v264
  %2893 = vmatpush.msra.mxu0 %v261
  %2894 = vmatpush.msra.mxu0 %v258
  %2895 = vmatpush.msra.mxu0 %v255
  %2896 = vmatpush.msra.mxu0 %v252
  %2897 = vmatpush.msra.mxu0 %v249
  %2898 = vmatpush.msra.mxu0 %v246
  %2899 = vmatpush.msra.mxu0 %v243
  %2900 = vmatmul.f32.gmra.mxu0 %v1260
  %v2901 = vpop.f32.mrf.mxu0
  %v2902 = vadd.f32 %v2743, %v2901
  %2903 = vmatmul.f32.gmra.mxu0 %v1262
  %v2904 = vpop.f32.mrf.mxu0
  %v2905 = vadd.f32 %v2746, %v2904
  %2906 = vmatmul.f32.gmra.mxu0 %v1264
  %v2907 = vpop.f32.mrf.mxu0
  %v2908 = vadd.f32 %v2749, %v2907
  %2909 = vmatmul.f32.gmra.mxu0 %v1266
  %v2910 = vpop.f32.mrf.mxu0
  %v2911 = vadd.f32 %v2752, %v2910
  %2912 = vmatmul.f32.gmra.mxu0 %v1268
  %v2913 = vpop.f32.mrf.mxu0
  %v2914 = vadd.f32 %v2755, %v2913
  %2915 = vmatmul.f32.gmra.mxu0 %v1270
  %v2916 = vpop.f32.mrf.mxu0
  %v2917 = vadd.f32 %v2758, %v2916
  %2918 = vmatmul.f32.gmra.mxu0 %v1272
  %v2919 = vpop.f32.mrf.mxu0
  %v2920 = vadd.f32 %v2761, %v2919
  %2921 = vmatmul.f32.gmra.mxu0 %v1274
  %v2922 = vpop.f32.mrf.mxu0
  %v2923 = vadd.f32 %v2764, %v2922
  %2924 = vmatmul.f32.gmra.mxu0 %v1276
  %v2925 = vpop.f32.mrf.mxu0
  %v2926 = vadd.f32 %v2767, %v2925
  %2927 = vmatmul.f32.gmra.mxu0 %v1278
  %v2928 = vpop.f32.mrf.mxu0
  %v2929 = vadd.f32 %v2770, %v2928
  %2930 = vmatmul.f32.gmra.mxu0 %v1280
  %v2931 = vpop.f32.mrf.mxu0
  %v2932 = vadd.f32 %v2773, %v2931
  %2933 = vmatmul.f32.gmra.mxu0 %v1282
  %v2934 = vpop.f32.mrf.mxu0
  %v2935 = vadd.f32 %v2776, %v2934
  %2936 = vdwg.mxu0
  %2937 = vmatpush.msra.mxu0 0.0
  %2938 = vmatpush.msra.mxu0 0.0
  %2939 = vmatpush.msra.mxu0 0.0
  %2940 = vmatpush.msra.mxu0 0.0
  %2941 = vmatpush.msra.mxu0 %v324
  %2942 = vmatpush.msra.mxu0 %v321
  %2943 = vmatpush.msra.mxu0 %v318
  %2944 = vmatpush.msra.mxu0 %v315
  %2945 = vmatpush.msra.mxu0 %v312
  %2946 = vmatpush.msra.mxu0 %v309
  %2947 = vmatpush.msra.mxu0 %v306
  %2948 = vmatpush.msra.mxu0 %v303
  %2949 = vmatpush.msra.mxu0 %v300
  %2950 = vmatpush.msra.mxu0 %v297
  %2951 = vmatpush.msra.mxu0 %v294
  %2952 = vmatpush.msra.mxu0 %v291
  %2953 = vmatmul.f32.gmra.mxu0 %v1286
  %v2954 = vpop.f32.mrf.mxu0
  %v2955 = vadd.f32 %v2902, %v2954
  %2956 = vmatmul.f32.gmra.mxu0 %v1289
  %v2957 = vpop.f32.mrf.mxu0
  %v2958 = vadd.f32 %v2905, %v2957
  %2959 = vmatmul.f32.gmra.mxu0 %v1292
  %v2960 = vpop.f32.mrf.mxu0
  %v2961 = vadd.f32 %v2908, %v2960
  %2962 = vmatmul.f32.gmra.mxu0 %v1295
  %v2963 = vpop.f32.mrf.mxu0
  %v2964 = vadd.f32 %v2911, %v2963
  %2965 = vmatmul.f32.gmra.mxu0 %v1298
  %v2966 = vpop.f32.mrf.mxu0
  %v2967 = vadd.f32 %v2914, %v2966
  %2968 = vmatmul.f32.gmra.mxu0 %v1301
  %v2969 = vpop.f32.mrf.mxu0
  %v2970 = vadd.f32 %v2917, %v2969
  %2971 = vmatmul.f32.gmra.mxu0 %v1304
  %v2972 = vpop.f32.mrf.mxu0
  %v2973 = vadd.f32 %v2920, %v2972
  %2974 = vmatmul.f32.gmra.mxu0 %v1307
  %v2975 = vpop.f32.mrf.mxu0
  %v2976 = vadd.f32 %v2923, %v2975
  %2977 = vmatmul.f32.gmra.mxu0 %v1310
  %v2978 = vpop.f32.mrf.mxu0
  %v2979 = vadd.f32 %v2926, %v2978
  %2980 = vmatmul.f32.gmra.mxu0 %v1313
  %v2981 = vpop.f32.mrf.mxu0
  %v2982 = vadd.f32 %v2929, %v2981
  %2983 = vmatmul.f32.gmra.mxu0 %v1316
  %v2984 = vpop.f32.mrf.mxu0
  %v2985 = vadd.f32 %v2932, %v2984
  %2986 = vmatmul.f32.gmra.mxu0 %v1319
  %v2987 = vpop.f32.mrf.mxu0
  %v2988 = vadd.f32 %v2935, %v2987
  %2989 = vdwg.mxu0
  %2990 = vmatpush.msra.mxu0 %v389
  %2991 = vmatpush.msra.mxu0 %v386
  %2992 = vmatpush.msra.mxu0 %v383
  %2993 = vmatpush.msra.mxu0 %v380
  %2994 = vmatpush.msra.mxu0 %v377
  %2995 = vmatpush.msra.mxu0 %v374
  %2996 = vmatpush.msra.mxu0 %v371
  %2997 = vmatpush.msra.mxu0 %v368
  %2998 = vmatpush.msra.mxu0 %v365
  %2999 = vmatpush.msra.mxu0 %v362
  %3000 = vmatpush.msra.mxu0 %v359
  %3001 = vmatpush.msra.mxu0 %v356
  %3002 = vmatpush.msra.mxu0 %v353
  %3003 = vmatpush.msra.mxu0 %v350
  %3004 = vmatpush.msra.mxu0 %v347
  %3005 = vmatpush.msra.mxu0 %v344
  %3006 = vmatmul.f32.gmra.mxu0 %v1260
  %v3007 = vpop.f32.mrf.mxu0
  %v3008 = vadd.f32 %v2849, %v3007
  %3009 = vmatmul.f32.gmra.mxu0 %v1262
  %v3010 = vpop.f32.mrf.mxu0
  %v3011 = vadd.f32 %v2852, %v3010
  %3012 = vmatmul.f32.gmra.mxu0 %v1264
  %v3013 = vpop.f32.mrf.mxu0
  %v3014 = vadd.f32 %v2855, %v3013
  %3015 = vmatmul.f32.gmra.mxu0 %v1266
  %v3016 = vpop.f32.mrf.mxu0
  %v3017 = vadd.f32 %v2858, %v3016
  %3018 = vmatmul.f32.gmra.mxu0 %v1268
  %v3019 = vpop.f32.mrf.mxu0
  %v3020 = vadd.f32 %v2861, %v3019
  %3021 = vmatmul.f32.gmra.mxu0 %v1270
  %v3022 = vpop.f32.mrf.mxu0
  %v3023 = vadd.f32 %v2864, %v3022
  %3024 = vmatmul.f32.gmra.mxu0 %v1272
  %v3025 = vpop.f32.mrf.mxu0
  %v3026 = vadd.f32 %v2867, %v3025
  %3027 = vmatmul.f32.gmra.mxu0 %v1274
  %v3028 = vpop.f32.mrf.mxu0
  %v3029 = vadd.f32 %v2870, %v3028
  %3030 = vmatmul.f32.gmra.mxu0 %v1276
  %v3031 = vpop.f32.mrf.mxu0
  %v3032 = vadd.f32 %v2873, %v3031
  %3033 = vmatmul.f32.gmra.mxu0 %v1278
  %v3034 = vpop.f32.mrf.mxu0
  %v3035 = vadd.f32 %v2876, %v3034
  %3036 = vmatmul.f32.gmra.mxu0 %v1280
  %v3037 = vpop.f32.mrf.mxu0
  %v3038 = vadd.f32 %v2879, %v3037
  %3039 = vmatmul.f32.gmra.mxu0 %v1282
  %v3040 = vpop.f32.mrf.mxu0
  %v3041 = vadd.f32 %v2882, %v3040
  %3042 = vdwg.mxu0
  %3043 = vmatpush.msra.mxu0 0.0
  %3044 = vmatpush.msra.mxu0 0.0
  %3045 = vmatpush.msra.mxu0 0.0
  %3046 = vmatpush.msra.mxu0 0.0
  %3047 = vmatpush.msra.mxu0 %v425
  %3048 = vmatpush.msra.mxu0 %v422
  %3049 = vmatpush.msra.mxu0 %v419
  %3050 = vmatpush.msra.mxu0 %v416
  %3051 = vmatpush.msra.mxu0 %v413
  %3052 = vmatpush.msra.mxu0 %v410
  %3053 = vmatpush.msra.mxu0 %v407
  %3054 = vmatpush.msra.mxu0 %v404
  %3055 = vmatpush.msra.mxu0 %v401
  %3056 = vmatpush.msra.mxu0 %v398
  %3057 = vmatpush.msra.mxu0 %v395
  %3058 = vmatpush.msra.mxu0 %v392
  %3059 = vmatmul.f32.gmra.mxu0 %v1286
  %v3060 = vpop.f32.mrf.mxu0
  %v3061 = vadd.f32 %v3008, %v3060
  %3062 = vmatmul.f32.gmra.mxu0 %v1289
  %v3063 = vpop.f32.mrf.mxu0
  %v3064 = vadd.f32 %v3011, %v3063
  %3065 = vmatmul.f32.gmra.mxu0 %v1292
  %v3066 = vpop.f32.mrf.mxu0
  %v3067 = vadd.f32 %v3014, %v3066
  %3068 = vmatmul.f32.gmra.mxu0 %v1295
  %v3069 = vpop.f32.mrf.mxu0
  %v3070 = vadd.f32 %v3017, %v3069
  %3071 = vmatmul.f32.gmra.mxu0 %v1298
  %v3072 = vpop.f32.mrf.mxu0
  %v3073 = vadd.f32 %v3020, %v3072
  %3074 = vmatmul.f32.gmra.mxu0 %v1301
  %v3075 = vpop.f32.mrf.mxu0
  %v3076 = vadd.f32 %v3023, %v3075
  %3077 = vmatmul.f32.gmra.mxu0 %v1304
  %v3078 = vpop.f32.mrf.mxu0
  %v3079 = vadd.f32 %v3026, %v3078
  %3080 = vmatmul.f32.gmra.mxu0 %v1307
  %v3081 = vpop.f32.mrf.mxu0
  %v3082 = vadd.f32 %v3029, %v3081
  %3083 = vmatmul.f32.gmra.mxu0 %v1310
  %v3084 = vpop.f32.mrf.mxu0
  %v3085 = vadd.f32 %v3032, %v3084
  %3086 = vmatmul.f32.gmra.mxu0 %v1313
  %v3087 = vpop.f32.mrf.mxu0
  %v3088 = vadd.f32 %v3035, %v3087
  %3089 = vmatmul.f32.gmra.mxu0 %v1316
  %v3090 = vpop.f32.mrf.mxu0
  %v3091 = vadd.f32 %v3038, %v3090
  %3092 = vmatmul.f32.gmra.mxu0 %v1319
  %v3093 = vpop.f32.mrf.mxu0
  %v3094 = vadd.f32 %v3041, %v3093
  %3095 = vdwg.mxu0
  %3096 = vmatpush.msra.mxu0 %v692
  %3097 = vmatpush.msra.mxu0 %v689
  %3098 = vmatpush.msra.mxu0 %v686
  %3099 = vmatpush.msra.mxu0 %v683
  %3100 = vmatpush.msra.mxu0 %v680
  %3101 = vmatpush.msra.mxu0 %v677
  %3102 = vmatpush.msra.mxu0 %v674
  %3103 = vmatpush.msra.mxu0 %v671
  %3104 = vmatpush.msra.mxu0 %v668
  %3105 = vmatpush.msra.mxu0 %v665
  %3106 = vmatpush.msra.mxu0 %v662
  %3107 = vmatpush.msra.mxu0 %v659
  %3108 = vmatpush.msra.mxu0 %v656
  %3109 = vmatpush.msra.mxu0 %v653
  %3110 = vmatpush.msra.mxu0 %v650
  %3111 = vmatpush.msra.mxu0 %v647
  %3112 = vmatmul.f32.gmra.mxu0 %v2079
  %v3113 = vpop.f32.mrf.mxu0
  %v3114 = vadd.f32 0.0, %v3113
  %3115 = vmatmul.f32.gmra.mxu0 %v2081
  %v3116 = vpop.f32.mrf.mxu0
  %v3117 = vadd.f32 0.0, %v3116
  %3118 = vmatmul.f32.gmra.mxu0 %v2083
  %v3119 = vpop.f32.mrf.mxu0
  %v3120 = vadd.f32 0.0, %v3119
  %3121 = vmatmul.f32.gmra.mxu0 %v2085
  %v3122 = vpop.f32.mrf.mxu0
  %v3123 = vadd.f32 0.0, %v3122
  %3124 = vmatmul.f32.gmra.mxu0 %v2087
  %v3125 = vpop.f32.mrf.mxu0
  %v3126 = vadd.f32 0.0, %v3125
  %3127 = vmatmul.f32.gmra.mxu0 %v2089
  %v3128 = vpop.f32.mrf.mxu0
  %v3129 = vadd.f32 0.0, %v3128
  %3130 = vmatmul.f32.gmra.mxu0 %v2091
  %v3131 = vpop.f32.mrf.mxu0
  %v3132 = vadd.f32 0.0, %v3131
  %3133 = vmatmul.f32.gmra.mxu0 %v2093
  %v3134 = vpop.f32.mrf.mxu0
  %v3135 = vadd.f32 0.0, %v3134
  %3136 = vmatmul.f32.gmra.mxu0 %v2095
  %v3137 = vpop.f32.mrf.mxu0
  %v3138 = vadd.f32 0.0, %v3137
  %3139 = vmatmul.f32.gmra.mxu0 %v2097
  %v3140 = vpop.f32.mrf.mxu0
  %v3141 = vadd.f32 0.0, %v3140
  %3142 = vmatmul.f32.gmra.mxu0 %v2099
  %v3143 = vpop.f32.mrf.mxu0
  %v3144 = vadd.f32 0.0, %v3143
  %3145 = vmatmul.f32.gmra.mxu0 %v2101
  %v3146 = vpop.f32.mrf.mxu0
  %v3147 = vadd.f32 0.0, %v3146
  %3148 = vdwg.mxu0
  %3149 = vmatpush.msra.mxu0 0.0
  %3150 = vmatpush.msra.mxu0 0.0
  %3151 = vmatpush.msra.mxu0 0.0
  %3152 = vmatpush.msra.mxu0 0.0
  %3153 = vmatpush.msra.mxu0 %v728
  %3154 = vmatpush.msra.mxu0 %v725
  %3155 = vmatpush.msra.mxu0 %v722
  %3156 = vmatpush.msra.mxu0 %v719
  %3157 = vmatpush.msra.mxu0 %v716
  %3158 = vmatpush.msra.mxu0 %v713
  %3159 = vmatpush.msra.mxu0 %v710
  %3160 = vmatpush.msra.mxu0 %v707
  %3161 = vmatpush.msra.mxu0 %v704
  %3162 = vmatpush.msra.mxu0 %v701
  %3163 = vmatpush.msra.mxu0 %v698
  %3164 = vmatpush.msra.mxu0 %v695
  %3165 = vmatmul.f32.gmra.mxu0 %v2104
  %v3166 = vpop.f32.mrf.mxu0
  %v3167 = vadd.f32 %v3114, %v3166
  %3168 = vmatmul.f32.gmra.mxu0 %v2107
  %v3169 = vpop.f32.mrf.mxu0
  %v3170 = vadd.f32 %v3117, %v3169
  %3171 = vmatmul.f32.gmra.mxu0 %v2110
  %v3172 = vpop.f32.mrf.mxu0
  %v3173 = vadd.f32 %v3120, %v3172
  %3174 = vmatmul.f32.gmra.mxu0 %v2113
  %v3175 = vpop.f32.mrf.mxu0
  %v3176 = vadd.f32 %v3123, %v3175
  %3177 = vmatmul.f32.gmra.mxu0 %v2116
  %v3178 = vpop.f32.mrf.mxu0
  %v3179 = vadd.f32 %v3126, %v3178
  %3180 = vmatmul.f32.gmra.mxu0 %v2119
  %v3181 = vpop.f32.mrf.mxu0
  %v3182 = vadd.f32 %v3129, %v3181
  %3183 = vmatmul.f32.gmra.mxu0 %v2122
  %v3184 = vpop.f32.mrf.mxu0
  %v3185 = vadd.f32 %v3132, %v3184
  %3186 = vmatmul.f32.gmra.mxu0 %v2125
  %v3187 = vpop.f32.mrf.mxu0
  %v3188 = vadd.f32 %v3135, %v3187
  %3189 = vmatmul.f32.gmra.mxu0 %v2128
  %v3190 = vpop.f32.mrf.mxu0
  %v3191 = vadd.f32 %v3138, %v3190
  %3192 = vmatmul.f32.gmra.mxu0 %v2131
  %v3193 = vpop.f32.mrf.mxu0
  %v3194 = vadd.f32 %v3141, %v3193
  %3195 = vmatmul.f32.gmra.mxu0 %v2134
  %v3196 = vpop.f32.mrf.mxu0
  %v3197 = vadd.f32 %v3144, %v3196
  %3198 = vmatmul.f32.gmra.mxu0 %v2137
  %v3199 = vpop.f32.mrf.mxu0
  %v3200 = vadd.f32 %v3147, %v3199
  %3201 = vdwg.mxu0
  %3202 = vmatpush.msra.mxu0 %v793
  %3203 = vmatpush.msra.mxu0 %v790
  %3204 = vmatpush.msra.mxu0 %v787
  %3205 = vmatpush.msra.mxu0 %v784
  %3206 = vmatpush.msra.mxu0 %v781
  %3207 = vmatpush.msra.mxu0 %v778
  %3208 = vmatpush.msra.mxu0 %v775
  %3209 = vmatpush.msra.mxu0 %v772
  %3210 = vmatpush.msra.mxu0 %v769
  %3211 = vmatpush.msra.mxu0 %v766
  %3212 = vmatpush.msra.mxu0 %v763
  %3213 = vmatpush.msra.mxu0 %v760
  %3214 = vmatpush.msra.mxu0 %v757
  %3215 = vmatpush.msra.mxu0 %v754
  %3216 = vmatpush.msra.mxu0 %v751
  %3217 = vmatpush.msra.mxu0 %v748
  %3218 = vmatmul.f32.gmra.mxu0 %v2079
  %v3219 = vpop.f32.mrf.mxu0
  %v3220 = vadd.f32 0.0, %v3219
  %3221 = vmatmul.f32.gmra.mxu0 %v2081
  %v3222 = vpop.f32.mrf.mxu0
  %v3223 = vadd.f32 0.0, %v3222
  %3224 = vmatmul.f32.gmra.mxu0 %v2083
  %v3225 = vpop.f32.mrf.mxu0
  %v3226 = vadd.f32 0.0, %v3225
  %3227 = vmatmul.f32.gmra.mxu0 %v2085
  %v3228 = vpop.f32.mrf.mxu0
  %v3229 = vadd.f32 0.0, %v3228
  %3230 = vmatmul.f32.gmra.mxu0 %v2087
  %v3231 = vpop.f32.mrf.mxu0
  %v3232 = vadd.f32 0.0, %v3231
  %3233 = vmatmul.f32.gmra.mxu0 %v2089
  %v3234 = vpop.f32.mrf.mxu0
  %v3235 = vadd.f32 0.0, %v3234
  %3236 = vmatmul.f32.gmra.mxu0 %v2091
  %v3237 = vpop.f32.mrf.mxu0
  %v3238 = vadd.f32 0.0, %v3237
  %3239 = vmatmul.f32.gmra.mxu0 %v2093
  %v3240 = vpop.f32.mrf.mxu0
  %v3241 = vadd.f32 0.0, %v3240
  %3242 = vmatmul.f32.gmra.mxu0 %v2095
  %v3243 = vpop.f32.mrf.mxu0
  %v3244 = vadd.f32 0.0, %v3243
  %3245 = vmatmul.f32.gmra.mxu0 %v2097
  %v3246 = vpop.f32.mrf.mxu0
  %v3247 = vadd.f32 0.0, %v3246
  %3248 = vmatmul.f32.gmra.mxu0 %v2099
  %v3249 = vpop.f32.mrf.mxu0
  %v3250 = vadd.f32 0.0, %v3249
  %3251 = vmatmul.f32.gmra.mxu0 %v2101
  %v3252 = vpop.f32.mrf.mxu0
  %v3253 = vadd.f32 0.0, %v3252
  %3254 = vdwg.mxu0
  %3255 = vmatpush.msra.mxu0 0.0
  %3256 = vmatpush.msra.mxu0 0.0
  %3257 = vmatpush.msra.mxu0 0.0
  %3258 = vmatpush.msra.mxu0 0.0
  %3259 = vmatpush.msra.mxu0 %v829
  %3260 = vmatpush.msra.mxu0 %v826
  %3261 = vmatpush.msra.mxu0 %v823
  %3262 = vmatpush.msra.mxu0 %v820
  %3263 = vmatpush.msra.mxu0 %v817
  %3264 = vmatpush.msra.mxu0 %v814
  %3265 = vmatpush.msra.mxu0 %v811
  %3266 = vmatpush.msra.mxu0 %v808
  %3267 = vmatpush.msra.mxu0 %v805
  %3268 = vmatpush.msra.mxu0 %v802
  %3269 = vmatpush.msra.mxu0 %v799
  %3270 = vmatpush.msra.mxu0 %v796
  %3271 = vmatmul.f32.gmra.mxu0 %v2104
  %v3272 = vpop.f32.mrf.mxu0
  %v3273 = vadd.f32 %v3220, %v3272
  %3274 = vmatmul.f32.gmra.mxu0 %v2107
  %v3275 = vpop.f32.mrf.mxu0
  %v3276 = vadd.f32 %v3223, %v3275
  %3277 = vmatmul.f32.gmra.mxu0 %v2110
  %v3278 = vpop.f32.mrf.mxu0
  %v3279 = vadd.f32 %v3226, %v3278
  %3280 = vmatmul.f32.gmra.mxu0 %v2113
  %v3281 = vpop.f32.mrf.mxu0
  %v3282 = vadd.f32 %v3229, %v3281
  %3283 = vmatmul.f32.gmra.mxu0 %v2116
  %v3284 = vpop.f32.mrf.mxu0
  %v3285 = vadd.f32 %v3232, %v3284
  %3286 = vmatmul.f32.gmra.mxu0 %v2119
  %v3287 = vpop.f32.mrf.mxu0
  %v3288 = vadd.f32 %v3235, %v3287
  %3289 = vmatmul.f32.gmra.mxu0 %v2122
  %v3290 = vpop.f32.mrf.mxu0
  %v3291 = vadd.f32 %v3238, %v3290
  %3292 = vmatmul.f32.gmra.mxu0 %v2125
  %v3293 = vpop.f32.mrf.mxu0
  %v3294 = vadd.f32 %v3241, %v3293
  %3295 = vmatmul.f32.gmra.mxu0 %v2128
  %v3296 = vpop.f32.mrf.mxu0
  %v3297 = vadd.f32 %v3244, %v3296
  %3298 = vmatmul.f32.gmra.mxu0 %v2131
  %v3299 = vpop.f32.mrf.mxu0
  %v3300 = vadd.f32 %v3247, %v3299
  %3301 = vmatmul.f32.gmra.mxu0 %v2134
  %v3302 = vpop.f32.mrf.mxu0
  %v3303 = vadd.f32 %v3250, %v3302
  %3304 = vmatmul.f32.gmra.mxu0 %v2137
  %v3305 = vpop.f32.mrf.mxu0
  %v3306 = vadd.f32 %v3253, %v3305
  %3307 = vdwg.mxu0
  %v3308 = vadd.f32 %v2955, %v3167
  %v3309 = vadd.f32 %v3061, %v3273
  %v3310 = vadd.f32 %v2958, %v3170
  %v3311 = vadd.f32 %v3064, %v3276
  %v3312 = vadd.f32 %v2961, %v3173
  %v3313 = vadd.f32 %v3067, %v3279
  %v3314 = vadd.f32 %v2964, %v3176
  %v3315 = vadd.f32 %v3070, %v3282
  %v3316 = vadd.f32 %v2967, %v3179
  %v3317 = vadd.f32 %v3073, %v3285
  %v3318 = vadd.f32 %v2970, %v3182
  %v3319 = vadd.f32 %v3076, %v3288
  %v3320 = vadd.f32 %v2973, %v3185
  %v3321 = vadd.f32 %v3079, %v3291
  %v3322 = vadd.f32 %v2976, %v3188
  %v3323 = vadd.f32 %v3082, %v3294
  %v3324 = vadd.f32 %v2979, %v3191
  %v3325 = vadd.f32 %v3085, %v3297
  %v3326 = vadd.f32 %v2982, %v3194
  %v3327 = vadd.f32 %v3088, %v3300
  %v3328 = vadd.f32 %v2985, %v3197
  %v3329 = vadd.f32 %v3091, %v3303
  %v3330 = vadd.f32 %v2988, %v3200
  %v3331 = vadd.f32 %v3094, %v3306
  %3332 = vmatpush.msra.mxu0 %v894
  %3333 = vmatpush.msra.mxu0 %v891
  %3334 = vmatpush.msra.mxu0 %v888
  %3335 = vmatpush.msra.mxu0 %v885
  %3336 = vmatpush.msra.mxu0 %v882
  %3337 = vmatpush.msra.mxu0 %v879
  %3338 = vmatpush.msra.mxu0 %v876
  %3339 = vmatpush.msra.mxu0 %v873
  %3340 = vmatpush.msra.mxu0 %v870
  %3341 = vmatpush.msra.mxu0 %v867
  %3342 = vmatpush.msra.mxu0 %v864
  %3343 = vmatpush.msra.mxu0 %v861
  %3344 = vmatpush.msra.mxu0 %v858
  %3345 = vmatpush.msra.mxu0 %v855
  %3346 = vmatpush.msra.mxu0 %v852
  %3347 = vmatpush.msra.mxu0 %v849
  %3348 = vmatmul.f32.gmra.mxu0 %v2376
  %v3349 = vpop.f32.mrf.mxu0
  %v3350 = vadd.f32 0.0, %v3349
  %3351 = vmatmul.f32.gmra.mxu0 %v2378
  %v3352 = vpop.f32.mrf.mxu0
  %v3353 = vadd.f32 0.0, %v3352
  %3354 = vmatmul.f32.gmra.mxu0 %v2380
  %v3355 = vpop.f32.mrf.mxu0
  %v3356 = vadd.f32 0.0, %v3355
  %3357 = vmatmul.f32.gmra.mxu0 %v2382
  %v3358 = vpop.f32.mrf.mxu0
  %v3359 = vadd.f32 0.0, %v3358
  %3360 = vmatmul.f32.gmra.mxu0 %v2384
  %v3361 = vpop.f32.mrf.mxu0
  %v3362 = vadd.f32 0.0, %v3361
  %3363 = vmatmul.f32.gmra.mxu0 %v2386
  %v3364 = vpop.f32.mrf.mxu0
  %v3365 = vadd.f32 0.0, %v3364
  %3366 = vmatmul.f32.gmra.mxu0 %v2388
  %v3367 = vpop.f32.mrf.mxu0
  %v3368 = vadd.f32 0.0, %v3367
  %3369 = vmatmul.f32.gmra.mxu0 %v2390
  %v3370 = vpop.f32.mrf.mxu0
  %v3371 = vadd.f32 0.0, %v3370
  %3372 = vmatmul.f32.gmra.mxu0 %v2392
  %v3373 = vpop.f32.mrf.mxu0
  %v3374 = vadd.f32 0.0, %v3373
  %3375 = vmatmul.f32.gmra.mxu0 %v2394
  %v3376 = vpop.f32.mrf.mxu0
  %v3377 = vadd.f32 0.0, %v3376
  %3378 = vmatmul.f32.gmra.mxu0 %v2396
  %v3379 = vpop.f32.mrf.mxu0
  %v3380 = vadd.f32 0.0, %v3379
  %3381 = vmatmul.f32.gmra.mxu0 %v2398
  %v3382 = vpop.f32.mrf.mxu0
  %v3383 = vadd.f32 0.0, %v3382
  %3384 = vdwg.mxu0
  %3385 = vmatpush.msra.mxu0 0.0
  %3386 = vmatpush.msra.mxu0 0.0
  %3387 = vmatpush.msra.mxu0 0.0
  %3388 = vmatpush.msra.mxu0 0.0
  %3389 = vmatpush.msra.mxu0 %v930
  %3390 = vmatpush.msra.mxu0 %v927
  %3391 = vmatpush.msra.mxu0 %v924
  %3392 = vmatpush.msra.mxu0 %v921
  %3393 = vmatpush.msra.mxu0 %v918
  %3394 = vmatpush.msra.mxu0 %v915
  %3395 = vmatpush.msra.mxu0 %v912
  %3396 = vmatpush.msra.mxu0 %v909
  %3397 = vmatpush.msra.mxu0 %v906
  %3398 = vmatpush.msra.mxu0 %v903
  %3399 = vmatpush.msra.mxu0 %v900
  %3400 = vmatpush.msra.mxu0 %v897
  %3401 = vmatmul.f32.gmra.mxu0 %v2401
  %v3402 = vpop.f32.mrf.mxu0
  %v3403 = vadd.f32 %v3350, %v3402
  %3404 = vmatmul.f32.gmra.mxu0 %v2404
  %v3405 = vpop.f32.mrf.mxu0
  %v3406 = vadd.f32 %v3353, %v3405
  %3407 = vmatmul.f32.gmra.mxu0 %v2407
  %v3408 = vpop.f32.mrf.mxu0
  %v3409 = vadd.f32 %v3356, %v3408
  %3410 = vmatmul.f32.gmra.mxu0 %v2410
  %v3411 = vpop.f32.mrf.mxu0
  %v3412 = vadd.f32 %v3359, %v3411
  %3413 = vmatmul.f32.gmra.mxu0 %v2413
  %v3414 = vpop.f32.mrf.mxu0
  %v3415 = vadd.f32 %v3362, %v3414
  %3416 = vmatmul.f32.gmra.mxu0 %v2416
  %v3417 = vpop.f32.mrf.mxu0
  %v3418 = vadd.f32 %v3365, %v3417
  %3419 = vmatmul.f32.gmra.mxu0 %v2419
  %v3420 = vpop.f32.mrf.mxu0
  %v3421 = vadd.f32 %v3368, %v3420
  %3422 = vmatmul.f32.gmra.mxu0 %v2422
  %v3423 = vpop.f32.mrf.mxu0
  %v3424 = vadd.f32 %v3371, %v3423
  %3425 = vmatmul.f32.gmra.mxu0 %v2425
  %v3426 = vpop.f32.mrf.mxu0
  %v3427 = vadd.f32 %v3374, %v3426
  %3428 = vmatmul.f32.gmra.mxu0 %v2428
  %v3429 = vpop.f32.mrf.mxu0
  %v3430 = vadd.f32 %v3377, %v3429
  %3431 = vmatmul.f32.gmra.mxu0 %v2431
  %v3432 = vpop.f32.mrf.mxu0
  %v3433 = vadd.f32 %v3380, %v3432
  %3434 = vmatmul.f32.gmra.mxu0 %v2434
  %v3435 = vpop.f32.mrf.mxu0
  %v3436 = vadd.f32 %v3383, %v3435
  %3437 = vdwg.mxu0
  %3438 = vmatpush.msra.mxu0 %v995
  %3439 = vmatpush.msra.mxu0 %v992
  %3440 = vmatpush.msra.mxu0 %v989
  %3441 = vmatpush.msra.mxu0 %v986
  %3442 = vmatpush.msra.mxu0 %v983
  %3443 = vmatpush.msra.mxu0 %v980
  %3444 = vmatpush.msra.mxu0 %v977
  %3445 = vmatpush.msra.mxu0 %v974
  %3446 = vmatpush.msra.mxu0 %v971
  %3447 = vmatpush.msra.mxu0 %v968
  %3448 = vmatpush.msra.mxu0 %v965
  %3449 = vmatpush.msra.mxu0 %v962
  %3450 = vmatpush.msra.mxu0 %v959
  %3451 = vmatpush.msra.mxu0 %v956
  %3452 = vmatpush.msra.mxu0 %v953
  %3453 = vmatpush.msra.mxu0 %v950
  %3454 = vmatmul.f32.gmra.mxu0 %v2376
  %v3455 = vpop.f32.mrf.mxu0
  %v3456 = vadd.f32 0.0, %v3455
  %3457 = vmatmul.f32.gmra.mxu0 %v2378
  %v3458 = vpop.f32.mrf.mxu0
  %v3459 = vadd.f32 0.0, %v3458
  %3460 = vmatmul.f32.gmra.mxu0 %v2380
  %v3461 = vpop.f32.mrf.mxu0
  %v3462 = vadd.f32 0.0, %v3461
  %3463 = vmatmul.f32.gmra.mxu0 %v2382
  %v3464 = vpop.f32.mrf.mxu0
  %v3465 = vadd.f32 0.0, %v3464
  %3466 = vmatmul.f32.gmra.mxu0 %v2384
  %v3467 = vpop.f32.mrf.mxu0
  %v3468 = vadd.f32 0.0, %v3467
  %3469 = vmatmul.f32.gmra.mxu0 %v2386
  %v3470 = vpop.f32.mrf.mxu0
  %v3471 = vadd.f32 0.0, %v3470
  %3472 = vmatmul.f32.gmra.mxu0 %v2388
  %v3473 = vpop.f32.mrf.mxu0
  %v3474 = vadd.f32 0.0, %v3473
  %3475 = vmatmul.f32.gmra.mxu0 %v2390
  %v3476 = vpop.f32.mrf.mxu0
  %v3477 = vadd.f32 0.0, %v3476
  %3478 = vmatmul.f32.gmra.mxu0 %v2392
  %v3479 = vpop.f32.mrf.mxu0
  %v3480 = vadd.f32 0.0, %v3479
  %3481 = vmatmul.f32.gmra.mxu0 %v2394
  %v3482 = vpop.f32.mrf.mxu0
  %v3483 = vadd.f32 0.0, %v3482
  %3484 = vmatmul.f32.gmra.mxu0 %v2396
  %v3485 = vpop.f32.mrf.mxu0
  %v3486 = vadd.f32 0.0, %v3485
  %3487 = vmatmul.f32.gmra.mxu0 %v2398
  %v3488 = vpop.f32.mrf.mxu0
  %v3489 = vadd.f32 0.0, %v3488
  %3490 = vdwg.mxu0
  %3491 = vmatpush.msra.mxu0 0.0
  %3492 = vmatpush.msra.mxu0 0.0
  %3493 = vmatpush.msra.mxu0 0.0
  %3494 = vmatpush.msra.mxu0 0.0
  %3495 = vmatpush.msra.mxu0 %v1031
  %3496 = vmatpush.msra.mxu0 %v1028
  %3497 = vmatpush.msra.mxu0 %v1025
  %3498 = vmatpush.msra.mxu0 %v1022
  %3499 = vmatpush.msra.mxu0 %v1019
  %3500 = vmatpush.msra.mxu0 %v1016
  %3501 = vmatpush.msra.mxu0 %v1013
  %3502 = vmatpush.msra.mxu0 %v1010
  %3503 = vmatpush.msra.mxu0 %v1007
  %3504 = vmatpush.msra.mxu0 %v1004
  %3505 = vmatpush.msra.mxu0 %v1001
  %3506 = vmatpush.msra.mxu0 %v998
  %3507 = vmatmul.f32.gmra.mxu0 %v2401
  %v3508 = vpop.f32.mrf.mxu0
  %v3509 = vadd.f32 %v3456, %v3508
  %3510 = vmatmul.f32.gmra.mxu0 %v2404
  %v3511 = vpop.f32.mrf.mxu0
  %v3512 = vadd.f32 %v3459, %v3511
  %3513 = vmatmul.f32.gmra.mxu0 %v2407
  %v3514 = vpop.f32.mrf.mxu0
  %v3515 = vadd.f32 %v3462, %v3514
  %3516 = vmatmul.f32.gmra.mxu0 %v2410
  %v3517 = vpop.f32.mrf.mxu0
  %v3518 = vadd.f32 %v3465, %v3517
  %3519 = vmatmul.f32.gmra.mxu0 %v2413
  %v3520 = vpop.f32.mrf.mxu0
  %v3521 = vadd.f32 %v3468, %v3520
  %3522 = vmatmul.f32.gmra.mxu0 %v2416
  %v3523 = vpop.f32.mrf.mxu0
  %v3524 = vadd.f32 %v3471, %v3523
  %3525 = vmatmul.f32.gmra.mxu0 %v2419
  %v3526 = vpop.f32.mrf.mxu0
  %v3527 = vadd.f32 %v3474, %v3526
  %3528 = vmatmul.f32.gmra.mxu0 %v2422
  %v3529 = vpop.f32.mrf.mxu0
  %v3530 = vadd.f32 %v3477, %v3529
  %3531 = vmatmul.f32.gmra.mxu0 %v2425
  %v3532 = vpop.f32.mrf.mxu0
  %v3533 = vadd.f32 %v3480, %v3532
  %3534 = vmatmul.f32.gmra.mxu0 %v2428
  %v3535 = vpop.f32.mrf.mxu0
  %v3536 = vadd.f32 %v3483, %v3535
  %3537 = vmatmul.f32.gmra.mxu0 %v2431
  %v3538 = vpop.f32.mrf.mxu0
  %v3539 = vadd.f32 %v3486, %v3538
  %3540 = vmatmul.f32.gmra.mxu0 %v2434
  %v3541 = vpop.f32.mrf.mxu0
  %v3542 = vadd.f32 %v3489, %v3541
  %3543 = vdwg.mxu0
  %v3544 = vadd.f32 %v3308, %v3403
  %v3545 = vadd.f32 %v3309, %v3509
  %v3546 = vadd.f32 %v3310, %v3406
  %v3547 = vadd.f32 %v3311, %v3512
  %v3548 = vadd.f32 %v3312, %v3409
  %v3549 = vadd.f32 %v3313, %v3515
  %v3550 = vadd.f32 %v3314, %v3412
  %v3551 = vadd.f32 %v3315, %v3518
  %v3552 = vadd.f32 %v3316, %v3415
  %v3553 = vadd.f32 %v3317, %v3521
  %v3554 = vadd.f32 %v3318, %v3418
  %v3555 = vadd.f32 %v3319, %v3524
  %v3556 = vadd.f32 %v3320, %v3421
  %v3557 = vadd.f32 %v3321, %v3527
  %v3558 = vadd.f32 %v3322, %v3424
  %v3559 = vadd.f32 %v3323, %v3530
  %v3560 = vadd.f32 %v3324, %v3427
  %v3561 = vadd.f32 %v3325, %v3533
  %v3562 = vadd.f32 %v3326, %v3430
  %v3563 = vadd.f32 %v3327, %v3536
  %v3564 = vadd.f32 %v3328, %v3433
  %v3565 = vadd.f32 %v3329, %v3539
  %v3566 = vadd.f32 %v3330, %v3436
  %v3567 = vadd.f32 %v3331, %v3542
  %s3568 = scalar_lea.vmem %s2, 960
  %v3569 = vld [vmem:[%s3568] sm:$0xff]
  %v3570 = vld [vmem:[%s3568 + $0x8] sm:$0xff]
  %v3571 = vld [vmem:[%s3568 + $0x10] sm:$0xff]
  %v3572 = vld [vmem:[%s3568 + $0x18] sm:$0xff]
  %v3573 = vld [vmem:[%s3568 + $0x20] sm:$0xff]
  %v3574 = vld [vmem:[%s3568 + $0x28] sm:$0xff]
  %v3575 = vld [vmem:[%s3568 + $0x30] sm:$0xff]
  %v3576 = vld [vmem:[%s3568 + $0x38] sm:$0xff]
  %v3577 = vld [vmem:[%s3568 + $0x40] sm:$0xff]
  %v3578 = vld [vmem:[%s3568 + $0x48] sm:$0xff]
  %v3579 = vld [vmem:[%s3568 + $0x50] sm:$0xff]
  %v3580 = vld [vmem:[%s3568 + $0x58] sm:$0xff]
  %v3581 = vld [vmem:[%s3568 + $0x60] sm:$0xff]
  %v3582 = vld [vmem:[%s3568 + $0x68] sm:$0xff]
  %v3583 = vld [vmem:[%s3568 + $0x70] sm:$0xff]
  %v3584 = vld [vmem:[%s3568 + $0x78] sm:$0xff]
  %v3585 = vld [vmem:[%s3568 + $0x80] sm:$0xff]
  %v3586 = vld [vmem:[%s3568 + $0x88] sm:$0xff]
  %v3587 = vld [vmem:[%s3568 + $0x90] sm:$0xff]
  %v3588 = vld [vmem:[%s3568 + $0x98] sm:$0xff]
  %v3589 = vld [vmem:[%s3568 + $0xa0] sm:$0xff]
  %v3590 = vld [vmem:[%s3568 + $0xa8] sm:$0xff]
  %v3591 = vld [vmem:[%s3568 + $0xb0] sm:$0xff]
  %v3592 = vld [vmem:[%s3568 + $0xb8] sm:$0xff]
  %v3594 = vsel %vm1284, %v3570, 0
  %v3597 = vsel %vm1284, %v3572, 0
  %v3600 = vsel %vm1284, %v3574, 0
  %v3603 = vsel %vm1284, %v3576, 0
  %v3606 = vsel %vm1284, %v3578, 0
  %v3609 = vsel %vm1284, %v3580, 0
  %v3612 = vsel %vm1284, %v3582, 0
  %v3615 = vsel %vm1284, %v3584, 0
  %v3618 = vsel %vm1284, %v3586, 0
  %v3621 = vsel %vm1284, %v3588, 0
  %v3624 = vsel %vm1284, %v3590, 0
  %v3627 = vsel %vm1284, %v3592, 0
  %3629 = vmatpush.msra.mxu0 %v1096
  %3630 = vmatpush.msra.mxu0 %v1093
  %3631 = vmatpush.msra.mxu0 %v1090
  %3632 = vmatpush.msra.mxu0 %v1087
  %3633 = vmatpush.msra.mxu0 %v1084
  %3634 = vmatpush.msra.mxu0 %v1081
  %3635 = vmatpush.msra.mxu0 %v1078
  %3636 = vmatpush.msra.mxu0 %v1075
  %3637 = vmatpush.msra.mxu0 %v1072
  %3638 = vmatpush.msra.mxu0 %v1069
  %3639 = vmatpush.msra.mxu0 %v1066
  %3640 = vmatpush.msra.mxu0 %v1063
  %3641 = vmatpush.msra.mxu0 %v1060
  %3642 = vmatpush.msra.mxu0 %v1057
  %3643 = vmatpush.msra.mxu0 %v1054
  %3644 = vmatpush.msra.mxu0 %v1051
  %3645 = vmatmul.f32.gmra.mxu0 %v3569
  %v3646 = vpop.f32.mrf.mxu0
  %v3647 = vadd.f32 0.0, %v3646
  %3648 = vmatmul.f32.gmra.mxu0 %v3571
  %v3649 = vpop.f32.mrf.mxu0
  %v3650 = vadd.f32 0.0, %v3649
  %3651 = vmatmul.f32.gmra.mxu0 %v3573
  %v3652 = vpop.f32.mrf.mxu0
  %v3653 = vadd.f32 0.0, %v3652
  %3654 = vmatmul.f32.gmra.mxu0 %v3575
  %v3655 = vpop.f32.mrf.mxu0
  %v3656 = vadd.f32 0.0, %v3655
  %3657 = vmatmul.f32.gmra.mxu0 %v3577
  %v3658 = vpop.f32.mrf.mxu0
  %v3659 = vadd.f32 0.0, %v3658
  %3660 = vmatmul.f32.gmra.mxu0 %v3579
  %v3661 = vpop.f32.mrf.mxu0
  %v3662 = vadd.f32 0.0, %v3661
  %3663 = vmatmul.f32.gmra.mxu0 %v3581
  %v3664 = vpop.f32.mrf.mxu0
  %v3665 = vadd.f32 0.0, %v3664
  %3666 = vmatmul.f32.gmra.mxu0 %v3583
  %v3667 = vpop.f32.mrf.mxu0
  %v3668 = vadd.f32 0.0, %v3667
  %3669 = vmatmul.f32.gmra.mxu0 %v3585
  %v3670 = vpop.f32.mrf.mxu0
  %v3671 = vadd.f32 0.0, %v3670
  %3672 = vmatmul.f32.gmra.mxu0 %v3587
  %v3673 = vpop.f32.mrf.mxu0
  %v3674 = vadd.f32 0.0, %v3673
  %3675 = vmatmul.f32.gmra.mxu0 %v3589
  %v3676 = vpop.f32.mrf.mxu0
  %v3677 = vadd.f32 0.0, %v3676
  %3678 = vmatmul.f32.gmra.mxu0 %v3591
  %v3679 = vpop.f32.mrf.mxu0
  %v3680 = vadd.f32 0.0, %v3679
  %3681 = vdwg.mxu0
  %3682 = vmatpush.msra.mxu0 0.0
  %3683 = vmatpush.msra.mxu0 0.0
  %3684 = vmatpush.msra.mxu0 0.0
  %3685 = vmatpush.msra.mxu0 0.0
  %3686 = vmatpush.msra.mxu0 %v1132
  %3687 = vmatpush.msra.mxu0 %v1129
  %3688 = vmatpush.msra.mxu0 %v1126
  %3689 = vmatpush.msra.mxu0 %v1123
  %3690 = vmatpush.msra.mxu0 %v1120
  %3691 = vmatpush.msra.mxu0 %v1117
  %3692 = vmatpush.msra.mxu0 %v1114
  %3693 = vmatpush.msra.mxu0 %v1111
  %3694 = vmatpush.msra.mxu0 %v1108
  %3695 = vmatpush.msra.mxu0 %v1105
  %3696 = vmatpush.msra.mxu0 %v1102
  %3697 = vmatpush.msra.mxu0 %v1099
  %3698 = vmatmul.f32.gmra.mxu0 %v3594
  %v3699 = vpop.f32.mrf.mxu0
  %v3700 = vadd.f32 %v3647, %v3699
  %3701 = vmatmul.f32.gmra.mxu0 %v3597
  %v3702 = vpop.f32.mrf.mxu0
  %v3703 = vadd.f32 %v3650, %v3702
  %3704 = vmatmul.f32.gmra.mxu0 %v3600
  %v3705 = vpop.f32.mrf.mxu0
  %v3706 = vadd.f32 %v3653, %v3705
  %3707 = vmatmul.f32.gmra.mxu0 %v3603
  %v3708 = vpop.f32.mrf.mxu0
  %v3709 = vadd.f32 %v3656, %v3708
  %3710 = vmatmul.f32.gmra.mxu0 %v3606
  %v3711 = vpop.f32.mrf.mxu0
  %v3712 = vadd.f32 %v3659, %v3711
  %3713 = vmatmul.f32.gmra.mxu0 %v3609
  %v3714 = vpop.f32.mrf.mxu0
  %v3715 = vadd.f32 %v3662, %v3714
  %3716 = vmatmul.f32.gmra.mxu0 %v3612
  %v3717 = vpop.f32.mrf.mxu0
  %v3718 = vadd.f32 %v3665, %v3717
  %3719 = vmatmul.f32.gmra.mxu0 %v3615
  %v3720 = vpop.f32.mrf.mxu0
  %v3721 = vadd.f32 %v3668, %v3720
  %3722 = vmatmul.f32.gmra.mxu0 %v3618
  %v3723 = vpop.f32.mrf.mxu0
  %v3724 = vadd.f32 %v3671, %v3723
  %3725 = vmatmul.f32.gmra.mxu0 %v3621
  %v3726 = vpop.f32.mrf.mxu0
  %v3727 = vadd.f32 %v3674, %v3726
  %3728 = vmatmul.f32.gmra.mxu0 %v3624
  %v3729 = vpop.f32.mrf.mxu0
  %v3730 = vadd.f32 %v3677, %v3729
  %3731 = vmatmul.f32.gmra.mxu0 %v3627
  %v3732 = vpop.f32.mrf.mxu0
  %v3733 = vadd.f32 %v3680, %v3732
  %3734 = vdwg.mxu0
  %3735 = vmatpush.msra.mxu0 %v1197
  %3736 = vmatpush.msra.mxu0 %v1194
  %3737 = vmatpush.msra.mxu0 %v1191
  %3738 = vmatpush.msra.mxu0 %v1188
  %3739 = vmatpush.msra.mxu0 %v1185
  %3740 = vmatpush.msra.mxu0 %v1182
  %3741 = vmatpush.msra.mxu0 %v1179
  %3742 = vmatpush.msra.mxu0 %v1176
  %3743 = vmatpush.msra.mxu0 %v1173
  %3744 = vmatpush.msra.mxu0 %v1170
  %3745 = vmatpush.msra.mxu0 %v1167
  %3746 = vmatpush.msra.mxu0 %v1164
  %3747 = vmatpush.msra.mxu0 %v1161
  %3748 = vmatpush.msra.mxu0 %v1158
  %3749 = vmatpush.msra.mxu0 %v1155
  %3750 = vmatpush.msra.mxu0 %v1152
  %3751 = vmatmul.f32.gmra.mxu0 %v3569
  %v3752 = vpop.f32.mrf.mxu0
  %v3753 = vadd.f32 0.0, %v3752
  %3754 = vmatmul.f32.gmra.mxu0 %v3571
  %v3755 = vpop.f32.mrf.mxu0
  %v3756 = vadd.f32 0.0, %v3755
  %3757 = vmatmul.f32.gmra.mxu0 %v3573
  %v3758 = vpop.f32.mrf.mxu0
  %v3759 = vadd.f32 0.0, %v3758
  %3760 = vmatmul.f32.gmra.mxu0 %v3575
  %v3761 = vpop.f32.mrf.mxu0
  %v3762 = vadd.f32 0.0, %v3761
  %3763 = vmatmul.f32.gmra.mxu0 %v3577
  %v3764 = vpop.f32.mrf.mxu0
  %v3765 = vadd.f32 0.0, %v3764
  %3766 = vmatmul.f32.gmra.mxu0 %v3579
  %v3767 = vpop.f32.mrf.mxu0
  %v3768 = vadd.f32 0.0, %v3767
  %3769 = vmatmul.f32.gmra.mxu0 %v3581
  %v3770 = vpop.f32.mrf.mxu0
  %v3771 = vadd.f32 0.0, %v3770
  %3772 = vmatmul.f32.gmra.mxu0 %v3583
  %v3773 = vpop.f32.mrf.mxu0
  %v3774 = vadd.f32 0.0, %v3773
  %3775 = vmatmul.f32.gmra.mxu0 %v3585
  %v3776 = vpop.f32.mrf.mxu0
  %v3777 = vadd.f32 0.0, %v3776
  %3778 = vmatmul.f32.gmra.mxu0 %v3587
  %v3779 = vpop.f32.mrf.mxu0
  %v3780 = vadd.f32 0.0, %v3779
  %3781 = vmatmul.f32.gmra.mxu0 %v3589
  %v3782 = vpop.f32.mrf.mxu0
  %v3783 = vadd.f32 0.0, %v3782
  %3784 = vmatmul.f32.gmra.mxu0 %v3591
  %v3785 = vpop.f32.mrf.mxu0
  %v3786 = vadd.f32 0.0, %v3785
  %3787 = vdwg.mxu0
  %3788 = vmatpush.msra.mxu0 0.0
  %3789 = vmatpush.msra.mxu0 0.0
  %3790 = vmatpush.msra.mxu0 0.0
  %3791 = vmatpush.msra.mxu0 0.0
  %3792 = vmatpush.msra.mxu0 %v1233
  %3793 = vmatpush.msra.mxu0 %v1230
  %3794 = vmatpush.msra.mxu0 %v1227
  %3795 = vmatpush.msra.mxu0 %v1224
  %3796 = vmatpush.msra.mxu0 %v1221
  %3797 = vmatpush.msra.mxu0 %v1218
  %3798 = vmatpush.msra.mxu0 %v1215
  %3799 = vmatpush.msra.mxu0 %v1212
  %3800 = vmatpush.msra.mxu0 %v1209
  %3801 = vmatpush.msra.mxu0 %v1206
  %3802 = vmatpush.msra.mxu0 %v1203
  %3803 = vmatpush.msra.mxu0 %v1200
  %3804 = vmatmul.f32.gmra.mxu0 %v3594
  %v3805 = vpop.f32.mrf.mxu0
  %v3806 = vadd.f32 %v3753, %v3805
  %3807 = vmatmul.f32.gmra.mxu0 %v3597
  %v3808 = vpop.f32.mrf.mxu0
  %v3809 = vadd.f32 %v3756, %v3808
  %3810 = vmatmul.f32.gmra.mxu0 %v3600
  %v3811 = vpop.f32.mrf.mxu0
  %v3812 = vadd.f32 %v3759, %v3811
  %3813 = vmatmul.f32.gmra.mxu0 %v3603
  %v3814 = vpop.f32.mrf.mxu0
  %v3815 = vadd.f32 %v3762, %v3814
  %3816 = vmatmul.f32.gmra.mxu0 %v3606
  %v3817 = vpop.f32.mrf.mxu0
  %v3818 = vadd.f32 %v3765, %v3817
  %3819 = vmatmul.f32.gmra.mxu0 %v3609
  %v3820 = vpop.f32.mrf.mxu0
  %v3821 = vadd.f32 %v3768, %v3820
  %3822 = vmatmul.f32.gmra.mxu0 %v3612
  %v3823 = vpop.f32.mrf.mxu0
  %v3824 = vadd.f32 %v3771, %v3823
  %3825 = vmatmul.f32.gmra.mxu0 %v3615
  %v3826 = vpop.f32.mrf.mxu0
  %v3827 = vadd.f32 %v3774, %v3826
  %3828 = vmatmul.f32.gmra.mxu0 %v3618
  %v3829 = vpop.f32.mrf.mxu0
  %v3830 = vadd.f32 %v3777, %v3829
  %3831 = vmatmul.f32.gmra.mxu0 %v3621
  %v3832 = vpop.f32.mrf.mxu0
  %v3833 = vadd.f32 %v3780, %v3832
  %3834 = vmatmul.f32.gmra.mxu0 %v3624
  %v3835 = vpop.f32.mrf.mxu0
  %v3836 = vadd.f32 %v3783, %v3835
  %3837 = vmatmul.f32.gmra.mxu0 %v3627
  %v3838 = vpop.f32.mrf.mxu0
  %v3839 = vadd.f32 %v3786, %v3838
  %3840 = vdwg.mxu0
  %v3841 = vadd.f32 %v3544, %v3700
  %v3842 = vadd.f32 %v3545, %v3806
  %v3843 = vadd.f32 %v3546, %v3703
  %v3844 = vadd.f32 %v3547, %v3809
  %v3845 = vadd.f32 %v3548, %v3706
  %v3846 = vadd.f32 %v3549, %v3812
  %v3847 = vadd.f32 %v3550, %v3709
  %v3848 = vadd.f32 %v3551, %v3815
  %v3849 = vadd.f32 %v3552, %v3712
  %v3850 = vadd.f32 %v3553, %v3818
  %v3851 = vadd.f32 %v3554, %v3715
  %v3852 = vadd.f32 %v3555, %v3821
  %v3853 = vadd.f32 %v3556, %v3718
  %v3854 = vadd.f32 %v3557, %v3824
  %v3855 = vadd.f32 %v3558, %v3721
  %v3856 = vadd.f32 %v3559, %v3827
  %v3857 = vadd.f32 %v3560, %v3724
  %v3858 = vadd.f32 %v3561, %v3830
  %v3859 = vadd.f32 %v3562, %v3727
  %v3860 = vadd.f32 %v3563, %v3833
  %v3861 = vadd.f32 %v3564, %v3730
  %v3862 = vadd.f32 %v3565, %v3836
  %v3863 = vadd.f32 %v3566, %v3733
  %v3864 = vadd.f32 %v3567, %v3839
  %v3865 = vmax.f32 %v2648, %v3841
  %v3866 = vmax.f32 %v2649, %v3842
  %v3867 = vmax.f32 %v2650, %v3843
  %v3868 = vmax.f32 %v2651, %v3844
  %v3869 = vmax.f32 %v2652, %v3845
  %v3870 = vmax.f32 %v2653, %v3846
  %v3871 = vmax.f32 %v2654, %v3847
  %v3872 = vmax.f32 %v2655, %v3848
  %v3873 = vmax.f32 %v2656, %v3849
  %v3874 = vmax.f32 %v2657, %v3850
  %v3875 = vmax.f32 %v2658, %v3851
  %v3876 = vmax.f32 %v2659, %v3852
  %v3877 = vmax.f32 %v2660, %v3853
  %v3878 = vmax.f32 %v2661, %v3854
  %v3879 = vmax.f32 %v2662, %v3855
  %v3880 = vmax.f32 %v2663, %v3856
  %v3881 = vmax.f32 %v2664, %v3857
  %v3882 = vmax.f32 %v2665, %v3858
  %v3883 = vmax.f32 %v2666, %v3859
  %v3884 = vmax.f32 %v2667, %v3860
  %v3885 = vmax.f32 %v2668, %v3861
  %v3886 = vmax.f32 %v2669, %v3862
  %v3887 = vmax.f32 %v2670, %v3863
  %v3888 = vmax.f32 %v2671, %v3864
  %v3889 = vmax.f32 %v3865, %v3866
  %v3890 = vmax.f32 %v3867, %v3868
  %v3891 = vmax.f32 %v3869, %v3870
  %v3892 = vmax.f32 %v3871, %v3872
  %v3893 = vmax.f32 %v3873, %v3874
  %v3894 = vmax.f32 %v3875, %v3876
  %v3895 = vmax.f32 %v3877, %v3878
  %v3896 = vmax.f32 %v3879, %v3880
  %v3897 = vmax.f32 %v3881, %v3882
  %v3898 = vmax.f32 %v3883, %v3884
  %v3899 = vmax.f32 %v3885, %v3886
  %v3900 = vmax.f32 %v3887, %v3888
  %v3901 = vld [vmem:[%s3] sm:$0x1]
  %v3903 = vperm.slane %v3901, 0
  %v3905 = vadd.f32 %v3889, %v3903
  %v3906 = vadd.f32 %v3890, %v3903
  %v3907 = vadd.f32 %v3891, %v3903
  %v3908 = vadd.f32 %v3892, %v3903
  %v3909 = vadd.f32 %v3893, %v3903
  %v3910 = vadd.f32 %v3894, %v3903
  %v3911 = vadd.f32 %v3895, %v3903
  %v3912 = vadd.f32 %v3896, %v3903
  %v3913 = vadd.f32 %v3897, %v3903
  %v3914 = vadd.f32 %v3898, %v3903
  %v3915 = vadd.f32 %v3899, %v3903
  %v3916 = vadd.f32 %v3900, %v3903
  %v3917 = vmax.f32 %v3905, 0.0
  %v3918 = vmax.f32 %v3906, 0.0
  %v3919 = vmax.f32 %v3907, 0.0
  %v3920 = vmax.f32 %v3908, 0.0
  %v3921 = vmax.f32 %v3909, 0.0
  %v3922 = vmax.f32 %v3910, 0.0
  %v3923 = vmax.f32 %v3911, 0.0
  %v3924 = vmax.f32 %v3912, 0.0
  %v3925 = vmax.f32 %v3913, 0.0
  %v3926 = vmax.f32 %v3914, 0.0
  %v3927 = vmax.f32 %v3915, 0.0
  %v3928 = vmax.f32 %v3916, 0.0
  %v3929 = vld [vmem:[%s4] sm:$0xff]
  %v3930 = vld [vmem:[%s4 + $0x8] sm:$0xff]
  %v3931 = vld [vmem:[%s4 + $0x10] sm:$0xff]
  %v3932 = vld [vmem:[%s4 + $0x18] sm:$0xff]
  %v3933 = vld [vmem:[%s4 + $0x20] sm:$0xff]
  %v3934 = vld [vmem:[%s4 + $0x28] sm:$0xff]
  %v3935 = vld [vmem:[%s4 + $0x30] sm:$0xff]
  %v3936 = vld [vmem:[%s4 + $0x38] sm:$0xff]
  %v3937 = vld [vmem:[%s4 + $0x40] sm:$0xff]
  %v3938 = vld [vmem:[%s4 + $0x48] sm:$0xff]
  %v3939 = vld [vmem:[%s4 + $0x50] sm:$0xff]
  %v3940 = vld [vmem:[%s4 + $0x58] sm:$0xff]
  %v3941 = vld [vmem:[%s4 + $0x60] sm:$0xff]
  %v3942 = vld [vmem:[%s4 + $0x68] sm:$0xff]
  %v3943 = vld [vmem:[%s4 + $0x70] sm:$0xff]
  %v3944 = vld [vmem:[%s4 + $0x78] sm:$0xff]
  %v3945 = vld [vmem:[%s4 + $0x80] sm:$0xff]
  %v3946 = vld [vmem:[%s4 + $0x88] sm:$0xff]
  %v3947 = vld [vmem:[%s4 + $0x90] sm:$0xff]
  %v3948 = vld [vmem:[%s4 + $0x98] sm:$0xff]
  %v3949 = vld [vmem:[%s4 + $0xa0] sm:$0xff]
  %v3950 = vld [vmem:[%s4 + $0xa8] sm:$0xff]
  %v3951 = vld [vmem:[%s4 + $0xb0] sm:$0xff]
  %v3952 = vld [vmem:[%s4 + $0xb8] sm:$0xff]
  %v3953 = vld [vmem:[%s4 + $0xc0] sm:$0xff]
  %v3954 = vld [vmem:[%s4 + $0xc8] sm:$0xff]
  %v3955 = vld [vmem:[%s4 + $0xd0] sm:$0xff]
  %v3956 = vld [vmem:[%s4 + $0xd8] sm:$0xff]
  %v3957 = vld [vmem:[%s4 + $0xe0] sm:$0xff]
  %v3958 = vld [vmem:[%s4 + $0xe8] sm:$0xff]
  %v3959 = vld [vmem:[%s4 + $0xf0] sm:$0xff]
  %v3960 = vld [vmem:[%s4 + $0xf8] sm:$0xff]
  %v3961 = vld [vmem:[%s4 + $0x100] sm:$0xff]
  %v3962 = vld [vmem:[%s4 + $0x108] sm:$0xff]
  %v3963 = vld [vmem:[%s4 + $0x110] sm:$0xff]
  %v3964 = vld [vmem:[%s4 + $0x118] sm:$0xff]
  %v3965 = vld [vmem:[%s4 + $0x120] sm:$0xff]
  %v3966 = vld [vmem:[%s4 + $0x128] sm:$0xff]
  %v3967 = vld [vmem:[%s4 + $0x130] sm:$0xff]
  %v3968 = vld [vmem:[%s4 + $0x138] sm:$0xff]
  %v3969 = vld [vmem:[%s4 + $0x140] sm:$0xff]
  %v3970 = vld [vmem:[%s4 + $0x148] sm:$0xff]
  %v3971 = vld [vmem:[%s4 + $0x150] sm:$0xff]
  %v3972 = vld [vmem:[%s4 + $0x158] sm:$0xff]
  %v3973 = vld [vmem:[%s4 + $0x160] sm:$0xff]
  %v3974 = vld [vmem:[%s4 + $0x168] sm:$0xff]
  %v3975 = vld [vmem:[%s4 + $0x170] sm:$0xff]
  %v3976 = vld [vmem:[%s4 + $0x178] sm:$0xff]
  %v3977 = vld [vmem:[%s4 + $0x180] sm:$0xff]
  %v3978 = vld [vmem:[%s4 + $0x188] sm:$0xff]
  %v3979 = vld [vmem:[%s4 + $0x190] sm:$0xff]
  %v3980 = vld [vmem:[%s4 + $0x198] sm:$0xff]
  %v3981 = vld [vmem:[%s4 + $0x1a0] sm:$0xff]
  %v3982 = vld [vmem:[%s4 + $0x1a8] sm:$0xff]
  %v3983 = vld [vmem:[%s4 + $0x1b0] sm:$0xff]
  %v3984 = vld [vmem:[%s4 + $0x1b8] sm:$0xff]
  %v3985 = vld [vmem:[%s4 + $0x1c0] sm:$0xff]
  %v3986 = vld [vmem:[%s4 + $0x1c8] sm:$0xff]
  %v3987 = vld [vmem:[%s4 + $0x1d0] sm:$0xff]
  %v3988 = vld [vmem:[%s4 + $0x1d8] sm:$0xff]
  %v3989 = vld [vmem:[%s4 + $0x1e0] sm:$0xff]
  %v3990 = vld [vmem:[%s4 + $0x1e8] sm:$0xff]
  %v3991 = vld [vmem:[%s4 + $0x1f0] sm:$0xff]
  %v3992 = vld [vmem:[%s4 + $0x1f8] sm:$0xff]
  %v3993 = vld [vmem:[%s4 + $0x200] sm:$0xff]
  %v3994 = vld [vmem:[%s4 + $0x208] sm:$0xff]
  %v3995 = vld [vmem:[%s4 + $0x210] sm:$0xff]
  %v3996 = vld [vmem:[%s4 + $0x218] sm:$0xff]
  %v3997 = vld [vmem:[%s4 + $0x220] sm:$0xff]
  %v3998 = vld [vmem:[%s4 + $0x228] sm:$0xff]
  %v3999 = vld [vmem:[%s4 + $0x230] sm:$0xff]
  %v4000 = vld [vmem:[%s4 + $0x238] sm:$0xff]
  %v4001 = vld [vmem:[%s4 + $0x240] sm:$0xff]
  %v4002 = vld [vmem:[%s4 + $0x248] sm:$0xff]
  %v4003 = vld [vmem:[%s4 + $0x250] sm:$0xff]
  %v4004 = vld [vmem:[%s4 + $0x258] sm:$0xff]
  %v4005 = vld [vmem:[%s4 + $0x260] sm:$0xff]
  %v4006 = vld [vmem:[%s4 + $0x268] sm:$0xff]
  %v4007 = vld [vmem:[%s4 + $0x270] sm:$0xff]
  %v4008 = vld [vmem:[%s4 + $0x278] sm:$0xff]
  %v4009 = vld [vmem:[%s4 + $0x280] sm:$0xff]
  %v4010 = vld [vmem:[%s4 + $0x288] sm:$0xff]
  %v4011 = vld [vmem:[%s4 + $0x290] sm:$0xff]
  %v4012 = vld [vmem:[%s4 + $0x298] sm:$0xff]
  %v4013 = vld [vmem:[%s4 + $0x2a0] sm:$0xff]
  %v4014 = vld [vmem:[%s4 + $0x2a8] sm:$0xff]
  %v4015 = vld [vmem:[%s4 + $0x2b0] sm:$0xff]
  %v4016 = vld [vmem:[%s4 + $0x2b8] sm:$0xff]
  %v4017 = vld [vmem:[%s4 + $0x2c0] sm:$0xff]
  %v4018 = vld [vmem:[%s4 + $0x2c8] sm:$0xff]
  %v4019 = vld [vmem:[%s4 + $0x2d0] sm:$0xff]
  %v4020 = vld [vmem:[%s4 + $0x2d8] sm:$0xff]
  %v4021 = vld [vmem:[%s4 + $0x2e0] sm:$0xff]
  %v4022 = vld [vmem:[%s4 + $0x2e8] sm:$0xff]
  %v4023 = vld [vmem:[%s4 + $0x2f0] sm:$0xff]
  %v4024 = vld [vmem:[%s4 + $0x2f8] sm:$0xff]
  %v4025 = vld [vmem:[%s4 + $0x300] sm:$0xff]
  %v4026 = vld [vmem:[%s4 + $0x308] sm:$0xff]
  %v4027 = vld [vmem:[%s4 + $0x310] sm:$0xff]
  %v4028 = vld [vmem:[%s4 + $0x318] sm:$0xff]
  %v4029 = vld [vmem:[%s4 + $0x320] sm:$0xff]
  %v4030 = vld [vmem:[%s4 + $0x328] sm:$0xff]
  %v4031 = vld [vmem:[%s4 + $0x330] sm:$0xff]
  %v4032 = vld [vmem:[%s4 + $0x338] sm:$0xff]
  %v4033 = vld [vmem:[%s4 + $0x340] sm:$0xff]
  %v4034 = vld [vmem:[%s4 + $0x348] sm:$0xff]
  %v4035 = vld [vmem:[%s4 + $0x350] sm:$0xff]
  %v4036 = vld [vmem:[%s4 + $0x358] sm:$0xff]
  %v4037 = vld [vmem:[%s4 + $0x360] sm:$0xff]
  %v4038 = vld [vmem:[%s4 + $0x368] sm:$0xff]
  %v4039 = vld [vmem:[%s4 + $0x370] sm:$0xff]
  %v4040 = vld [vmem:[%s4 + $0x378] sm:$0xff]
  %v4041 = vld [vmem:[%s4 + $0x380] sm:$0xff]
  %v4042 = vld [vmem:[%s4 + $0x388] sm:$0xff]
  %v4043 = vld [vmem:[%s4 + $0x390] sm:$0xff]
  %v4044 = vld [vmem:[%s4 + $0x398] sm:$0xff]
  %v4045 = vld [vmem:[%s4 + $0x3a0] sm:$0xff]
  %v4046 = vld [vmem:[%s4 + $0x3a8] sm:$0xff]
  %v4047 = vld [vmem:[%s4 + $0x3b0] sm:$0xff]
  %v4048 = vld [vmem:[%s4 + $0x3b8] sm:$0xff]
  %v4049 = vld [vmem:[%s4 + $0x3c0] sm:$0xff]
  %v4050 = vld [vmem:[%s4 + $0x3c8] sm:$0xff]
  %v4051 = vld [vmem:[%s4 + $0x3d0] sm:$0xff]
  %v4052 = vld [vmem:[%s4 + $0x3d8] sm:$0xff]
  %v4053 = vld [vmem:[%s4 + $0x3e0] sm:$0xff]
  %v4054 = vld [vmem:[%s4 + $0x3e8] sm:$0xff]
  %v4055 = vld [vmem:[%s4 + $0x3f0] sm:$0xff]
  %v4056 = vld [vmem:[%s4 + $0x3f8] sm:$0xff]
  %v4057 = vld [vmem:[%s4 + $0x400] sm:$0xff]
  %v4058 = vld [vmem:[%s4 + $0x408] sm:$0xff]
  %v4059 = vld [vmem:[%s4 + $0x410] sm:$0xff]
  %v4060 = vld [vmem:[%s4 + $0x418] sm:$0xff]
  %v4061 = vld [vmem:[%s4 + $0x420] sm:$0xff]
  %v4062 = vld [vmem:[%s4 + $0x428] sm:$0xff]
  %v4063 = vld [vmem:[%s4 + $0x430] sm:$0xff]
  %v4064 = vld [vmem:[%s4 + $0x438] sm:$0xff]
  %v4065 = vld [vmem:[%s4 + $0x440] sm:$0xff]
  %v4066 = vld [vmem:[%s4 + $0x448] sm:$0xff]
  %v4067 = vld [vmem:[%s4 + $0x450] sm:$0xff]
  %v4068 = vld [vmem:[%s4 + $0x458] sm:$0xff]
  %v4069 = vld [vmem:[%s4 + $0x460] sm:$0xff]
  %v4070 = vld [vmem:[%s4 + $0x468] sm:$0xff]
  %v4071 = vld [vmem:[%s4 + $0x470] sm:$0xff]
  %v4072 = vld [vmem:[%s4 + $0x478] sm:$0xff]
  %v4073 = vld [vmem:[%s4 + $0x480] sm:$0xff]
  %v4074 = vld [vmem:[%s4 + $0x488] sm:$0xff]
  %v4075 = vld [vmem:[%s4 + $0x490] sm:$0xff]
  %v4076 = vld [vmem:[%s4 + $0x498] sm:$0xff]
  %v4077 = vld [vmem:[%s4 + $0x4a0] sm:$0xff]
  %v4078 = vld [vmem:[%s4 + $0x4a8] sm:$0xff]
  %v4079 = vld [vmem:[%s4 + $0x4b0] sm:$0xff]
  %v4080 = vld [vmem:[%s4 + $0x4b8] sm:$0xff]
  %v4081 = vld [vmem:[%s4 + $0x4c0] sm:$0xff]
  %v4082 = vld [vmem:[%s4 + $0x4c8] sm:$0xff]
  %v4083 = vld [vmem:[%s4 + $0x4d0] sm:$0xff]
  %v4084 = vld [vmem:[%s4 + $0x4d8] sm:$0xff]
  %v4085 = vld [vmem:[%s4 + $0x4e0] sm:$0xff]
  %v4086 = vld [vmem:[%s4 + $0x4e8] sm:$0xff]
  %v4087 = vld [vmem:[%s4 + $0x4f0] sm:$0xff]
  %v4088 = vld [vmem:[%s4 + $0x4f8] sm:$0xff]
  %4089 = vmatpush.msra.mxu0 %v4079
  %4090 = vmatpush.msra.mxu0 %v4069
  %4091 = vmatpush.msra.mxu0 %v4059
  %4092 = vmatpush.msra.mxu0 %v4049
  %4093 = vmatpush.msra.mxu0 %v4039
  %4094 = vmatpush.msra.mxu0 %v4029
  %4095 = vmatpush.msra.mxu0 %v4019
  %4096 = vmatpush.msra.mxu0 %v4009
  %4097 = vmatpush.msra.mxu0 %v3999
  %4098 = vmatpush.msra.mxu0 %v3989
  %4099 = vmatpush.msra.mxu0 %v3979
  %4100 = vmatpush.msra.mxu0 %v3969
  %4101 = vmatpush.msra.mxu0 %v3959
  %4102 = vmatpush.msra.mxu0 %v3949
  %4103 = vmatpush.msra.mxu0 %v3939
  %4104 = vmatpush.msra.mxu0 %v3929
  %4105 = vmatmul.f32.gmra.mxu0 %v3917
  %v4106 = vpop.f32.mrf.mxu0
  %v4107 = vadd.f32 0.0, %v4106
  %4108 = vmatmul.f32.gmra.mxu0 %v3918
  %v4109 = vpop.f32.mrf.mxu0
  %v4110 = vadd.f32 0.0, %v4109
  %4111 = vmatmul.f32.gmra.mxu0 %v3919
  %v4112 = vpop.f32.mrf.mxu0
  %v4113 = vadd.f32 0.0, %v4112
  %4114 = vmatmul.f32.gmra.mxu0 %v3920
  %v4115 = vpop.f32.mrf.mxu0
  %v4116 = vadd.f32 0.0, %v4115
  %4117 = vmatmul.f32.gmra.mxu0 %v3921
  %v4118 = vpop.f32.mrf.mxu0
  %v4119 = vadd.f32 0.0, %v4118
  %4120 = vmatmul.f32.gmra.mxu0 %v3922
  %v4121 = vpop.f32.mrf.mxu0
  %v4122 = vadd.f32 0.0, %v4121
  %4123 = vmatmul.f32.gmra.mxu0 %v3923
  %v4124 = vpop.f32.mrf.mxu0
  %v4125 = vadd.f32 0.0, %v4124
  %4126 = vmatmul.f32.gmra.mxu0 %v3924
  %v4127 = vpop.f32.mrf.mxu0
  %v4128 = vadd.f32 0.0, %v4127
  %4129 = vmatmul.f32.gmra.mxu0 %v3925
  %v4130 = vpop.f32.mrf.mxu0
  %v4131 = vadd.f32 0.0, %v4130
  %4132 = vmatmul.f32.gmra.mxu0 %v3926
  %v4133 = vpop.f32.mrf.mxu0
  %v4134 = vadd.f32 0.0, %v4133
  %4135 = vmatmul.f32.gmra.mxu0 %v3927
  %v4136 = vpop.f32.mrf.mxu0
  %v4137 = vadd.f32 0.0, %v4136
  %4138 = vmatmul.f32.gmra.mxu0 %v3928
  %v4139 = vpop.f32.mrf.mxu0
  %v4140 = vadd.f32 0.0, %v4139
  %4141 = vdwg.mxu0
  %4142 = vmatpush.msra.mxu0 %v4080
  %4143 = vmatpush.msra.mxu0 %v4070
  %4144 = vmatpush.msra.mxu0 %v4060
  %4145 = vmatpush.msra.mxu0 %v4050
  %4146 = vmatpush.msra.mxu0 %v4040
  %4147 = vmatpush.msra.mxu0 %v4030
  %4148 = vmatpush.msra.mxu0 %v4020
  %4149 = vmatpush.msra.mxu0 %v4010
  %4150 = vmatpush.msra.mxu0 %v4000
  %4151 = vmatpush.msra.mxu0 %v3990
  %4152 = vmatpush.msra.mxu0 %v3980
  %4153 = vmatpush.msra.mxu0 %v3970
  %4154 = vmatpush.msra.mxu0 %v3960
  %4155 = vmatpush.msra.mxu0 %v3950
  %4156 = vmatpush.msra.mxu0 %v3940
  %4157 = vmatpush.msra.mxu0 %v3930
  %4158 = vmatmul.f32.gmra.mxu0 %v3917
  %v4159 = vpop.f32.mrf.mxu0
  %v4160 = vadd.f32 0.0, %v4159
  %4161 = vmatmul.f32.gmra.mxu0 %v3918
  %v4162 = vpop.f32.mrf.mxu0
  %v4163 = vadd.f32 0.0, %v4162
  %4164 = vmatmul.f32.gmra.mxu0 %v3919
  %v4165 = vpop.f32.mrf.mxu0
  %v4166 = vadd.f32 0.0, %v4165
  %4167 = vmatmul.f32.gmra.mxu0 %v3920
  %v4168 = vpop.f32.mrf.mxu0
  %v4169 = vadd.f32 0.0, %v4168
  %4170 = vmatmul.f32.gmra.mxu0 %v3921
  %v4171 = vpop.f32.mrf.mxu0
  %v4172 = vadd.f32 0.0, %v4171
  %4173 = vmatmul.f32.gmra.mxu0 %v3922
  %v4174 = vpop.f32.mrf.mxu0
  %v4175 = vadd.f32 0.0, %v4174
  %4176 = vmatmul.f32.gmra.mxu0 %v3923
  %v4177 = vpop.f32.mrf.mxu0
  %v4178 = vadd.f32 0.0, %v4177
  %4179 = vmatmul.f32.gmra.mxu0 %v3924
  %v4180 = vpop.f32.mrf.mxu0
  %v4181 = vadd.f32 0.0, %v4180
  %4182 = vmatmul.f32.gmra.mxu0 %v3925
  %v4183 = vpop.f32.mrf.mxu0
  %v4184 = vadd.f32 0.0, %v4183
  %4185 = vmatmul.f32.gmra.mxu0 %v3926
  %v4186 = vpop.f32.mrf.mxu0
  %v4187 = vadd.f32 0.0, %v4186
  %4188 = vmatmul.f32.gmra.mxu0 %v3927
  %v4189 = vpop.f32.mrf.mxu0
  %v4190 = vadd.f32 0.0, %v4189
  %4191 = vmatmul.f32.gmra.mxu0 %v3928
  %v4192 = vpop.f32.mrf.mxu0
  %v4193 = vadd.f32 0.0, %v4192
  %4194 = vdwg.mxu0
  %4195 = vmatpush.msra.mxu0 %v4081
  %4196 = vmatpush.msra.mxu0 %v4071
  %4197 = vmatpush.msra.mxu0 %v4061
  %4198 = vmatpush.msra.mxu0 %v4051
  %4199 = vmatpush.msra.mxu0 %v4041
  %4200 = vmatpush.msra.mxu0 %v4031
  %4201 = vmatpush.msra.mxu0 %v4021
  %4202 = vmatpush.msra.mxu0 %v4011
  %4203 = vmatpush.msra.mxu0 %v4001
  %4204 = vmatpush.msra.mxu0 %v3991
  %4205 = vmatpush.msra.mxu0 %v3981
  %4206 = vmatpush.msra.mxu0 %v3971
  %4207 = vmatpush.msra.mxu0 %v3961
  %4208 = vmatpush.msra.mxu0 %v3951
  %4209 = vmatpush.msra.mxu0 %v3941
  %4210 = vmatpush.msra.mxu0 %v3931
  %4211 = vmatmul.f32.gmra.mxu0 %v3917
  %v4212 = vpop.f32.mrf.mxu0
  %v4213 = vadd.f32 0.0, %v4212
  %4214 = vmatmul.f32.gmra.mxu0 %v3918
  %v4215 = vpop.f32.mrf.mxu0
  %v4216 = vadd.f32 0.0, %v4215
  %4217 = vmatmul.f32.gmra.mxu0 %v3919
  %v4218 = vpop.f32.mrf.mxu0
  %v4219 = vadd.f32 0.0, %v4218
  %4220 = vmatmul.f32.gmra.mxu0 %v3920
  %v4221 = vpop.f32.mrf.mxu0
  %v4222 = vadd.f32 0.0, %v4221
  %4223 = vmatmul.f32.gmra.mxu0 %v3921
  %v4224 = vpop.f32.mrf.mxu0
  %v4225 = vadd.f32 0.0, %v4224
  %4226 = vmatmul.f32.gmra.mxu0 %v3922
  %v4227 = vpop.f32.mrf.mxu0
  %v4228 = vadd.f32 0.0, %v4227
  %4229 = vmatmul.f32.gmra.mxu0 %v3923
  %v4230 = vpop.f32.mrf.mxu0
  %v4231 = vadd.f32 0.0, %v4230
  %4232 = vmatmul.f32.gmra.mxu0 %v3924
  %v4233 = vpop.f32.mrf.mxu0
  %v4234 = vadd.f32 0.0, %v4233
  %4235 = vmatmul.f32.gmra.mxu0 %v3925
  %v4236 = vpop.f32.mrf.mxu0
  %v4237 = vadd.f32 0.0, %v4236
  %4238 = vmatmul.f32.gmra.mxu0 %v3926
  %v4239 = vpop.f32.mrf.mxu0
  %v4240 = vadd.f32 0.0, %v4239
  %4241 = vmatmul.f32.gmra.mxu0 %v3927
  %v4242 = vpop.f32.mrf.mxu0
  %v4243 = vadd.f32 0.0, %v4242
  %4244 = vmatmul.f32.gmra.mxu0 %v3928
  %v4245 = vpop.f32.mrf.mxu0
  %v4246 = vadd.f32 0.0, %v4245
  %4247 = vdwg.mxu0
  %4248 = vmatpush.msra.mxu0 %v4082
  %4249 = vmatpush.msra.mxu0 %v4072
  %4250 = vmatpush.msra.mxu0 %v4062
  %4251 = vmatpush.msra.mxu0 %v4052
  %4252 = vmatpush.msra.mxu0 %v4042
  %4253 = vmatpush.msra.mxu0 %v4032
  %4254 = vmatpush.msra.mxu0 %v4022
  %4255 = vmatpush.msra.mxu0 %v4012
  %4256 = vmatpush.msra.mxu0 %v4002
  %4257 = vmatpush.msra.mxu0 %v3992
  %4258 = vmatpush.msra.mxu0 %v3982
  %4259 = vmatpush.msra.mxu0 %v3972
  %4260 = vmatpush.msra.mxu0 %v3962
  %4261 = vmatpush.msra.mxu0 %v3952
  %4262 = vmatpush.msra.mxu0 %v3942
  %4263 = vmatpush.msra.mxu0 %v3932
  %4264 = vmatmul.f32.gmra.mxu0 %v3917
  %v4265 = vpop.f32.mrf.mxu0
  %v4266 = vadd.f32 0.0, %v4265
  %4267 = vmatmul.f32.gmra.mxu0 %v3918
  %v4268 = vpop.f32.mrf.mxu0
  %v4269 = vadd.f32 0.0, %v4268
  %4270 = vmatmul.f32.gmra.mxu0 %v3919
  %v4271 = vpop.f32.mrf.mxu0
  %v4272 = vadd.f32 0.0, %v4271
  %4273 = vmatmul.f32.gmra.mxu0 %v3920
  %v4274 = vpop.f32.mrf.mxu0
  %v4275 = vadd.f32 0.0, %v4274
  %4276 = vmatmul.f32.gmra.mxu0 %v3921
  %v4277 = vpop.f32.mrf.mxu0
  %v4278 = vadd.f32 0.0, %v4277
  %4279 = vmatmul.f32.gmra.mxu0 %v3922
  %v4280 = vpop.f32.mrf.mxu0
  %v4281 = vadd.f32 0.0, %v4280
  %4282 = vmatmul.f32.gmra.mxu0 %v3923
  %v4283 = vpop.f32.mrf.mxu0
  %v4284 = vadd.f32 0.0, %v4283
  %4285 = vmatmul.f32.gmra.mxu0 %v3924
  %v4286 = vpop.f32.mrf.mxu0
  %v4287 = vadd.f32 0.0, %v4286
  %4288 = vmatmul.f32.gmra.mxu0 %v3925
  %v4289 = vpop.f32.mrf.mxu0
  %v4290 = vadd.f32 0.0, %v4289
  %4291 = vmatmul.f32.gmra.mxu0 %v3926
  %v4292 = vpop.f32.mrf.mxu0
  %v4293 = vadd.f32 0.0, %v4292
  %4294 = vmatmul.f32.gmra.mxu0 %v3927
  %v4295 = vpop.f32.mrf.mxu0
  %v4296 = vadd.f32 0.0, %v4295
  %4297 = vmatmul.f32.gmra.mxu0 %v3928
  %v4298 = vpop.f32.mrf.mxu0
  %v4299 = vadd.f32 0.0, %v4298
  %4300 = vdwg.mxu0
  %4301 = vmatpush.msra.mxu0 %v4083
  %4302 = vmatpush.msra.mxu0 %v4073
  %4303 = vmatpush.msra.mxu0 %v4063
  %4304 = vmatpush.msra.mxu0 %v4053
  %4305 = vmatpush.msra.mxu0 %v4043
  %4306 = vmatpush.msra.mxu0 %v4033
  %4307 = vmatpush.msra.mxu0 %v4023
  %4308 = vmatpush.msra.mxu0 %v4013
  %4309 = vmatpush.msra.mxu0 %v4003
  %4310 = vmatpush.msra.mxu0 %v3993
  %4311 = vmatpush.msra.mxu0 %v3983
  %4312 = vmatpush.msra.mxu0 %v3973
  %4313 = vmatpush.msra.mxu0 %v3963
  %4314 = vmatpush.msra.mxu0 %v3953
  %4315 = vmatpush.msra.mxu0 %v3943
  %4316 = vmatpush.msra.mxu0 %v3933
  %4317 = vmatmul.f32.gmra.mxu0 %v3917
  %v4318 = vpop.f32.mrf.mxu0
  %v4319 = vadd.f32 0.0, %v4318
  %4320 = vmatmul.f32.gmra.mxu0 %v3918
  %v4321 = vpop.f32.mrf.mxu0
  %v4322 = vadd.f32 0.0, %v4321
  %4323 = vmatmul.f32.gmra.mxu0 %v3919
  %v4324 = vpop.f32.mrf.mxu0
  %v4325 = vadd.f32 0.0, %v4324
  %4326 = vmatmul.f32.gmra.mxu0 %v3920
  %v4327 = vpop.f32.mrf.mxu0
  %v4328 = vadd.f32 0.0, %v4327
  %4329 = vmatmul.f32.gmra.mxu0 %v3921
  %v4330 = vpop.f32.mrf.mxu0
  %v4331 = vadd.f32 0.0, %v4330
  %4332 = vmatmul.f32.gmra.mxu0 %v3922
  %v4333 = vpop.f32.mrf.mxu0
  %v4334 = vadd.f32 0.0, %v4333
  %4335 = vmatmul.f32.gmra.mxu0 %v3923
  %v4336 = vpop.f32.mrf.mxu0
  %v4337 = vadd.f32 0.0, %v4336
  %4338 = vmatmul.f32.gmra.mxu0 %v3924
  %v4339 = vpop.f32.mrf.mxu0
  %v4340 = vadd.f32 0.0, %v4339
  %4341 = vmatmul.f32.gmra.mxu0 %v3925
  %v4342 = vpop.f32.mrf.mxu0
  %v4343 = vadd.f32 0.0, %v4342
  %4344 = vmatmul.f32.gmra.mxu0 %v3926
  %v4345 = vpop.f32.mrf.mxu0
  %v4346 = vadd.f32 0.0, %v4345
  %4347 = vmatmul.f32.gmra.mxu0 %v3927
  %v4348 = vpop.f32.mrf.mxu0
  %v4349 = vadd.f32 0.0, %v4348
  %4350 = vmatmul.f32.gmra.mxu0 %v3928
  %v4351 = vpop.f32.mrf.mxu0
  %v4352 = vadd.f32 0.0, %v4351
  %4353 = vdwg.mxu0
  %4354 = vmatpush.msra.mxu0 %v4084
  %4355 = vmatpush.msra.mxu0 %v4074
  %4356 = vmatpush.msra.mxu0 %v4064
  %4357 = vmatpush.msra.mxu0 %v4054
  %4358 = vmatpush.msra.mxu0 %v4044
  %4359 = vmatpush.msra.mxu0 %v4034
  %4360 = vmatpush.msra.mxu0 %v4024
  %4361 = vmatpush.msra.mxu0 %v4014
  %4362 = vmatpush.msra.mxu0 %v4004
  %4363 = vmatpush.msra.mxu0 %v3994
  %4364 = vmatpush.msra.mxu0 %v3984
  %4365 = vmatpush.msra.mxu0 %v3974
  %4366 = vmatpush.msra.mxu0 %v3964
  %4367 = vmatpush.msra.mxu0 %v3954
  %4368 = vmatpush.msra.mxu0 %v3944
  %4369 = vmatpush.msra.mxu0 %v3934
  %4370 = vmatmul.f32.gmra.mxu0 %v3917
  %v4371 = vpop.f32.mrf.mxu0
  %v4372 = vadd.f32 0.0, %v4371
  %4373 = vmatmul.f32.gmra.mxu0 %v3918
  %v4374 = vpop.f32.mrf.mxu0
  %v4375 = vadd.f32 0.0, %v4374
  %4376 = vmatmul.f32.gmra.mxu0 %v3919
  %v4377 = vpop.f32.mrf.mxu0
  %v4378 = vadd.f32 0.0, %v4377
  %4379 = vmatmul.f32.gmra.mxu0 %v3920
  %v4380 = vpop.f32.mrf.mxu0
  %v4381 = vadd.f32 0.0, %v4380
  %4382 = vmatmul.f32.gmra.mxu0 %v3921
  %v4383 = vpop.f32.mrf.mxu0
  %v4384 = vadd.f32 0.0, %v4383
  %4385 = vmatmul.f32.gmra.mxu0 %v3922
  %v4386 = vpop.f32.mrf.mxu0
  %v4387 = vadd.f32 0.0, %v4386
  %4388 = vmatmul.f32.gmra.mxu0 %v3923
  %v4389 = vpop.f32.mrf.mxu0
  %v4390 = vadd.f32 0.0, %v4389
  %4391 = vmatmul.f32.gmra.mxu0 %v3924
  %v4392 = vpop.f32.mrf.mxu0
  %v4393 = vadd.f32 0.0, %v4392
  %4394 = vmatmul.f32.gmra.mxu0 %v3925
  %v4395 = vpop.f32.mrf.mxu0
  %v4396 = vadd.f32 0.0, %v4395
  %4397 = vmatmul.f32.gmra.mxu0 %v3926
  %v4398 = vpop.f32.mrf.mxu0
  %v4399 = vadd.f32 0.0, %v4398
  %4400 = vmatmul.f32.gmra.mxu0 %v3927
  %v4401 = vpop.f32.mrf.mxu0
  %v4402 = vadd.f32 0.0, %v4401
  %4403 = vmatmul.f32.gmra.mxu0 %v3928
  %v4404 = vpop.f32.mrf.mxu0
  %v4405 = vadd.f32 0.0, %v4404
  %4406 = vdwg.mxu0
  %4407 = vmatpush.msra.mxu0 %v4085
  %4408 = vmatpush.msra.mxu0 %v4075
  %4409 = vmatpush.msra.mxu0 %v4065
  %4410 = vmatpush.msra.mxu0 %v4055
  %4411 = vmatpush.msra.mxu0 %v4045
  %4412 = vmatpush.msra.mxu0 %v4035
  %4413 = vmatpush.msra.mxu0 %v4025
  %4414 = vmatpush.msra.mxu0 %v4015
  %4415 = vmatpush.msra.mxu0 %v4005
  %4416 = vmatpush.msra.mxu0 %v3995
  %4417 = vmatpush.msra.mxu0 %v3985
  %4418 = vmatpush.msra.mxu0 %v3975
  %4419 = vmatpush.msra.mxu0 %v3965
  %4420 = vmatpush.msra.mxu0 %v3955
  %4421 = vmatpush.msra.mxu0 %v3945
  %4422 = vmatpush.msra.mxu0 %v3935
  %4423 = vmatmul.f32.gmra.mxu0 %v3917
  %v4424 = vpop.f32.mrf.mxu0
  %v4425 = vadd.f32 0.0, %v4424
  %4426 = vmatmul.f32.gmra.mxu0 %v3918
  %v4427 = vpop.f32.mrf.mxu0
  %v4428 = vadd.f32 0.0, %v4427
  %4429 = vmatmul.f32.gmra.mxu0 %v3919
  %v4430 = vpop.f32.mrf.mxu0
  %v4431 = vadd.f32 0.0, %v4430
  %4432 = vmatmul.f32.gmra.mxu0 %v3920
  %v4433 = vpop.f32.mrf.mxu0
  %v4434 = vadd.f32 0.0, %v4433
  %4435 = vmatmul.f32.gmra.mxu0 %v3921
  %v4436 = vpop.f32.mrf.mxu0
  %v4437 = vadd.f32 0.0, %v4436
  %4438 = vmatmul.f32.gmra.mxu0 %v3922
  %v4439 = vpop.f32.mrf.mxu0
  %v4440 = vadd.f32 0.0, %v4439
  %4441 = vmatmul.f32.gmra.mxu0 %v3923
  %v4442 = vpop.f32.mrf.mxu0
  %v4443 = vadd.f32 0.0, %v4442
  %4444 = vmatmul.f32.gmra.mxu0 %v3924
  %v4445 = vpop.f32.mrf.mxu0
  %v4446 = vadd.f32 0.0, %v4445
  %4447 = vmatmul.f32.gmra.mxu0 %v3925
  %v4448 = vpop.f32.mrf.mxu0
  %v4449 = vadd.f32 0.0, %v4448
  %4450 = vmatmul.f32.gmra.mxu0 %v3926
  %v4451 = vpop.f32.mrf.mxu0
  %v4452 = vadd.f32 0.0, %v4451
  %4453 = vmatmul.f32.gmra.mxu0 %v3927
  %v4454 = vpop.f32.mrf.mxu0
  %v4455 = vadd.f32 0.0, %v4454
  %4456 = vmatmul.f32.gmra.mxu0 %v3928
  %v4457 = vpop.f32.mrf.mxu0
  %v4458 = vadd.f32 0.0, %v4457
  %4459 = vdwg.mxu0
  %4460 = vmatpush.msra.mxu0 %v4086
  %4461 = vmatpush.msra.mxu0 %v4076
  %4462 = vmatpush.msra.mxu0 %v4066
  %4463 = vmatpush.msra.mxu0 %v4056
  %4464 = vmatpush.msra.mxu0 %v4046
  %4465 = vmatpush.msra.mxu0 %v4036
  %4466 = vmatpush.msra.mxu0 %v4026
  %4467 = vmatpush.msra.mxu0 %v4016
  %4468 = vmatpush.msra.mxu0 %v4006
  %4469 = vmatpush.msra.mxu0 %v3996
  %4470 = vmatpush.msra.mxu0 %v3986
  %4471 = vmatpush.msra.mxu0 %v3976
  %4472 = vmatpush.msra.mxu0 %v3966
  %4473 = vmatpush.msra.mxu0 %v3956
  %4474 = vmatpush.msra.mxu0 %v3946
  %4475 = vmatpush.msra.mxu0 %v3936
  %4476 = vmatmul.f32.gmra.mxu0 %v3917
  %v4477 = vpop.f32.mrf.mxu0
  %v4478 = vadd.f32 0.0, %v4477
  %4479 = vmatmul.f32.gmra.mxu0 %v3918
  %v4480 = vpop.f32.mrf.mxu0
  %v4481 = vadd.f32 0.0, %v4480
  %4482 = vmatmul.f32.gmra.mxu0 %v3919
  %v4483 = vpop.f32.mrf.mxu0
  %v4484 = vadd.f32 0.0, %v4483
  %4485 = vmatmul.f32.gmra.mxu0 %v3920
  %v4486 = vpop.f32.mrf.mxu0
  %v4487 = vadd.f32 0.0, %v4486
  %4488 = vmatmul.f32.gmra.mxu0 %v3921
  %v4489 = vpop.f32.mrf.mxu0
  %v4490 = vadd.f32 0.0, %v4489
  %4491 = vmatmul.f32.gmra.mxu0 %v3922
  %v4492 = vpop.f32.mrf.mxu0
  %v4493 = vadd.f32 0.0, %v4492
  %4494 = vmatmul.f32.gmra.mxu0 %v3923
  %v4495 = vpop.f32.mrf.mxu0
  %v4496 = vadd.f32 0.0, %v4495
  %4497 = vmatmul.f32.gmra.mxu0 %v3924
  %v4498 = vpop.f32.mrf.mxu0
  %v4499 = vadd.f32 0.0, %v4498
  %4500 = vmatmul.f32.gmra.mxu0 %v3925
  %v4501 = vpop.f32.mrf.mxu0
  %v4502 = vadd.f32 0.0, %v4501
  %4503 = vmatmul.f32.gmra.mxu0 %v3926
  %v4504 = vpop.f32.mrf.mxu0
  %v4505 = vadd.f32 0.0, %v4504
  %4506 = vmatmul.f32.gmra.mxu0 %v3927
  %v4507 = vpop.f32.mrf.mxu0
  %v4508 = vadd.f32 0.0, %v4507
  %4509 = vmatmul.f32.gmra.mxu0 %v3928
  %v4510 = vpop.f32.mrf.mxu0
  %v4511 = vadd.f32 0.0, %v4510
  %4512 = vdwg.mxu0
  %4513 = vmatpush.msra.mxu0 %v4087
  %4514 = vmatpush.msra.mxu0 %v4077
  %4515 = vmatpush.msra.mxu0 %v4067
  %4516 = vmatpush.msra.mxu0 %v4057
  %4517 = vmatpush.msra.mxu0 %v4047
  %4518 = vmatpush.msra.mxu0 %v4037
  %4519 = vmatpush.msra.mxu0 %v4027
  %4520 = vmatpush.msra.mxu0 %v4017
  %4521 = vmatpush.msra.mxu0 %v4007
  %4522 = vmatpush.msra.mxu0 %v3997
  %4523 = vmatpush.msra.mxu0 %v3987
  %4524 = vmatpush.msra.mxu0 %v3977
  %4525 = vmatpush.msra.mxu0 %v3967
  %4526 = vmatpush.msra.mxu0 %v3957
  %4527 = vmatpush.msra.mxu0 %v3947
  %4528 = vmatpush.msra.mxu0 %v3937
  %4529 = vmatmul.f32.gmra.mxu0 %v3917
  %v4530 = vpop.f32.mrf.mxu0
  %v4531 = vadd.f32 0.0, %v4530
  %4532 = vmatmul.f32.gmra.mxu0 %v3918
  %v4533 = vpop.f32.mrf.mxu0
  %v4534 = vadd.f32 0.0, %v4533
  %4535 = vmatmul.f32.gmra.mxu0 %v3919
  %v4536 = vpop.f32.mrf.mxu0
  %v4537 = vadd.f32 0.0, %v4536
  %4538 = vmatmul.f32.gmra.mxu0 %v3920
  %v4539 = vpop.f32.mrf.mxu0
  %v4540 = vadd.f32 0.0, %v4539
  %4541 = vmatmul.f32.gmra.mxu0 %v3921
  %v4542 = vpop.f32.mrf.mxu0
  %v4543 = vadd.f32 0.0, %v4542
  %4544 = vmatmul.f32.gmra.mxu0 %v3922
  %v4545 = vpop.f32.mrf.mxu0
  %v4546 = vadd.f32 0.0, %v4545
  %4547 = vmatmul.f32.gmra.mxu0 %v3923
  %v4548 = vpop.f32.mrf.mxu0
  %v4549 = vadd.f32 0.0, %v4548
  %4550 = vmatmul.f32.gmra.mxu0 %v3924
  %v4551 = vpop.f32.mrf.mxu0
  %v4552 = vadd.f32 0.0, %v4551
  %4553 = vmatmul.f32.gmra.mxu0 %v3925
  %v4554 = vpop.f32.mrf.mxu0
  %v4555 = vadd.f32 0.0, %v4554
  %4556 = vmatmul.f32.gmra.mxu0 %v3926
  %v4557 = vpop.f32.mrf.mxu0
  %v4558 = vadd.f32 0.0, %v4557
  %4559 = vmatmul.f32.gmra.mxu0 %v3927
  %v4560 = vpop.f32.mrf.mxu0
  %v4561 = vadd.f32 0.0, %v4560
  %4562 = vmatmul.f32.gmra.mxu0 %v3928
  %v4563 = vpop.f32.mrf.mxu0
  %v4564 = vadd.f32 0.0, %v4563
  %4565 = vdwg.mxu0
  %4566 = vmatpush.msra.mxu0 %v4088
  %4567 = vmatpush.msra.mxu0 %v4078
  %4568 = vmatpush.msra.mxu0 %v4068
  %4569 = vmatpush.msra.mxu0 %v4058
  %4570 = vmatpush.msra.mxu0 %v4048
  %4571 = vmatpush.msra.mxu0 %v4038
  %4572 = vmatpush.msra.mxu0 %v4028
  %4573 = vmatpush.msra.mxu0 %v4018
  %4574 = vmatpush.msra.mxu0 %v4008
  %4575 = vmatpush.msra.mxu0 %v3998
  %4576 = vmatpush.msra.mxu0 %v3988
  %4577 = vmatpush.msra.mxu0 %v3978
  %4578 = vmatpush.msra.mxu0 %v3968
  %4579 = vmatpush.msra.mxu0 %v3958
  %4580 = vmatpush.msra.mxu0 %v3948
  %4581 = vmatpush.msra.mxu0 %v3938
  %4582 = vmatmul.f32.gmra.mxu0 %v3917
  %v4583 = vpop.f32.mrf.mxu0
  %v4584 = vadd.f32 0.0, %v4583
  %4585 = vmatmul.f32.gmra.mxu0 %v3918
  %v4586 = vpop.f32.mrf.mxu0
  %v4587 = vadd.f32 0.0, %v4586
  %4588 = vmatmul.f32.gmra.mxu0 %v3919
  %v4589 = vpop.f32.mrf.mxu0
  %v4590 = vadd.f32 0.0, %v4589
  %4591 = vmatmul.f32.gmra.mxu0 %v3920
  %v4592 = vpop.f32.mrf.mxu0
  %v4593 = vadd.f32 0.0, %v4592
  %4594 = vmatmul.f32.gmra.mxu0 %v3921
  %v4595 = vpop.f32.mrf.mxu0
  %v4596 = vadd.f32 0.0, %v4595
  %4597 = vmatmul.f32.gmra.mxu0 %v3922
  %v4598 = vpop.f32.mrf.mxu0
  %v4599 = vadd.f32 0.0, %v4598
  %4600 = vmatmul.f32.gmra.mxu0 %v3923
  %v4601 = vpop.f32.mrf.mxu0
  %v4602 = vadd.f32 0.0, %v4601
  %4603 = vmatmul.f32.gmra.mxu0 %v3924
  %v4604 = vpop.f32.mrf.mxu0
  %v4605 = vadd.f32 0.0, %v4604
  %4606 = vmatmul.f32.gmra.mxu0 %v3925
  %v4607 = vpop.f32.mrf.mxu0
  %v4608 = vadd.f32 0.0, %v4607
  %4609 = vmatmul.f32.gmra.mxu0 %v3926
  %v4610 = vpop.f32.mrf.mxu0
  %v4611 = vadd.f32 0.0, %v4610
  %4612 = vmatmul.f32.gmra.mxu0 %v3927
  %v4613 = vpop.f32.mrf.mxu0
  %v4614 = vadd.f32 0.0, %v4613
  %4615 = vmatmul.f32.gmra.mxu0 %v3928
  %v4616 = vpop.f32.mrf.mxu0
  %v4617 = vadd.f32 0.0, %v4616
  %4618 = vdwg.mxu0
  %v4619 = vld [vmem:[%s5] sm:$0xff]
  %v4620 = vld [vmem:[%s5 + $0x8] sm:$0xff]
  %v4621 = vld [vmem:[%s5 + $0x10] sm:$0xff]
  %v4622 = vld [vmem:[%s5 + $0x18] sm:$0xff]
  %s4623 = scalar_lea.vmem %s5, 32
  %v4624 = vld [vmem:[%s4623] sm:$0xff]
  %v4625 = vld [vmem:[%s4623 + $0x8] sm:$0xff]
  %v4626 = vld [vmem:[%s4623 + $0x10] sm:$0xff]
  %v4627 = vld [vmem:[%s4623 + $0x18] sm:$0xff]
  %v4629 = vsel %vm1284, %v4624, 0
  %v4632 = vsel %vm1284, %v4625, 0
  %v4635 = vsel %vm1284, %v4626, 0
  %v4638 = vsel %vm1284, %v4627, 0
  %4640 = vmatpush.msra.mxu0 0.0
  %4641 = vmatpush.msra.mxu0 0.0
  %4642 = vmatpush.msra.mxu0 0.0
  %4643 = vmatpush.msra.mxu0 0.0
  %4644 = vmatpush.msra.mxu0 %v4246
  %4645 = vmatpush.msra.mxu0 %v4243
  %4646 = vmatpush.msra.mxu0 %v4240
  %4647 = vmatpush.msra.mxu0 %v4237
  %4648 = vmatpush.msra.mxu0 %v4234
  %4649 = vmatpush.msra.mxu0 %v4231
  %4650 = vmatpush.msra.mxu0 %v4228
  %4651 = vmatpush.msra.mxu0 %v4225
  %4652 = vmatpush.msra.mxu0 %v4222
  %4653 = vmatpush.msra.mxu0 %v4219
  %4654 = vmatpush.msra.mxu0 %v4216
  %4655 = vmatpush.msra.mxu0 %v4213
  %4656 = vmatmul.f32.gmra.mxu0 %v4629
  %v4657 = vpop.f32.mrf.mxu0
  %v4658 = vadd.f32 0.0, %v4657
  %4659 = vmatmul.f32.gmra.mxu0 %v4632
  %v4660 = vpop.f32.mrf.mxu0
  %v4661 = vadd.f32 0.0, %v4660
  %4662 = vmatmul.f32.gmra.mxu0 %v4635
  %v4663 = vpop.f32.mrf.mxu0
  %v4664 = vadd.f32 0.0, %v4663
  %4665 = vmatmul.f32.gmra.mxu0 %v4638
  %v4666 = vpop.f32.mrf.mxu0
  %v4667 = vadd.f32 0.0, %v4666
  %4668 = vdwg.mxu0
  %4669 = vmatpush.msra.mxu0 0.0
  %4670 = vmatpush.msra.mxu0 0.0
  %4671 = vmatpush.msra.mxu0 0.0
  %4672 = vmatpush.msra.mxu0 0.0
  %4673 = vmatpush.msra.mxu0 %v4299
  %4674 = vmatpush.msra.mxu0 %v4296
  %4675 = vmatpush.msra.mxu0 %v4293
  %4676 = vmatpush.msra.mxu0 %v4290
  %4677 = vmatpush.msra.mxu0 %v4287
  %4678 = vmatpush.msra.mxu0 %v4284
  %4679 = vmatpush.msra.mxu0 %v4281
  %4680 = vmatpush.msra.mxu0 %v4278
  %4681 = vmatpush.msra.mxu0 %v4275
  %4682 = vmatpush.msra.mxu0 %v4272
  %4683 = vmatpush.msra.mxu0 %v4269
  %4684 = vmatpush.msra.mxu0 %v4266
  %4685 = vmatmul.f32.gmra.mxu0 %v4629
  %v4686 = vpop.f32.mrf.mxu0
  %v4687 = vadd.f32 0.0, %v4686
  %4688 = vmatmul.f32.gmra.mxu0 %v4632
  %v4689 = vpop.f32.mrf.mxu0
  %v4690 = vadd.f32 0.0, %v4689
  %4691 = vmatmul.f32.gmra.mxu0 %v4635
  %v4692 = vpop.f32.mrf.mxu0
  %v4693 = vadd.f32 0.0, %v4692
  %4694 = vmatmul.f32.gmra.mxu0 %v4638
  %v4695 = vpop.f32.mrf.mxu0
  %v4696 = vadd.f32 0.0, %v4695
  %4697 = vdwg.mxu0
  %v4699 = vsel %vm1284, %v4619, 0
  %v4702 = vsel %vm1284, %v4620, 0
  %v4705 = vsel %vm1284, %v4621, 0
  %v4708 = vsel %vm1284, %v4622, 0
  %4710 = vmatpush.msra.mxu0 0.0
  %4711 = vmatpush.msra.mxu0 0.0
  %4712 = vmatpush.msra.mxu0 0.0
  %4713 = vmatpush.msra.mxu0 0.0
  %4714 = vmatpush.msra.mxu0 %v4140
  %4715 = vmatpush.msra.mxu0 %v4137
  %4716 = vmatpush.msra.mxu0 %v4134
  %4717 = vmatpush.msra.mxu0 %v4131
  %4718 = vmatpush.msra.mxu0 %v4128
  %4719 = vmatpush.msra.mxu0 %v4125
  %4720 = vmatpush.msra.mxu0 %v4122
  %4721 = vmatpush.msra.mxu0 %v4119
  %4722 = vmatpush.msra.mxu0 %v4116
  %4723 = vmatpush.msra.mxu0 %v4113
  %4724 = vmatpush.msra.mxu0 %v4110
  %4725 = vmatpush.msra.mxu0 %v4107
  %4726 = vmatmul.f32.gmra.mxu0 %v4699
  %v4727 = vpop.f32.mrf.mxu0
  %v4728 = vadd.f32 %v4658, %v4727
  %4729 = vmatmul.f32.gmra.mxu0 %v4702
  %v4730 = vpop.f32.mrf.mxu0
  %v4731 = vadd.f32 %v4661, %v4730
  %4732 = vmatmul.f32.gmra.mxu0 %v4705
  %v4733 = vpop.f32.mrf.mxu0
  %v4734 = vadd.f32 %v4664, %v4733
  %4735 = vmatmul.f32.gmra.mxu0 %v4708
  %v4736 = vpop.f32.mrf.mxu0
  %v4737 = vadd.f32 %v4667, %v4736
  %4738 = vdwg.mxu0
  %4739 = vmatpush.msra.mxu0 0.0
  %4740 = vmatpush.msra.mxu0 0.0
  %4741 = vmatpush.msra.mxu0 0.0
  %4742 = vmatpush.msra.mxu0 0.0
  %4743 = vmatpush.msra.mxu0 %v4193
  %4744 = vmatpush.msra.mxu0 %v4190
  %4745 = vmatpush.msra.mxu0 %v4187
  %4746 = vmatpush.msra.mxu0 %v4184
  %4747 = vmatpush.msra.mxu0 %v4181
  %4748 = vmatpush.msra.mxu0 %v4178
  %4749 = vmatpush.msra.mxu0 %v4175
  %4750 = vmatpush.msra.mxu0 %v4172
  %4751 = vmatpush.msra.mxu0 %v4169
  %4752 = vmatpush.msra.mxu0 %v4166
  %4753 = vmatpush.msra.mxu0 %v4163
  %4754 = vmatpush.msra.mxu0 %v4160
  %4755 = vmatmul.f32.gmra.mxu0 %v4699
  %v4756 = vpop.f32.mrf.mxu0
  %v4757 = vadd.f32 %v4687, %v4756
  %4758 = vmatmul.f32.gmra.mxu0 %v4702
  %v4759 = vpop.f32.mrf.mxu0
  %v4760 = vadd.f32 %v4690, %v4759
  %4761 = vmatmul.f32.gmra.mxu0 %v4705
  %v4762 = vpop.f32.mrf.mxu0
  %v4763 = vadd.f32 %v4693, %v4762
  %4764 = vmatmul.f32.gmra.mxu0 %v4708
  %v4765 = vpop.f32.mrf.mxu0
  %v4766 = vadd.f32 %v4696, %v4765
  %4767 = vdwg.mxu0
  %s4768 = scalar_lea.vmem %s5, 64
  %v4769 = vld [vmem:[%s4768] sm:$0xff]
  %v4770 = vld [vmem:[%s4768 + $0x8] sm:$0xff]
  %v4771 = vld [vmem:[%s4768 + $0x10] sm:$0xff]
  %v4772 = vld [vmem:[%s4768 + $0x18] sm:$0xff]
  %v4774 = vsel %vm1284, %v4769, 0
  %v4777 = vsel %vm1284, %v4770, 0
  %v4780 = vsel %vm1284, %v4771, 0
  %v4783 = vsel %vm1284, %v4772, 0
  %4785 = vmatpush.msra.mxu0 0.0
  %4786 = vmatpush.msra.mxu0 0.0
  %4787 = vmatpush.msra.mxu0 0.0
  %4788 = vmatpush.msra.mxu0 0.0
  %4789 = vmatpush.msra.mxu0 %v4352
  %4790 = vmatpush.msra.mxu0 %v4349
  %4791 = vmatpush.msra.mxu0 %v4346
  %4792 = vmatpush.msra.mxu0 %v4343
  %4793 = vmatpush.msra.mxu0 %v4340
  %4794 = vmatpush.msra.mxu0 %v4337
  %4795 = vmatpush.msra.mxu0 %v4334
  %4796 = vmatpush.msra.mxu0 %v4331
  %4797 = vmatpush.msra.mxu0 %v4328
  %4798 = vmatpush.msra.mxu0 %v4325
  %4799 = vmatpush.msra.mxu0 %v4322
  %4800 = vmatpush.msra.mxu0 %v4319
  %4801 = vmatmul.f32.gmra.mxu0 %v4774
  %v4802 = vpop.f32.mrf.mxu0
  %v4803 = vadd.f32 0.0, %v4802
  %4804 = vmatmul.f32.gmra.mxu0 %v4777
  %v4805 = vpop.f32.mrf.mxu0
  %v4806 = vadd.f32 0.0, %v4805
  %4807 = vmatmul.f32.gmra.mxu0 %v4780
  %v4808 = vpop.f32.mrf.mxu0
  %v4809 = vadd.f32 0.0, %v4808
  %4810 = vmatmul.f32.gmra.mxu0 %v4783
  %v4811 = vpop.f32.mrf.mxu0
  %v4812 = vadd.f32 0.0, %v4811
  %4813 = vdwg.mxu0
  %4814 = vmatpush.msra.mxu0 0.0
  %4815 = vmatpush.msra.mxu0 0.0
  %4816 = vmatpush.msra.mxu0 0.0
  %4817 = vmatpush.msra.mxu0 0.0
  %4818 = vmatpush.msra.mxu0 %v4405
  %4819 = vmatpush.msra.mxu0 %v4402
  %4820 = vmatpush.msra.mxu0 %v4399
  %4821 = vmatpush.msra.mxu0 %v4396
  %4822 = vmatpush.msra.mxu0 %v4393
  %4823 = vmatpush.msra.mxu0 %v4390
  %4824 = vmatpush.msra.mxu0 %v4387
  %4825 = vmatpush.msra.mxu0 %v4384
  %4826 = vmatpush.msra.mxu0 %v4381
  %4827 = vmatpush.msra.mxu0 %v4378
  %4828 = vmatpush.msra.mxu0 %v4375
  %4829 = vmatpush.msra.mxu0 %v4372
  %4830 = vmatmul.f32.gmra.mxu0 %v4774
  %v4831 = vpop.f32.mrf.mxu0
  %v4832 = vadd.f32 0.0, %v4831
  %4833 = vmatmul.f32.gmra.mxu0 %v4777
  %v4834 = vpop.f32.mrf.mxu0
  %v4835 = vadd.f32 0.0, %v4834
  %4836 = vmatmul.f32.gmra.mxu0 %v4780
  %v4837 = vpop.f32.mrf.mxu0
  %v4838 = vadd.f32 0.0, %v4837
  %4839 = vmatmul.f32.gmra.mxu0 %v4783
  %v4840 = vpop.f32.mrf.mxu0
  %v4841 = vadd.f32 0.0, %v4840
  %4842 = vdwg.mxu0
  %v4843 = vadd.f32 %v4728, %v4803
  %v4844 = vadd.f32 %v4757, %v4832
  %v4845 = vadd.f32 %v4731, %v4806
  %v4846 = vadd.f32 %v4760, %v4835
  %v4847 = vadd.f32 %v4734, %v4809
  %v4848 = vadd.f32 %v4763, %v4838
  %v4849 = vadd.f32 %v4737, %v4812
  %v4850 = vadd.f32 %v4766, %v4841
  %s4851 = scalar_lea.vmem %s5, 96
  %v4852 = vld [vmem:[%s4851] sm:$0xff]
  %v4853 = vld [vmem:[%s4851 + $0x8] sm:$0xff]
  %v4854 = vld [vmem:[%s4851 + $0x10] sm:$0xff]
  %v4855 = vld [vmem:[%s4851 + $0x18] sm:$0xff]
  %v4857 = vsel %vm1284, %v4852, 0
  %v4860 = vsel %vm1284, %v4853, 0
  %v4863 = vsel %vm1284, %v4854, 0
  %v4866 = vsel %vm1284, %v4855, 0
  %4868 = vmatpush.msra.mxu0 0.0
  %4869 = vmatpush.msra.mxu0 0.0
  %4870 = vmatpush.msra.mxu0 0.0
  %4871 = vmatpush.msra.mxu0 0.0
  %4872 = vmatpush.msra.mxu0 %v4458
  %4873 = vmatpush.msra.mxu0 %v4455
  %4874 = vmatpush.msra.mxu0 %v4452
  %4875 = vmatpush.msra.mxu0 %v4449
  %4876 = vmatpush.msra.mxu0 %v4446
  %4877 = vmatpush.msra.mxu0 %v4443
  %4878 = vmatpush.msra.mxu0 %v4440
  %4879 = vmatpush.msra.mxu0 %v4437
  %4880 = vmatpush.msra.mxu0 %v4434
  %4881 = vmatpush.msra.mxu0 %v4431
  %4882 = vmatpush.msra.mxu0 %v4428
  %4883 = vmatpush.msra.mxu0 %v4425
  %4884 = vmatmul.f32.gmra.mxu0 %v4857
  %v4885 = vpop.f32.mrf.mxu0
  %v4886 = vadd.f32 0.0, %v4885
  %4887 = vmatmul.f32.gmra.mxu0 %v4860
  %v4888 = vpop.f32.mrf.mxu0
  %v4889 = vadd.f32 0.0, %v4888
  %4890 = vmatmul.f32.gmra.mxu0 %v4863
  %v4891 = vpop.f32.mrf.mxu0
  %v4892 = vadd.f32 0.0, %v4891
  %4893 = vmatmul.f32.gmra.mxu0 %v4866
  %v4894 = vpop.f32.mrf.mxu0
  %v4895 = vadd.f32 0.0, %v4894
  %4896 = vdwg.mxu0
  %4897 = vmatpush.msra.mxu0 0.0
  %4898 = vmatpush.msra.mxu0 0.0
  %4899 = vmatpush.msra.mxu0 0.0
  %4900 = vmatpush.msra.mxu0 0.0
  %4901 = vmatpush.msra.mxu0 %v4511
  %4902 = vmatpush.msra.mxu0 %v4508
  %4903 = vmatpush.msra.mxu0 %v4505
  %4904 = vmatpush.msra.mxu0 %v4502
  %4905 = vmatpush.msra.mxu0 %v4499
  %4906 = vmatpush.msra.mxu0 %v4496
  %4907 = vmatpush.msra.mxu0 %v4493
  %4908 = vmatpush.msra.mxu0 %v4490
  %4909 = vmatpush.msra.mxu0 %v4487
  %4910 = vmatpush.msra.mxu0 %v4484
  %4911 = vmatpush.msra.mxu0 %v4481
  %4912 = vmatpush.msra.mxu0 %v4478
  %4913 = vmatmul.f32.gmra.mxu0 %v4857
  %v4914 = vpop.f32.mrf.mxu0
  %v4915 = vadd.f32 0.0, %v4914
  %4916 = vmatmul.f32.gmra.mxu0 %v4860
  %v4917 = vpop.f32.mrf.mxu0
  %v4918 = vadd.f32 0.0, %v4917
  %4919 = vmatmul.f32.gmra.mxu0 %v4863
  %v4920 = vpop.f32.mrf.mxu0
  %v4921 = vadd.f32 0.0, %v4920
  %4922 = vmatmul.f32.gmra.mxu0 %v4866
  %v4923 = vpop.f32.mrf.mxu0
  %v4924 = vadd.f32 0.0, %v4923
  %4925 = vdwg.mxu0
  %v4926 = vadd.f32 %v4843, %v4886
  %v4927 = vadd.f32 %v4844, %v4915
  %v4928 = vadd.f32 %v4845, %v4889
  %v4929 = vadd.f32 %v4846, %v4918
  %v4930 = vadd.f32 %v4847, %v4892
  %v4931 = vadd.f32 %v4848, %v4921
  %v4932 = vadd.f32 %v4849, %v4895
  %v4933 = vadd.f32 %v4850, %v4924
  %s4934 = scalar_lea.vmem %s5, 128
  %v4935 = vld [vmem:[%s4934] sm:$0xff]
  %v4936 = vld [vmem:[%s4934 + $0x8] sm:$0xff]
  %v4937 = vld [vmem:[%s4934 + $0x10] sm:$0xff]
  %v4938 = vld [vmem:[%s4934 + $0x18] sm:$0xff]
  %v4940 = vsel %vm1284, %v4935, 0
  %v4943 = vsel %vm1284, %v4936, 0
  %v4946 = vsel %vm1284, %v4937, 0
  %v4949 = vsel %vm1284, %v4938, 0
  %4951 = vmatpush.msra.mxu0 0.0
  %4952 = vmatpush.msra.mxu0 0.0
  %4953 = vmatpush.msra.mxu0 0.0
  %4954 = vmatpush.msra.mxu0 0.0
  %4955 = vmatpush.msra.mxu0 %v4564
  %4956 = vmatpush.msra.mxu0 %v4561
  %4957 = vmatpush.msra.mxu0 %v4558
  %4958 = vmatpush.msra.mxu0 %v4555
  %4959 = vmatpush.msra.mxu0 %v4552
  %4960 = vmatpush.msra.mxu0 %v4549
  %4961 = vmatpush.msra.mxu0 %v4546
  %4962 = vmatpush.msra.mxu0 %v4543
  %4963 = vmatpush.msra.mxu0 %v4540
  %4964 = vmatpush.msra.mxu0 %v4537
  %4965 = vmatpush.msra.mxu0 %v4534
  %4966 = vmatpush.msra.mxu0 %v4531
  %4967 = vmatmul.f32.gmra.mxu0 %v4940
  %v4968 = vpop.f32.mrf.mxu0
  %v4969 = vadd.f32 0.0, %v4968
  %4970 = vmatmul.f32.gmra.mxu0 %v4943
  %v4971 = vpop.f32.mrf.mxu0
  %v4972 = vadd.f32 0.0, %v4971
  %4973 = vmatmul.f32.gmra.mxu0 %v4946
  %v4974 = vpop.f32.mrf.mxu0
  %v4975 = vadd.f32 0.0, %v4974
  %4976 = vmatmul.f32.gmra.mxu0 %v4949
  %v4977 = vpop.f32.mrf.mxu0
  %v4978 = vadd.f32 0.0, %v4977
  %4979 = vdwg.mxu0
  %4980 = vmatpush.msra.mxu0 0.0
  %4981 = vmatpush.msra.mxu0 0.0
  %4982 = vmatpush.msra.mxu0 0.0
  %4983 = vmatpush.msra.mxu0 0.0
  %4984 = vmatpush.msra.mxu0 %v4617
  %4985 = vmatpush.msra.mxu0 %v4614
  %4986 = vmatpush.msra.mxu0 %v4611
  %4987 = vmatpush.msra.mxu0 %v4608
  %4988 = vmatpush.msra.mxu0 %v4605
  %4989 = vmatpush.msra.mxu0 %v4602
  %4990 = vmatpush.msra.mxu0 %v4599
  %4991 = vmatpush.msra.mxu0 %v4596
  %4992 = vmatpush.msra.mxu0 %v4593
  %4993 = vmatpush.msra.mxu0 %v4590
  %4994 = vmatpush.msra.mxu0 %v4587
  %4995 = vmatpush.msra.mxu0 %v4584
  %4996 = vmatmul.f32.gmra.mxu0 %v4940
  %v4997 = vpop.f32.mrf.mxu0
  %v4998 = vadd.f32 0.0, %v4997
  %4999 = vmatmul.f32.gmra.mxu0 %v4943
  %v5000 = vpop.f32.mrf.mxu0
  %v5001 = vadd.f32 0.0, %v5000
  %5002 = vmatmul.f32.gmra.mxu0 %v4946
  %v5003 = vpop.f32.mrf.mxu0
  %v5004 = vadd.f32 0.0, %v5003
  %5005 = vmatmul.f32.gmra.mxu0 %v4949
  %v5006 = vpop.f32.mrf.mxu0
  %v5007 = vadd.f32 0.0, %v5006
  %5008 = vdwg.mxu0
  %v5009 = vadd.f32 %v4926, %v4969
  %v5010 = vadd.f32 %v4927, %v4998
  %v5011 = vadd.f32 %v4928, %v4972
  %v5012 = vadd.f32 %v4929, %v5001
  %v5013 = vadd.f32 %v4930, %v4975
  %v5014 = vadd.f32 %v4931, %v5004
  %v5015 = vadd.f32 %v4932, %v4978
  %v5016 = vadd.f32 %v4933, %v5007
  %5017 = vmatpush.msra.mxu0 0.0
  %5018 = vmatpush.msra.mxu0 0.0
  %5019 = vmatpush.msra.mxu0 0.0
  %5020 = vmatpush.msra.mxu0 0.0
  %5021 = vmatpush.msra.mxu0 %v4246
  %5022 = vmatpush.msra.mxu0 %v4243
  %5023 = vmatpush.msra.mxu0 %v4240
  %5024 = vmatpush.msra.mxu0 %v4237
  %5025 = vmatpush.msra.mxu0 %v4234
  %5026 = vmatpush.msra.mxu0 %v4231
  %5027 = vmatpush.msra.mxu0 %v4228
  %5028 = vmatpush.msra.mxu0 %v4225
  %5029 = vmatpush.msra.mxu0 %v4222
  %5030 = vmatpush.msra.mxu0 %v4219
  %5031 = vmatpush.msra.mxu0 %v4216
  %5032 = vmatpush.msra.mxu0 %v4213
  %5033 = vmatmul.f32.gmra.mxu0 %v4774
  %v5034 = vpop.f32.mrf.mxu0
  %v5035 = vadd.f32 0.0, %v5034
  %5036 = vmatmul.f32.gmra.mxu0 %v4777
  %v5037 = vpop.f32.mrf.mxu0
  %v5038 = vadd.f32 0.0, %v5037
  %5039 = vmatmul.f32.gmra.mxu0 %v4780
  %v5040 = vpop.f32.mrf.mxu0
  %v5041 = vadd.f32 0.0, %v5040
  %5042 = vmatmul.f32.gmra.mxu0 %v4783
  %v5043 = vpop.f32.mrf.mxu0
  %v5044 = vadd.f32 0.0, %v5043
  %5045 = vdwg.mxu0
  %5046 = vmatpush.msra.mxu0 0.0
  %5047 = vmatpush.msra.mxu0 0.0
  %5048 = vmatpush.msra.mxu0 0.0
  %5049 = vmatpush.msra.mxu0 0.0
  %5050 = vmatpush.msra.mxu0 %v4299
  %5051 = vmatpush.msra.mxu0 %v4296
  %5052 = vmatpush.msra.mxu0 %v4293
  %5053 = vmatpush.msra.mxu0 %v4290
  %5054 = vmatpush.msra.mxu0 %v4287
  %5055 = vmatpush.msra.mxu0 %v4284
  %5056 = vmatpush.msra.mxu0 %v4281
  %5057 = vmatpush.msra.mxu0 %v4278
  %5058 = vmatpush.msra.mxu0 %v4275
  %5059 = vmatpush.msra.mxu0 %v4272
  %5060 = vmatpush.msra.mxu0 %v4269
  %5061 = vmatpush.msra.mxu0 %v4266
  %5062 = vmatmul.f32.gmra.mxu0 %v4774
  %v5063 = vpop.f32.mrf.mxu0
  %v5064 = vadd.f32 0.0, %v5063
  %5065 = vmatmul.f32.gmra.mxu0 %v4777
  %v5066 = vpop.f32.mrf.mxu0
  %v5067 = vadd.f32 0.0, %v5066
  %5068 = vmatmul.f32.gmra.mxu0 %v4780
  %v5069 = vpop.f32.mrf.mxu0
  %v5070 = vadd.f32 0.0, %v5069
  %5071 = vmatmul.f32.gmra.mxu0 %v4783
  %v5072 = vpop.f32.mrf.mxu0
  %v5073 = vadd.f32 0.0, %v5072
  %5074 = vdwg.mxu0
  %5075 = vmatpush.msra.mxu0 0.0
  %5076 = vmatpush.msra.mxu0 0.0
  %5077 = vmatpush.msra.mxu0 0.0
  %5078 = vmatpush.msra.mxu0 0.0
  %5079 = vmatpush.msra.mxu0 %v4140
  %5080 = vmatpush.msra.mxu0 %v4137
  %5081 = vmatpush.msra.mxu0 %v4134
  %5082 = vmatpush.msra.mxu0 %v4131
  %5083 = vmatpush.msra.mxu0 %v4128
  %5084 = vmatpush.msra.mxu0 %v4125
  %5085 = vmatpush.msra.mxu0 %v4122
  %5086 = vmatpush.msra.mxu0 %v4119
  %5087 = vmatpush.msra.mxu0 %v4116
  %5088 = vmatpush.msra.mxu0 %v4113
  %5089 = vmatpush.msra.mxu0 %v4110
  %5090 = vmatpush.msra.mxu0 %v4107
  %5091 = vmatmul.f32.gmra.mxu0 %v4629
  %v5092 = vpop.f32.mrf.mxu0
  %v5093 = vadd.f32 %v5035, %v5092
  %5094 = vmatmul.f32.gmra.mxu0 %v4632
  %v5095 = vpop.f32.mrf.mxu0
  %v5096 = vadd.f32 %v5038, %v5095
  %5097 = vmatmul.f32.gmra.mxu0 %v4635
  %v5098 = vpop.f32.mrf.mxu0
  %v5099 = vadd.f32 %v5041, %v5098
  %5100 = vmatmul.f32.gmra.mxu0 %v4638
  %v5101 = vpop.f32.mrf.mxu0
  %v5102 = vadd.f32 %v5044, %v5101
  %5103 = vdwg.mxu0
  %5104 = vmatpush.msra.mxu0 0.0
  %5105 = vmatpush.msra.mxu0 0.0
  %5106 = vmatpush.msra.mxu0 0.0
  %5107 = vmatpush.msra.mxu0 0.0
  %5108 = vmatpush.msra.mxu0 %v4193
  %5109 = vmatpush.msra.mxu0 %v4190
  %5110 = vmatpush.msra.mxu0 %v4187
  %5111 = vmatpush.msra.mxu0 %v4184
  %5112 = vmatpush.msra.mxu0 %v4181
  %5113 = vmatpush.msra.mxu0 %v4178
  %5114 = vmatpush.msra.mxu0 %v4175
  %5115 = vmatpush.msra.mxu0 %v4172
  %5116 = vmatpush.msra.mxu0 %v4169
  %5117 = vmatpush.msra.mxu0 %v4166
  %5118 = vmatpush.msra.mxu0 %v4163
  %5119 = vmatpush.msra.mxu0 %v4160
  %5120 = vmatmul.f32.gmra.mxu0 %v4629
  %v5121 = vpop.f32.mrf.mxu0
  %v5122 = vadd.f32 %v5064, %v5121
  %5123 = vmatmul.f32.gmra.mxu0 %v4632
  %v5124 = vpop.f32.mrf.mxu0
  %v5125 = vadd.f32 %v5067, %v5124
  %5126 = vmatmul.f32.gmra.mxu0 %v4635
  %v5127 = vpop.f32.mrf.mxu0
  %v5128 = vadd.f32 %v5070, %v5127
  %5129 = vmatmul.f32.gmra.mxu0 %v4638
  %v5130 = vpop.f32.mrf.mxu0
  %v5131 = vadd.f32 %v5073, %v5130
  %5132 = vdwg.mxu0
  %5133 = vmatpush.msra.mxu0 0.0
  %5134 = vmatpush.msra.mxu0 0.0
  %5135 = vmatpush.msra.mxu0 0.0
  %5136 = vmatpush.msra.mxu0 0.0
  %5137 = vmatpush.msra.mxu0 %v4352
  %5138 = vmatpush.msra.mxu0 %v4349
  %5139 = vmatpush.msra.mxu0 %v4346
  %5140 = vmatpush.msra.mxu0 %v4343
  %5141 = vmatpush.msra.mxu0 %v4340
  %5142 = vmatpush.msra.mxu0 %v4337
  %5143 = vmatpush.msra.mxu0 %v4334
  %5144 = vmatpush.msra.mxu0 %v4331
  %5145 = vmatpush.msra.mxu0 %v4328
  %5146 = vmatpush.msra.mxu0 %v4325
  %5147 = vmatpush.msra.mxu0 %v4322
  %5148 = vmatpush.msra.mxu0 %v4319
  %5149 = vmatmul.f32.gmra.mxu0 %v4857
  %v5150 = vpop.f32.mrf.mxu0
  %v5151 = vadd.f32 0.0, %v5150
  %5152 = vmatmul.f32.gmra.mxu0 %v4860
  %v5153 = vpop.f32.mrf.mxu0
  %v5154 = vadd.f32 0.0, %v5153
  %5155 = vmatmul.f32.gmra.mxu0 %v4863
  %v5156 = vpop.f32.mrf.mxu0
  %v5157 = vadd.f32 0.0, %v5156
  %5158 = vmatmul.f32.gmra.mxu0 %v4866
  %v5159 = vpop.f32.mrf.mxu0
  %v5160 = vadd.f32 0.0, %v5159
  %5161 = vdwg.mxu0
  %5162 = vmatpush.msra.mxu0 0.0
  %5163 = vmatpush.msra.mxu0 0.0
  %5164 = vmatpush.msra.mxu0 0.0
  %5165 = vmatpush.msra.mxu0 0.0
  %5166 = vmatpush.msra.mxu0 %v4405
  %5167 = vmatpush.msra.mxu0 %v4402
  %5168 = vmatpush.msra.mxu0 %v4399
  %5169 = vmatpush.msra.mxu0 %v4396
  %5170 = vmatpush.msra.mxu0 %v4393
  %5171 = vmatpush.msra.mxu0 %v4390
  %5172 = vmatpush.msra.mxu0 %v4387
  %5173 = vmatpush.msra.mxu0 %v4384
  %5174 = vmatpush.msra.mxu0 %v4381
  %5175 = vmatpush.msra.mxu0 %v4378
  %5176 = vmatpush.msra.mxu0 %v4375
  %5177 = vmatpush.msra.mxu0 %v4372
  %5178 = vmatmul.f32.gmra.mxu0 %v4857
  %v5179 = vpop.f32.mrf.mxu0
  %v5180 = vadd.f32 0.0, %v5179
  %5181 = vmatmul.f32.gmra.mxu0 %v4860
  %v5182 = vpop.f32.mrf.mxu0
  %v5183 = vadd.f32 0.0, %v5182
  %5184 = vmatmul.f32.gmra.mxu0 %v4863
  %v5185 = vpop.f32.mrf.mxu0
  %v5186 = vadd.f32 0.0, %v5185
  %5187 = vmatmul.f32.gmra.mxu0 %v4866
  %v5188 = vpop.f32.mrf.mxu0
  %v5189 = vadd.f32 0.0, %v5188
  %5190 = vdwg.mxu0
  %v5191 = vadd.f32 %v5093, %v5151
  %v5192 = vadd.f32 %v5122, %v5180
  %v5193 = vadd.f32 %v5096, %v5154
  %v5194 = vadd.f32 %v5125, %v5183
  %v5195 = vadd.f32 %v5099, %v5157
  %v5196 = vadd.f32 %v5128, %v5186
  %v5197 = vadd.f32 %v5102, %v5160
  %v5198 = vadd.f32 %v5131, %v5189
  %5199 = vmatpush.msra.mxu0 0.0
  %5200 = vmatpush.msra.mxu0 0.0
  %5201 = vmatpush.msra.mxu0 0.0
  %5202 = vmatpush.msra.mxu0 0.0
  %5203 = vmatpush.msra.mxu0 %v4458
  %5204 = vmatpush.msra.mxu0 %v4455
  %5205 = vmatpush.msra.mxu0 %v4452
  %5206 = vmatpush.msra.mxu0 %v4449
  %5207 = vmatpush.msra.mxu0 %v4446
  %5208 = vmatpush.msra.mxu0 %v4443
  %5209 = vmatpush.msra.mxu0 %v4440
  %5210 = vmatpush.msra.mxu0 %v4437
  %5211 = vmatpush.msra.mxu0 %v4434
  %5212 = vmatpush.msra.mxu0 %v4431
  %5213 = vmatpush.msra.mxu0 %v4428
  %5214 = vmatpush.msra.mxu0 %v4425
  %5215 = vmatmul.f32.gmra.mxu0 %v4940
  %v5216 = vpop.f32.mrf.mxu0
  %v5217 = vadd.f32 0.0, %v5216
  %5218 = vmatmul.f32.gmra.mxu0 %v4943
  %v5219 = vpop.f32.mrf.mxu0
  %v5220 = vadd.f32 0.0, %v5219
  %5221 = vmatmul.f32.gmra.mxu0 %v4946
  %v5222 = vpop.f32.mrf.mxu0
  %v5223 = vadd.f32 0.0, %v5222
  %5224 = vmatmul.f32.gmra.mxu0 %v4949
  %v5225 = vpop.f32.mrf.mxu0
  %v5226 = vadd.f32 0.0, %v5225
  %5227 = vdwg.mxu0
  %5228 = vmatpush.msra.mxu0 0.0
  %5229 = vmatpush.msra.mxu0 0.0
  %5230 = vmatpush.msra.mxu0 0.0
  %5231 = vmatpush.msra.mxu0 0.0
  %5232 = vmatpush.msra.mxu0 %v4511
  %5233 = vmatpush.msra.mxu0 %v4508
  %5234 = vmatpush.msra.mxu0 %v4505
  %5235 = vmatpush.msra.mxu0 %v4502
  %5236 = vmatpush.msra.mxu0 %v4499
  %5237 = vmatpush.msra.mxu0 %v4496
  %5238 = vmatpush.msra.mxu0 %v4493
  %5239 = vmatpush.msra.mxu0 %v4490
  %5240 = vmatpush.msra.mxu0 %v4487
  %5241 = vmatpush.msra.mxu0 %v4484
  %5242 = vmatpush.msra.mxu0 %v4481
  %5243 = vmatpush.msra.mxu0 %v4478
  %5244 = vmatmul.f32.gmra.mxu0 %v4940
  %v5245 = vpop.f32.mrf.mxu0
  %v5246 = vadd.f32 0.0, %v5245
  %5247 = vmatmul.f32.gmra.mxu0 %v4943
  %v5248 = vpop.f32.mrf.mxu0
  %v5249 = vadd.f32 0.0, %v5248
  %5250 = vmatmul.f32.gmra.mxu0 %v4946
  %v5251 = vpop.f32.mrf.mxu0
  %v5252 = vadd.f32 0.0, %v5251
  %5253 = vmatmul.f32.gmra.mxu0 %v4949
  %v5254 = vpop.f32.mrf.mxu0
  %v5255 = vadd.f32 0.0, %v5254
  %5256 = vdwg.mxu0
  %v5257 = vadd.f32 %v5191, %v5217
  %v5258 = vadd.f32 %v5192, %v5246
  %v5259 = vadd.f32 %v5193, %v5220
  %v5260 = vadd.f32 %v5194, %v5249
  %v5261 = vadd.f32 %v5195, %v5223
  %v5262 = vadd.f32 %v5196, %v5252
  %v5263 = vadd.f32 %v5197, %v5226
  %v5264 = vadd.f32 %v5198, %v5255
  %s5265 = scalar_lea.vmem %s5, 160
  %v5266 = vld [vmem:[%s5265] sm:$0xff]
  %v5267 = vld [vmem:[%s5265 + $0x8] sm:$0xff]
  %v5268 = vld [vmem:[%s5265 + $0x10] sm:$0xff]
  %v5269 = vld [vmem:[%s5265 + $0x18] sm:$0xff]
  %v5271 = vsel %vm1284, %v5266, 0
  %v5274 = vsel %vm1284, %v5267, 0
  %v5277 = vsel %vm1284, %v5268, 0
  %v5280 = vsel %vm1284, %v5269, 0
  %5282 = vmatpush.msra.mxu0 0.0
  %5283 = vmatpush.msra.mxu0 0.0
  %5284 = vmatpush.msra.mxu0 0.0
  %5285 = vmatpush.msra.mxu0 0.0
  %5286 = vmatpush.msra.mxu0 %v4564
  %5287 = vmatpush.msra.mxu0 %v4561
  %5288 = vmatpush.msra.mxu0 %v4558
  %5289 = vmatpush.msra.mxu0 %v4555
  %5290 = vmatpush.msra.mxu0 %v4552
  %5291 = vmatpush.msra.mxu0 %v4549
  %5292 = vmatpush.msra.mxu0 %v4546
  %5293 = vmatpush.msra.mxu0 %v4543
  %5294 = vmatpush.msra.mxu0 %v4540
  %5295 = vmatpush.msra.mxu0 %v4537
  %5296 = vmatpush.msra.mxu0 %v4534
  %5297 = vmatpush.msra.mxu0 %v4531
  %5298 = vmatmul.f32.gmra.mxu0 %v5271
  %v5299 = vpop.f32.mrf.mxu0
  %v5300 = vadd.f32 0.0, %v5299
  %5301 = vmatmul.f32.gmra.mxu0 %v5274
  %v5302 = vpop.f32.mrf.mxu0
  %v5303 = vadd.f32 0.0, %v5302
  %5304 = vmatmul.f32.gmra.mxu0 %v5277
  %v5305 = vpop.f32.mrf.mxu0
  %v5306 = vadd.f32 0.0, %v5305
  %5307 = vmatmul.f32.gmra.mxu0 %v5280
  %v5308 = vpop.f32.mrf.mxu0
  %v5309 = vadd.f32 0.0, %v5308
  %5310 = vdwg.mxu0
  %5311 = vmatpush.msra.mxu0 0.0
  %5312 = vmatpush.msra.mxu0 0.0
  %5313 = vmatpush.msra.mxu0 0.0
  %5314 = vmatpush.msra.mxu0 0.0
  %5315 = vmatpush.msra.mxu0 %v4617
  %5316 = vmatpush.msra.mxu0 %v4614
  %5317 = vmatpush.msra.mxu0 %v4611
  %5318 = vmatpush.msra.mxu0 %v4608
  %5319 = vmatpush.msra.mxu0 %v4605
  %5320 = vmatpush.msra.mxu0 %v4602
  %5321 = vmatpush.msra.mxu0 %v4599
  %5322 = vmatpush.msra.mxu0 %v4596
  %5323 = vmatpush.msra.mxu0 %v4593
  %5324 = vmatpush.msra.mxu0 %v4590
  %5325 = vmatpush.msra.mxu0 %v4587
  %5326 = vmatpush.msra.mxu0 %v4584
  %5327 = vmatmul.f32.gmra.mxu0 %v5271
  %v5328 = vpop.f32.mrf.mxu0
  %v5329 = vadd.f32 0.0, %v5328
  %5330 = vmatmul.f32.gmra.mxu0 %v5274
  %v5331 = vpop.f32.mrf.mxu0
  %v5332 = vadd.f32 0.0, %v5331
  %5333 = vmatmul.f32.gmra.mxu0 %v5277
  %v5334 = vpop.f32.mrf.mxu0
  %v5335 = vadd.f32 0.0, %v5334
  %5336 = vmatmul.f32.gmra.mxu0 %v5280
  %v5337 = vpop.f32.mrf.mxu0
  %v5338 = vadd.f32 0.0, %v5337
  %5339 = vdwg.mxu0
  %v5340 = vadd.f32 %v5257, %v5300
  %v5341 = vadd.f32 %v5258, %v5329
  %v5342 = vadd.f32 %v5259, %v5303
  %v5343 = vadd.f32 %v5260, %v5332
  %v5344 = vadd.f32 %v5261, %v5306
  %v5345 = vadd.f32 %v5262, %v5335
  %v5346 = vadd.f32 %v5263, %v5309
  %v5347 = vadd.f32 %v5264, %v5338
  %v5348 = vmax.f32 %v5009, %v5340
  %v5349 = vmax.f32 %v5010, %v5341
  %v5350 = vmax.f32 %v5011, %v5342
  %v5351 = vmax.f32 %v5012, %v5343
  %v5352 = vmax.f32 %v5013, %v5344
  %v5353 = vmax.f32 %v5014, %v5345
  %v5354 = vmax.f32 %v5015, %v5346
  %v5355 = vmax.f32 %v5016, %v5347
  %v5356 = vmax.f32 %v5348, %v5349
  %v5357 = vmax.f32 %v5350, %v5351
  %v5358 = vmax.f32 %v5352, %v5353
  %v5359 = vmax.f32 %v5354, %v5355
  %v5360 = vld [vmem:[%s6] sm:$0x1]
  %v5362 = vperm.slane %v5360, 0
  %v5364 = vadd.f32 %v5356, %v5362
  %v5365 = vadd.f32 %v5357, %v5362
  %v5366 = vadd.f32 %v5358, %v5362
  %v5367 = vadd.f32 %v5359, %v5362
  %v5368 = vmax.f32 %v5364, 0.0
  %v5369 = vmax.f32 %v5365, 0.0
  %v5370 = vmax.f32 %v5366, 0.0
  %v5371 = vmax.f32 %v5367, 0.0
  %v5372 = vld [vmem:[%s7] sm:$0xff]
  %vm5373 = vcmask 261120
  %v5375 = vsel %vm5373, %v5372, 0
  %5377 = vmatpush.msra.mxu0 0.0
  %5378 = vmatpush.msra.mxu0 0.0
  %5379 = vmatpush.msra.mxu0 0.0
  %5380 = vmatpush.msra.mxu0 0.0
  %5381 = vmatpush.msra.mxu0 0.0
  %5382 = vmatpush.msra.mxu0 0.0
  %5383 = vmatpush.msra.mxu0 0.0
  %5384 = vmatpush.msra.mxu0 0.0
  %5385 = vmatpush.msra.mxu0 0.0
  %5386 = vmatpush.msra.mxu0 0.0
  %5387 = vmatpush.msra.mxu0 0.0
  %5388 = vmatpush.msra.mxu0 0.0
  %5389 = vmatpush.msra.mxu0 %v5371
  %5390 = vmatpush.msra.mxu0 %v5370
  %5391 = vmatpush.msra.mxu0 %v5369
  %5392 = vmatpush.msra.mxu0 %v5368
  %5393 = vmatmul.f32.gmra.mxu0 %v5375
  %v5394 = vpop.f32.mrf.mxu0
  %v5395 = vadd.f32 0.0, %v5394
  %5396 = vdwg.mxu0
  %v5397 = vld [vmem:[%s8] sm:$0xff]
  %v5398 = vld [vmem:[%s8 + $0x8] sm:$0xff]
  %v5399 = vld [vmem:[%s8 + $0x10] sm:$0xff]
  %v5400 = vld [vmem:[%s8 + $0x18] sm:$0xff]
  %v5401 = vld [vmem:[%s8 + $0x20] sm:$0xff]
  %v5402 = vld [vmem:[%s8 + $0x28] sm:$0xff]
  %v5403 = vld [vmem:[%s8 + $0x30] sm:$0xff]
  %v5404 = vld [vmem:[%s8 + $0x38] sm:$0xff]
  %v5405 = vld [vmem:[%s8 + $0x40] sm:$0xff]
  %v5406 = vld [vmem:[%s8 + $0x48] sm:$0xff]
  %v5407 = vld [vmem:[%s8 + $0x50] sm:$0xff]
  %v5408 = vld [vmem:[%s8 + $0x58] sm:$0xff]
  %v5409 = vld [vmem:[%s8 + $0x60] sm:$0xff]
  %v5410 = vld [vmem:[%s8 + $0x68] sm:$0xff]
  %v5411 = vld [vmem:[%s8 + $0x70] sm:$0xff]
  %v5412 = vld [vmem:[%s8 + $0x78] sm:$0xff]
  %s5413 = scalar_lea.vmem %s7, 8
  %v5414 = vld [vmem:[%s5413] sm:$0xff]
  %v5416 = vsel %vm5373, %v5414, 0
  %5418 = vmatpush.msra.mxu0 0.0
  %5419 = vmatpush.msra.mxu0 0.0
  %5420 = vmatpush.msra.mxu0 0.0
  %5421 = vmatpush.msra.mxu0 0.0
  %5422 = vmatpush.msra.mxu0 0.0
  %5423 = vmatpush.msra.mxu0 0.0
  %5424 = vmatpush.msra.mxu0 0.0
  %5425 = vmatpush.msra.mxu0 0.0
  %5426 = vmatpush.msra.mxu0 0.0
  %5427 = vmatpush.msra.mxu0 0.0
  %5428 = vmatpush.msra.mxu0 0.0
  %5429 = vmatpush.msra.mxu0 0.0
  %5430 = vmatpush.msra.mxu0 %v5371
  %5431 = vmatpush.msra.mxu0 %v5370
  %5432 = vmatpush.msra.mxu0 %v5369
  %5433 = vmatpush.msra.mxu0 %v5368
  %5434 = vmatmul.f32.gmra.mxu0 %v5416
  %v5435 = vpop.f32.mrf.mxu0
  %v5436 = vadd.f32 0.0, %v5435
  %5437 = vdwg.mxu0
  %s5438 = scalar_lea.vmem %s8, 128
  %v5439 = vld [vmem:[%s5438] sm:$0xff]
  %v5440 = vld [vmem:[%s5438 + $0x8] sm:$0xff]
  %v5441 = vld [vmem:[%s5438 + $0x10] sm:$0xff]
  %v5442 = vld [vmem:[%s5438 + $0x18] sm:$0xff]
  %v5443 = vld [vmem:[%s5438 + $0x20] sm:$0xff]
  %v5444 = vld [vmem:[%s5438 + $0x28] sm:$0xff]
  %v5445 = vld [vmem:[%s5438 + $0x30] sm:$0xff]
  %v5446 = vld [vmem:[%s5438 + $0x38] sm:$0xff]
  %v5447 = vld [vmem:[%s5438 + $0x40] sm:$0xff]
  %v5448 = vld [vmem:[%s5438 + $0x48] sm:$0xff]
  %v5449 = vld [vmem:[%s5438 + $0x50] sm:$0xff]
  %v5450 = vld [vmem:[%s5438 + $0x58] sm:$0xff]
  %v5451 = vld [vmem:[%s5438 + $0x60] sm:$0xff]
  %v5452 = vld [vmem:[%s5438 + $0x68] sm:$0xff]
  %v5453 = vld [vmem:[%s5438 + $0x70] sm:$0xff]
  %v5454 = vld [vmem:[%s5438 + $0x78] sm:$0xff]
  %5455 = vmatpush.msra.mxu0 %v5454
  %5456 = vmatpush.msra.mxu0 %v5453
  %5457 = vmatpush.msra.mxu0 %v5452
  %5458 = vmatpush.msra.mxu0 %v5451
  %5459 = vmatpush.msra.mxu0 %v5450
  %5460 = vmatpush.msra.mxu0 %v5449
  %5461 = vmatpush.msra.mxu0 %v5448
  %5462 = vmatpush.msra.mxu0 %v5447
  %5463 = vmatpush.msra.mxu0 %v5446
  %5464 = vmatpush.msra.mxu0 %v5445
  %5465 = vmatpush.msra.mxu0 %v5444
  %5466 = vmatpush.msra.mxu0 %v5443
  %5467 = vmatpush.msra.mxu0 %v5442
  %5468 = vmatpush.msra.mxu0 %v5441
  %5469 = vmatpush.msra.mxu0 %v5440
  %5470 = vmatpush.msra.mxu0 %v5439
  %5471 = vmatmul.f32.gmra.mxu0 %v5436
  %v5472 = vpop.f32.mrf.mxu0
  %v5473 = vadd.f32 0.0, %v5472
  %5474 = vdwg.mxu0
  %5475 = vmatpush.msra.mxu0 %v5412
  %5476 = vmatpush.msra.mxu0 %v5411
  %5477 = vmatpush.msra.mxu0 %v5410
  %5478 = vmatpush.msra.mxu0 %v5409
  %5479 = vmatpush.msra.mxu0 %v5408
  %5480 = vmatpush.msra.mxu0 %v5407
  %5481 = vmatpush.msra.mxu0 %v5406
  %5482 = vmatpush.msra.mxu0 %v5405
  %5483 = vmatpush.msra.mxu0 %v5404
  %5484 = vmatpush.msra.mxu0 %v5403
  %5485 = vmatpush.msra.mxu0 %v5402
  %5486 = vmatpush.msra.mxu0 %v5401
  %5487 = vmatpush.msra.mxu0 %v5400
  %5488 = vmatpush.msra.mxu0 %v5399
  %5489 = vmatpush.msra.mxu0 %v5398
  %5490 = vmatpush.msra.mxu0 %v5397
  %5491 = vmatmul.f32.gmra.mxu0 %v5395
  %v5492 = vpop.f32.mrf.mxu0
  %v5493 = vadd.f32 %v5473, %v5492
  %5494 = vdwg.mxu0
  %s5495 = scalar_lea.vmem %s7, 16
  %v5496 = vld [vmem:[%s5495] sm:$0xff]
  %v5498 = vsel %vm5373, %v5496, 0
  %5500 = vmatpush.msra.mxu0 0.0
  %5501 = vmatpush.msra.mxu0 0.0
  %5502 = vmatpush.msra.mxu0 0.0
  %5503 = vmatpush.msra.mxu0 0.0
  %5504 = vmatpush.msra.mxu0 0.0
  %5505 = vmatpush.msra.mxu0 0.0
  %5506 = vmatpush.msra.mxu0 0.0
  %5507 = vmatpush.msra.mxu0 0.0
  %5508 = vmatpush.msra.mxu0 0.0
  %5509 = vmatpush.msra.mxu0 0.0
  %5510 = vmatpush.msra.mxu0 0.0
  %5511 = vmatpush.msra.mxu0 0.0
  %5512 = vmatpush.msra.mxu0 %v5371
  %5513 = vmatpush.msra.mxu0 %v5370
  %5514 = vmatpush.msra.mxu0 %v5369
  %5515 = vmatpush.msra.mxu0 %v5368
  %5516 = vmatmul.f32.gmra.mxu0 %v5498
  %v5517 = vpop.f32.mrf.mxu0
  %v5518 = vadd.f32 0.0, %v5517
  %5519 = vdwg.mxu0
  %s5520 = scalar_lea.vmem %s8, 256
  %v5521 = vld [vmem:[%s5520] sm:$0xff]
  %v5522 = vld [vmem:[%s5520 + $0x8] sm:$0xff]
  %v5523 = vld [vmem:[%s5520 + $0x10] sm:$0xff]
  %v5524 = vld [vmem:[%s5520 + $0x18] sm:$0xff]
  %v5525 = vld [vmem:[%s5520 + $0x20] sm:$0xff]
  %v5526 = vld [vmem:[%s5520 + $0x28] sm:$0xff]
  %v5527 = vld [vmem:[%s5520 + $0x30] sm:$0xff]
  %v5528 = vld [vmem:[%s5520 + $0x38] sm:$0xff]
  %v5529 = vld [vmem:[%s5520 + $0x40] sm:$0xff]
  %v5530 = vld [vmem:[%s5520 + $0x48] sm:$0xff]
  %v5531 = vld [vmem:[%s5520 + $0x50] sm:$0xff]
  %v5532 = vld [vmem:[%s5520 + $0x58] sm:$0xff]
  %v5533 = vld [vmem:[%s5520 + $0x60] sm:$0xff]
  %v5534 = vld [vmem:[%s5520 + $0x68] sm:$0xff]
  %v5535 = vld [vmem:[%s5520 + $0x70] sm:$0xff]
  %v5536 = vld [vmem:[%s5520 + $0x78] sm:$0xff]
  %5537 = vmatpush.msra.mxu0 %v5536
  %5538 = vmatpush.msra.mxu0 %v5535
  %5539 = vmatpush.msra.mxu0 %v5534
  %5540 = vmatpush.msra.mxu0 %v5533
  %5541 = vmatpush.msra.mxu0 %v5532
  %5542 = vmatpush.msra.mxu0 %v5531
  %5543 = vmatpush.msra.mxu0 %v5530
  %5544 = vmatpush.msra.mxu0 %v5529
  %5545 = vmatpush.msra.mxu0 %v5528
  %5546 = vmatpush.msra.mxu0 %v5527
  %5547 = vmatpush.msra.mxu0 %v5526
  %5548 = vmatpush.msra.mxu0 %v5525
  %5549 = vmatpush.msra.mxu0 %v5524
  %5550 = vmatpush.msra.mxu0 %v5523
  %5551 = vmatpush.msra.mxu0 %v5522
  %5552 = vmatpush.msra.mxu0 %v5521
  %5553 = vmatmul.f32.gmra.mxu0 %v5518
  %v5554 = vpop.f32.mrf.mxu0
  %v5555 = vadd.f32 0.0, %v5554
  %5556 = vdwg.mxu0
  %v5557 = vadd.f32 %v5493, %v5555
  %s5558 = scalar_lea.vmem %s7, 24
  %v5559 = vld [vmem:[%s5558] sm:$0xff]
  %v5561 = vsel %vm5373, %v5559, 0
  %5563 = vmatpush.msra.mxu0 0.0
  %5564 = vmatpush.msra.mxu0 0.0
  %5565 = vmatpush.msra.mxu0 0.0
  %5566 = vmatpush.msra.mxu0 0.0
  %5567 = vmatpush.msra.mxu0 0.0
  %5568 = vmatpush.msra.mxu0 0.0
  %5569 = vmatpush.msra.mxu0 0.0
  %5570 = vmatpush.msra.mxu0 0.0
  %5571 = vmatpush.msra.mxu0 0.0
  %5572 = vmatpush.msra.mxu0 0.0
  %5573 = vmatpush.msra.mxu0 0.0
  %5574 = vmatpush.msra.mxu0 0.0
  %5575 = vmatpush.msra.mxu0 %v5371
  %5576 = vmatpush.msra.mxu0 %v5370
  %5577 = vmatpush.msra.mxu0 %v5369
  %5578 = vmatpush.msra.mxu0 %v5368
  %5579 = vmatmul.f32.gmra.mxu0 %v5561
  %v5580 = vpop.f32.mrf.mxu0
  %v5581 = vadd.f32 0.0, %v5580
  %5582 = vdwg.mxu0
  %s5583 = scalar_lea.vmem %s8, 384
  %v5584 = vld [vmem:[%s5583] sm:$0xff]
  %v5585 = vld [vmem:[%s5583 + $0x8] sm:$0xff]
  %v5586 = vld [vmem:[%s5583 + $0x10] sm:$0xff]
  %v5587 = vld [vmem:[%s5583 + $0x18] sm:$0xff]
  %v5588 = vld [vmem:[%s5583 + $0x20] sm:$0xff]
  %v5589 = vld [vmem:[%s5583 + $0x28] sm:$0xff]
  %v5590 = vld [vmem:[%s5583 + $0x30] sm:$0xff]
  %v5591 = vld [vmem:[%s5583 + $0x38] sm:$0xff]
  %v5592 = vld [vmem:[%s5583 + $0x40] sm:$0xff]
  %v5593 = vld [vmem:[%s5583 + $0x48] sm:$0xff]
  %v5594 = vld [vmem:[%s5583 + $0x50] sm:$0xff]
  %v5595 = vld [vmem:[%s5583 + $0x58] sm:$0xff]
  %v5596 = vld [vmem:[%s5583 + $0x60] sm:$0xff]
  %v5597 = vld [vmem:[%s5583 + $0x68] sm:$0xff]
  %v5598 = vld [vmem:[%s5583 + $0x70] sm:$0xff]
  %v5599 = vld [vmem:[%s5583 + $0x78] sm:$0xff]
  %5600 = vmatpush.msra.mxu0 %v5599
  %5601 = vmatpush.msra.mxu0 %v5598
  %5602 = vmatpush.msra.mxu0 %v5597
  %5603 = vmatpush.msra.mxu0 %v5596
  %5604 = vmatpush.msra.mxu0 %v5595
  %5605 = vmatpush.msra.mxu0 %v5594
  %5606 = vmatpush.msra.mxu0 %v5593
  %5607 = vmatpush.msra.mxu0 %v5592
  %5608 = vmatpush.msra.mxu0 %v5591
  %5609 = vmatpush.msra.mxu0 %v5590
  %5610 = vmatpush.msra.mxu0 %v5589
  %5611 = vmatpush.msra.mxu0 %v5588
  %5612 = vmatpush.msra.mxu0 %v5587
  %5613 = vmatpush.msra.mxu0 %v5586
  %5614 = vmatpush.msra.mxu0 %v5585
  %5615 = vmatpush.msra.mxu0 %v5584
  %5616 = vmatmul.f32.gmra.mxu0 %v5581
  %v5617 = vpop.f32.mrf.mxu0
  %v5618 = vadd.f32 0.0, %v5617
  %5619 = vdwg.mxu0
  %v5620 = vadd.f32 %v5557, %v5618
  %v5621 = vld [vmem:[%s9] sm:$0x1]
  %v5623 = vperm.slane %v5621, 0
  %v5625 = vadd.f32 %v5620, %v5623
  %v5626 = vmax.f32 %v5625, 0.0
  %v5627 = vld [vmem:[%s10] sm:$0xff]
  %v5628 = vld [vmem:[%s10 + $0x8] sm:$0xff]
  %v5629 = vld [vmem:[%s10 + $0x10] sm:$0xff]
  %v5630 = vld [vmem:[%s10 + $0x18] sm:$0xff]
  %v5631 = vld [vmem:[%s10 + $0x20] sm:$0xff]
  %v5632 = vld [vmem:[%s10 + $0x28] sm:$0xff]
  %v5633 = vld [vmem:[%s10 + $0x30] sm:$0xff]
  %v5634 = vld [vmem:[%s10 + $0x38] sm:$0xff]
  %v5635 = vld [vmem:[%s10 + $0x40] sm:$0xff]
  %v5636 = vld [vmem:[%s10 + $0x48] sm:$0xff]
  %v5637 = vld [vmem:[%s10 + $0x50] sm:$0xff]
  %v5638 = vld [vmem:[%s10 + $0x58] sm:$0xff]
  %v5639 = vld [vmem:[%s10 + $0x60] sm:$0xff]
  %v5640 = vld [vmem:[%s10 + $0x68] sm:$0xff]
  %v5641 = vld [vmem:[%s10 + $0x70] sm:$0xff]
  %v5642 = vld [vmem:[%s10 + $0x78] sm:$0xff]
  %v5643 = vld [vmem:[%s11] sm:$0x1]
  %v5645 = vperm.slane %v5643, 0
  %5647 = vmatpush.msra.mxu0 %v5642
  %5648 = vmatpush.msra.mxu0 %v5641
  %5649 = vmatpush.msra.mxu0 %v5640
  %5650 = vmatpush.msra.mxu0 %v5639
  %5651 = vmatpush.msra.mxu0 %v5638
  %5652 = vmatpush.msra.mxu0 %v5637
  %5653 = vmatpush.msra.mxu0 %v5636
  %5654 = vmatpush.msra.mxu0 %v5635
  %5655 = vmatpush.msra.mxu0 %v5634
  %5656 = vmatpush.msra.mxu0 %v5633
  %5657 = vmatpush.msra.mxu0 %v5632
  %5658 = vmatpush.msra.mxu0 %v5631
  %5659 = vmatpush.msra.mxu0 %v5630
  %5660 = vmatpush.msra.mxu0 %v5629
  %5661 = vmatpush.msra.mxu0 %v5628
  %5662 = vmatpush.msra.mxu0 %v5627
  %5663 = vmatmul.f32.gmra.mxu0 %v5626
  %v5664 = vpop.f32.mrf.mxu0
  %v5665 = vadd.f32 %v5645, %v5664
  %5666 = vdwg.mxu0
  %5667 = vmax.xlane.f32.xlu0 %v5665
  %v5668 = vpop.xlane.xlu0 %5667
  %v5669 = vsub.f32 %v5665, %v5668
  %v5670 = vmul.f32 %v5669, 1.442695
  %v5671 = vpow.pop %v5670
  %5672 = vadd.xlane.f32.xlu0 %v5671
  %v5673 = vpop.xlane.xlu0 %5672
  %v5674 = vlog2.pop %v5673
  %v5675 = vmul.f32 %v5674, 0.6931472
  %v5676 = vsub.f32 %v5669, %v5675
  %5677 = vst [vmem:[%s12] sm:$0xff] %v5676
  // Predicated region
  $region50: #{mnist_classifier_forward.1} parent=0 // pred_check
    _
  $region51: #{mnist_classifier_forward.1} parent=0 // pred_check_branch
    %5679 = sbr.rel (0) target = $region53
  $region52: #{mnist_classifier_forward.1} parent=0 // pred_region
    _
  $region53: #{mnist_classifier_forward.1} parent=0 // pred_fallthru
    _
  // Predicated region
  $region54: #{mnist_classifier_forward.1} parent=0 // pred_check
    _
  $region55: #{mnist_classifier_forward.1} parent=0 // pred_check_branch
    %5681 = sbr.rel (0) target = $region57
  $region56: #{mnist_classifier_forward.1} parent=0 // pred_region
    _
  $region57: #{mnist_classifier_forward.1} parent=0 // pred_fallthru
    _

</llo_original>
